<compile_context>
chip_gen: v7x
topology: tpu7x:2x2x1
jax: 0.10.0
libtpu: 0.0.40
codegen_flags: <defaults>
</compile_context>

<pallas_src>
import jax
import jax.numpy as jnp
from jax.experimental import pallas as pl
from jax.experimental.pallas import tpu as pltpu

# ----------------------- config (small, b3-like structure) -----------------------
N, H, W, CIN = 16, 16, 16, 3     # input  (PyTorch NCHW: [16, 3, 16, 16])
K, STRIDE = 3, 2                 # stem conv kernel / stride
CS = 16                          # stem channels      (real b3: 40)
F = 64                           # _fc.in_features    (real b3: 1536)
FH = F // 2                      # hidden of the custom head
NCLS = 2                         # output classes
HO = WO = 8                      # "same" pad + stride 2 on 16x16
S = HO * WO                      # spatial positions after stem
M = N * S                        # im2col rows (1024 -> sublane-friendly)
KKC = K * K * CIN                # im2col patch width (27)
BN_EPS = 1e-3                    # efficientnet_pytorch BN eps

# advisory cost estimate (bf16 operands, f32 out)
_FLOPS = 2 * (M * KKC * CS + M * CS * F + N * M * F + N * F * FH + N * FH * NCLS)
_TRANS = M * (CS + F)            # sigmoids in the two swishes
_BYTES = (M * KKC * 2 + KKC * CS * 2 + CS * F * 2 + N * M * 2
          + F * FH * 2 + FH * NCLS * 2 + 4 * 128 * 4 + N * NCLS * 4)


def _swish(x):
    return x * jax.nn.sigmoid(x)


# ------------------- fused kernel: stem + head + pool + FC head ------------------
def fused_effnet_kernel(p_ref, ws_ref, wh_ref, pool_ref, w1_ref, w2_ref,
                        sh_ref, o_ref):
    # packed shift/bias vectors: one [4, 128] f32 operand, static lane-0 slices
    packed = sh_ref[...]
    shs = packed[0:1, 0:CS]          # stem folded-BN shift   [1, CS]
    shh = packed[1:2, 0:F]           # head folded-BN shift   [1, F]
    b1 = packed[2:3, 0:FH]           # FC1 bias               [1, FH]
    b2 = packed[3:4, 0:NCLS]         # FC2 bias               [1, NCLS]

    # stem conv3x3/s2 as im2col matmul (bf16 in, f32 acc) + shift + swish   [M, CS]
    y = jnp.dot(p_ref[...], ws_ref[...], preferred_element_type=jnp.float32)
    y = _swish(y + shs)

    # head conv1x1 (+ shift) + swish                                        [M, F]
    h = jnp.dot(y.astype(jnp.bfloat16), wh_ref[...],
                preferred_element_type=jnp.float32)
    h = _swish(h + shh)

    # global average pool over S positions per batch element, as one MXU matmul
    # with a precomputed 0/1 block-diagonal mask; the 1/S scale is folded into w1.
    pooled = jnp.dot(pool_ref[...], h.astype(jnp.bfloat16),
                     preferred_element_type=jnp.float32)                   # [N, F]

    # FC head (batched over N): Linear -> ReLU -> Linear
    z = jnp.dot(pooled.astype(jnp.bfloat16), w1_ref[...],
                preferred_element_type=jnp.float32) + b1
    z = jnp.maximum(z, 0.0)
    o_ref[...] = (jnp.dot(z.astype(jnp.bfloat16), w2_ref[...],
                          preferred_element_type=jnp.float32) + b2)        # [N, 2]


def fused_effnet_pallas(patches, ws, wh, pool, w1, w2, shifts):
    # Single launch, gridless: every operand is a whole-array VMEM block, all
    # intermediates live in VMEM/vregs, only (N, NCLS) logits are written back.
    vmem = pl.BlockSpec(memory_space=pltpu.MemorySpace.VMEM)
    return pl.pallas_call(
        fused_effnet_kernel,
        out_shape=jax.ShapeDtypeStruct((N, NCLS), jnp.float32),
        in_specs=[vmem] * 7,
        out_specs=vmem,
        cost_estimate=pl.CostEstimate(flops=_FLOPS, transcendentals=_TRANS,
                                      bytes_accessed=_BYTES),
    )(patches, ws, wh, pool, w1, w2, shifts)


# ------------------------------- glue (plain JAX) --------------------------------
def _same_pad(x_nhwc):
    # TF-style "same" padding for k=3, s=2 (Conv2dStaticSamePadding).
    pad_h = max((HO - 1) * STRIDE + K - H, 0)
    pad_w = max((WO - 1) * STRIDE + K - W, 0)
    return jnp.pad(x_nhwc, ((0, 0),
                            (pad_h // 2, pad_h - pad_h // 2),
                            (pad_w // 2, pad_w - pad_w // 2),
                            (0, 0)))


def _im2col(x_pad):
    # -> [N, HO, WO, K*K*CIN], patch layout (dy, dx, cin); fused by XLA with the
    # surrounding transpose/pad at this size.  Row order after the final reshape
    # is row = n*S + ho*WO + wo, which the precomputed pool mask assumes.
    cols = []
    for dy in range(K):
        for dx in range(K):
            cols.append(x_pad[:, dy:dy + STRIDE * HO:STRIDE,
                              dx:dx + STRIDE * WO:STRIDE, :])
    p = jnp.stack(cols, axis=-2)                       # [N, HO, WO, K*K, CIN]
    return p.reshape(N, HO, WO, KKC)


def _fold_bn_into_weight(w, gamma, beta, mean, var):
    # Fold BN scale into the weight columns (in f32); only the shift survives
    # in-kernel.  Cast to bf16 happens AFTER folding (precision).
    scale = gamma / jnp.sqrt(var + BN_EPS)
    shift = beta - mean * scale
    return w * scale[None, :], shift


def init_params(key):
    ks = jax.random.split(key, 10)
    p = {}
    p["w_stem"] = jax.random.normal(ks[0], (KKC, CS), jnp.float32) * 0.1
    p["bn_stem"] = (1.0 + 0.05 * jax.random.normal(ks[1], (CS,)),          # gamma
                    0.05 * jax.random.normal(ks[2], (CS,)),                # beta
                    0.05 * jax.random.normal(ks[3], (CS,)),                # running mean
                    jnp.ones((CS,), jnp.float32))                          # running var
    p["w_head"] = jax.random.normal(ks[4], (CS, F), jnp.float32) * 0.1
    p["bn_head"] = (1.0 + 0.05 * jax.random.normal(ks[5], (F,)),
                    0.05 * jax.random.normal(ks[6], (F,)),
                    0.05 * jax.random.normal(ks[7], (F,)),
                    jnp.ones((F,), jnp.float32))
    p["w1"] = jax.random.normal(ks[8], (F, FH), jnp.float32) * 0.1
    p["b1"] = jnp.zeros((FH,), jnp.float32)
    p["w2"] = jax.random.normal(ks[9], (FH, NCLS), jnp.float32) * 0.1
    p["b2"] = jnp.zeros((NCLS,), jnp.float32)
    return p


def prepare_params(p):
    # One-time parameter prep (outside the per-call path):
    #   * fold BN into the conv weights (f32), then cast matmul operands to bf16
    #   * fold the 1/S average-pool scale into w1
    #   * pack the 4 tiny shift/bias vectors into one lane-dense [4, 128] f32 slab
    #   * precompute the (N, M) 0/1 block-diagonal pool mask (bf16)
    ws, shs = _fold_bn_into_weight(p["w_stem"], *p["bn_stem"])
    wh, shh = _fold_bn_into_weight(p["w_head"], *p["bn_head"])

    w1_scaled = p["w1"] * jnp.float32(1.0 / S)          # absorb the pool average

    packed = jnp.zeros((4, 128), jnp.float32)
    packed = packed.at[0, 0:CS].set(shs)
    packed = packed.at[1, 0:F].set(shh)
    packed = packed.at[2, 0:FH].set(p["b1"])
    packed = packed.at[3, 0:NCLS].set(p["b2"])

    r = jnp.arange(N, dtype=jnp.int32)[:, None]
    c = jnp.arange(M, dtype=jnp.int32)[None, :]
    pool = ((c >= r * S) & (c < (r + 1) * S)).astype(jnp.bfloat16)   # [N, M]

    return {"w_stem": ws.astype(jnp.bfloat16),
            "w_head": wh.astype(jnp.bfloat16),
            "pool": pool,
            "w1": w1_scaled.astype(jnp.bfloat16),
            "w2": p["w2"].astype(jnp.bfloat16),
            "shifts": packed}


@jax.jit
def my_effnet_forward(x_nchw, prepped):
    # NCHW (PyTorch) -> NHWC (kernel layout), im2col, cast matmul operand to bf16
    x = jnp.transpose(x_nchw, (0, 2, 3, 1)).astype(jnp.float32)
    patches = _im2col(_same_pad(x)).reshape(M, KKC).astype(jnp.bfloat16)
    return fused_effnet_pallas(
        patches,
        prepped["w_stem"], prepped["w_head"], prepped["pool"],
        prepped["w1"], prepped["w2"], prepped["shifts"])             # [N, 2]


if __name__ == "__main__":
    key = jax.random.PRNGKey(0)
    kx, kp = jax.random.split(key)
    x = jax.random.normal(kx, (N, CIN, H, W), jnp.float32)   # PyTorch-style NCHW input
    params = init_params(kp)
    prepped = prepare_params(params)

    out = my_effnet_forward(x, prepped)
    out = jax.block_until_ready(out)
    assert out.shape == (N, NCLS) and out.dtype == jnp.float32
    assert bool(jnp.all(jnp.isfinite(out)))
    print("KERNEL_OK")
</pallas_src>

<mosaic_0001>
module attributes {stable_mosaic.version = 11 : i64} {
  func.func @fused_effnet_kernel(%arg0: memref<1024x27xbf16, #tpu.memory_space<vmem>>, %arg1: memref<27x16xbf16, #tpu.memory_space<vmem>>, %arg2: memref<16x64xbf16, #tpu.memory_space<vmem>>, %arg3: memref<16x1024xbf16, #tpu.memory_space<vmem>>, %arg4: memref<64x32xbf16, #tpu.memory_space<vmem>>, %arg5: memref<32x2xbf16, #tpu.memory_space<vmem>>, %arg6: memref<4x128xf32, #tpu.memory_space<vmem>>, %arg7: memref<16x2xf32, #tpu.memory_space<vmem>>) attributes {dimension_semantics = [], scalar_prefetch = 0 : i64, scratch_operands = 0 : i64, tpu.core_type = #tpu.core_type<tc>} {
    %c0 = arith.constant 0 : index
    %c0_0 = arith.constant 0 : index
    %0 = vector.load %arg6[%c0, %c0_0] : memref<4x128xf32, #tpu.memory_space<vmem>>, vector<4x128xf32>
    %1 = vector.extract_strided_slice %0 {offsets = [0, 0], sizes = [1, 16], strides = [1, 1]} : vector<4x128xf32> to vector<1x16xf32>
    %2 = vector.extract_strided_slice %0 {offsets = [1, 0], sizes = [1, 64], strides = [1, 1]} : vector<4x128xf32> to vector<1x64xf32>
    %3 = vector.extract_strided_slice %0 {offsets = [2, 0], sizes = [1, 32], strides = [1, 1]} : vector<4x128xf32> to vector<1x32xf32>
    %4 = vector.extract_strided_slice %0 {offsets = [3, 0], sizes = [1, 2], strides = [1, 1]} : vector<4x128xf32> to vector<1x2xf32>
    %c0_1 = arith.constant 0 : index
    %c0_2 = arith.constant 0 : index
    %5 = vector.load %arg0[%c0_1, %c0_2] : memref<1024x27xbf16, #tpu.memory_space<vmem>>, vector<1024x27xbf16>
    %c0_3 = arith.constant 0 : index
    %c0_4 = arith.constant 0 : index
    %6 = vector.load %arg1[%c0_3, %c0_4] : memref<27x16xbf16, #tpu.memory_space<vmem>>, vector<27x16xbf16>
    %cst = arith.constant dense<0.000000e+00> : vector<1024x16xf32>
    %7 = tpu.matmul %5, %6, %cst {dimension_numbers = #tpu.dot_dimension_numbers<[1], [0], [0], [1], [0, 0, 1, 1], [], []>} : vector<1024x27xbf16>, vector<27x16xbf16>, vector<1024x16xf32> -> vector<1024x16xf32>
    %8 = vector.broadcast %1 : vector<1x16xf32> to vector<1024x16xf32>
    %9 = arith.addf %7, %8 : vector<1024x16xf32>
    %10 = arith.negf %9 : vector<1024x16xf32>
    %11 = math.exp %10 : vector<1024x16xf32>
    %cst_5 = arith.constant 1.000000e+00 : f32
    %12 = vector.broadcast %cst_5 : f32 to vector<1024x16xf32>
    %13 = arith.addf %12, %11 : vector<1024x16xf32>
    %14 = arith.divf %12, %13 : vector<1024x16xf32>
    %15 = arith.mulf %9, %14 : vector<1024x16xf32>
    %16 = arith.truncf %15 : vector<1024x16xf32> to vector<1024x16xbf16>
    %c0_6 = arith.constant 0 : index
    %c0_7 = arith.constant 0 : index
    %17 = vector.load %arg2[%c0_6, %c0_7] : memref<16x64xbf16, #tpu.memory_space<vmem>>, vector<16x64xbf16>
    %cst_8 = arith.constant dense<0.000000e+00> : vector<1024x64xf32>
    %18 = tpu.matmul %16, %17, %cst_8 {dimension_numbers = #tpu.dot_dimension_numbers<[1], [0], [0], [1], [0, 0, 1, 1], [], []>} : vector<1024x16xbf16>, vector<16x64xbf16>, vector<1024x64xf32> -> vector<1024x64xf32>
    %19 = vector.broadcast %2 : vector<1x64xf32> to vector<1024x64xf32>
    %20 = arith.addf %18, %19 : vector<1024x64xf32>
    %21 = arith.negf %20 : vector<1024x64xf32>
    %22 = math.exp %21 : vector<1024x64xf32>
    %cst_9 = arith.constant 1.000000e+00 : f32
    %23 = vector.broadcast %cst_9 : f32 to vector<1024x64xf32>
    %24 = arith.addf %23, %22 : vector<1024x64xf32>
    %25 = arith.divf %23, %24 : vector<1024x64xf32>
    %26 = arith.mulf %20, %25 : vector<1024x64xf32>
    %c0_10 = arith.constant 0 : index
    %c0_11 = arith.constant 0 : index
    %27 = vector.load %arg3[%c0_10, %c0_11] : memref<16x1024xbf16, #tpu.memory_space<vmem>>, vector<16x1024xbf16>
    %28 = arith.truncf %26 : vector<1024x64xf32> to vector<1024x64xbf16>
    %cst_12 = arith.constant dense<0.000000e+00> : vector<16x64xf32>
    %29 = tpu.matmul %27, %28, %cst_12 {dimension_numbers = #tpu.dot_dimension_numbers<[1], [0], [0], [1], [0, 0, 1, 1], [], []>} : vector<16x1024xbf16>, vector<1024x64xbf16>, vector<16x64xf32> -> vector<16x64xf32>
    %30 = arith.truncf %29 : vector<16x64xf32> to vector<16x64xbf16>
    %c0_13 = arith.constant 0 : index
    %c0_14 = arith.constant 0 : index
    %31 = vector.load %arg4[%c0_13, %c0_14] : memref<64x32xbf16, #tpu.memory_space<vmem>>, vector<64x32xbf16>
    %cst_15 = arith.constant dense<0.000000e+00> : vector<16x32xf32>
    %32 = tpu.matmul %30, %31, %cst_15 {dimension_numbers = #tpu.dot_dimension_numbers<[1], [0], [0], [1], [0, 0, 1, 1], [], []>} : vector<16x64xbf16>, vector<64x32xbf16>, vector<16x32xf32> -> vector<16x32xf32>
    %33 = vector.broadcast %3 : vector<1x32xf32> to vector<16x32xf32>
    %34 = arith.addf %32, %33 : vector<16x32xf32>
    %cst_16 = arith.constant 0.000000e+00 : f32
    %35 = vector.broadcast %cst_16 : f32 to vector<16x32xf32>
    %36 = arith.maximumf %34, %35 : vector<16x32xf32>
    %37 = arith.truncf %36 : vector<16x32xf32> to vector<16x32xbf16>
    %c0_17 = arith.constant 0 : index
    %c0_18 = arith.constant 0 : index
    %38 = vector.load %arg5[%c0_17, %c0_18] : memref<32x2xbf16, #tpu.memory_space<vmem>>, vector<32x2xbf16>
    %cst_19 = arith.constant dense<0.000000e+00> : vector<16x2xf32>
    %39 = tpu.matmul %37, %38, %cst_19 {dimension_numbers = #tpu.dot_dimension_numbers<[1], [0], [0], [1], [0, 0, 1, 1], [], []>} : vector<16x32xbf16>, vector<32x2xbf16>, vector<16x2xf32> -> vector<16x2xf32>
    %40 = vector.broadcast %4 : vector<1x2xf32> to vector<16x2xf32>
    %41 = arith.addf %39, %40 : vector<16x2xf32>
    %c0_20 = arith.constant 0 : index
    %c0_21 = arith.constant 0 : index
    %42 = vector.load %arg7[%c0_20, %c0_21] : memref<16x2xf32, #tpu.memory_space<vmem>>, vector<16x2xf32>
    tpu.vector_store %arg7[%c0_20, %c0_21], %41 {strides = array<i32>} : memref<16x2xf32, #tpu.memory_space<vmem>>, vector<16x2xf32>,
    return
  }
}

</mosaic_0001>

<llo_original>
// kernel: my_effnet_forward.1
$region0: #{my_effnet_forward.1}
  #allocation0 [shape = 'u32[]', space=smem, size = 0x4, offset = 0x4, fixed_abs, tag = 'smem constant byte address 0x4 - core index']
  #allocation1 [shape = 'u32[144,128]{1,0:T(1,128)}', space=vmem, size = 0x12000, scoped, tag = 'internal scratch']
  %s0 = inlined_call_operand.vmem [shape: bf16[1024,27], index: 0, kind: input, shape index: {}]
  %s1 = inlined_call_operand.vmem [shape: bf16[27,16], index: 1, kind: input, shape index: {}]
  %s2 = inlined_call_operand.vmem [shape: bf16[16,64], index: 2, kind: input, shape index: {}]
  %s3 = inlined_call_operand.vmem [shape: bf16[16,1024], index: 3, kind: input, shape index: {}]
  %s4 = inlined_call_operand.vmem [shape: bf16[64,32], index: 4, kind: input, shape index: {}]
  %s5 = inlined_call_operand.vmem [shape: bf16[32,2], index: 5, kind: input, shape index: {}]
  %s6 = inlined_call_operand.vmem [shape: f32[4,128], index: 6, kind: input, shape index: {}]
  %s7 = inlined_call_operand.vmem [shape: f32[16,2], index: 7, kind: output, shape index: {}]
  %s8 = sld [smem:[#allocation0]]
  $region38: #{my_effnet_forward.1} parent=0
    _
  %s10 = ssub.s32 1, %s8
  %s11 = scalar_select 0, %s10, %s8
  // Predicated region
  $region2: #{my_effnet_forward.1} parent=0 // pred_check
    _
  $region3: #{my_effnet_forward.1} parent=0 // pred_check_branch
    %13 = sbr.rel (0) target = $region5
  $region4: #{my_effnet_forward.1} parent=0 // pred_region
    _
  $region5: #{my_effnet_forward.1} parent=0 // pred_fallthru
    _
  // Predicated region
  $region6: #{my_effnet_forward.1} parent=0 // pred_check
    _
  $region7: #{my_effnet_forward.1} parent=0 // pred_check_branch
    %15 = sbr.rel (0) target = $region9
  $region8: #{my_effnet_forward.1} parent=0 // pred_region
    _
  $region9: #{my_effnet_forward.1} parent=0 // pred_fallthru
    _
  // Predicated region
  $region10: #{my_effnet_forward.1} parent=0 // pred_check
    _
  $region11: #{my_effnet_forward.1} parent=0 // pred_check_branch
    %17 = sbr.rel (0) target = $region13
  $region12: #{my_effnet_forward.1} parent=0 // pred_region
    _
  $region13: #{my_effnet_forward.1} parent=0 // pred_fallthru
    _
  // Predicated region
  $region14: #{my_effnet_forward.1} parent=0 // pred_check
    _
  $region15: #{my_effnet_forward.1} parent=0 // pred_check_branch
    %19 = sbr.rel (0) target = $region17
  $region16: #{my_effnet_forward.1} parent=0 // pred_region
    _
  $region17: #{my_effnet_forward.1} parent=0 // pred_fallthru
    _
  // Predicated region
  $region18: #{my_effnet_forward.1} parent=0 // pred_check
    _
  $region19: #{my_effnet_forward.1} parent=0 // pred_check_branch
    %21 = sbr.rel (0) target = $region21
  $region20: #{my_effnet_forward.1} parent=0 // pred_region
    _
  $region21: #{my_effnet_forward.1} parent=0 // pred_fallthru
    _
  // Predicated region
  $region22: #{my_effnet_forward.1} parent=0 // pred_check
    _
  $region23: #{my_effnet_forward.1} parent=0 // pred_check_branch
    %23 = sbr.rel (0) target = $region25
  $region24: #{my_effnet_forward.1} parent=0 // pred_region
    _
  $region25: #{my_effnet_forward.1} parent=0 // pred_fallthru
    _
  // Predicated region
  $region26: #{my_effnet_forward.1} parent=0 // pred_check
    _
  $region27: #{my_effnet_forward.1} parent=0 // pred_check_branch
    %25 = sbr.rel (0) target = $region29
  $region28: #{my_effnet_forward.1} parent=0 // pred_region
    _
  $region29: #{my_effnet_forward.1} parent=0 // pred_fallthru
    _
  %v27 = vld [vmem:[%s6] sm:$0xf]
  %v28 = vld [vmem:[%s0] sm:$0xf]
  %v29 = vld [vmem:[%s0 + $0x4] sm:$0xf]
  %v30 = vld [vmem:[%s0 + $0x8] sm:$0xf]
  %v31 = vld [vmem:[%s0 + $0xc] sm:$0xf]
  %v32 = vld [vmem:[%s0 + $0x10] sm:$0xf]
  %v33 = vld [vmem:[%s0 + $0x14] sm:$0xf]
  %v34 = vld [vmem:[%s0 + $0x18] sm:$0xf]
  %v35 = vld [vmem:[%s0 + $0x1c] sm:$0xf]
  %v36 = vld [vmem:[%s0 + $0x20] sm:$0xf]
  %v37 = vld [vmem:[%s0 + $0x24] sm:$0xf]
  %v38 = vld [vmem:[%s0 + $0x28] sm:$0xf]
  %v39 = vld [vmem:[%s0 + $0x2c] sm:$0xf]
  %v40 = vld [vmem:[%s0 + $0x30] sm:$0xf]
  %v41 = vld [vmem:[%s0 + $0x34] sm:$0xf]
  %v42 = vld [vmem:[%s0 + $0x38] sm:$0xf]
  %v43 = vld [vmem:[%s0 + $0x3c] sm:$0xf]
  %v44 = vld [vmem:[%s0 + $0x40] sm:$0xf]
  %v45 = vld [vmem:[%s0 + $0x44] sm:$0xf]
  %v46 = vld [vmem:[%s0 + $0x48] sm:$0xf]
  %v47 = vld [vmem:[%s0 + $0x4c] sm:$0xf]
  %v48 = vld [vmem:[%s0 + $0x50] sm:$0xf]
  %v49 = vld [vmem:[%s0 + $0x54] sm:$0xf]
  %v50 = vld [vmem:[%s0 + $0x58] sm:$0xf]
  %v51 = vld [vmem:[%s0 + $0x5c] sm:$0xf]
  %v52 = vld [vmem:[%s0 + $0x60] sm:$0xf]
  %v53 = vld [vmem:[%s0 + $0x64] sm:$0xf]
  %v54 = vld [vmem:[%s0 + $0x68] sm:$0xf]
  %v55 = vld [vmem:[%s0 + $0x6c] sm:$0xf]
  %v56 = vld [vmem:[%s0 + $0x70] sm:$0xf]
  %v57 = vld [vmem:[%s0 + $0x74] sm:$0xf]
  %v58 = vld [vmem:[%s0 + $0x78] sm:$0xf]
  %v59 = vld [vmem:[%s0 + $0x7c] sm:$0xf]
  %v60 = vld [vmem:[%s0 + $0x80] sm:$0xf]
  %v61 = vld [vmem:[%s0 + $0x84] sm:$0xf]
  %v62 = vld [vmem:[%s0 + $0x88] sm:$0xf]
  %v63 = vld [vmem:[%s0 + $0x8c] sm:$0xf]
  %v64 = vld [vmem:[%s0 + $0x90] sm:$0xf]
  %v65 = vld [vmem:[%s0 + $0x94] sm:$0xf]
  %v66 = vld [vmem:[%s0 + $0x98] sm:$0xf]
  %v67 = vld [vmem:[%s0 + $0x9c] sm:$0xf]
  %v68 = vld [vmem:[%s0 + $0xa0] sm:$0xf]
  %v69 = vld [vmem:[%s0 + $0xa4] sm:$0xf]
  %v70 = vld [vmem:[%s0 + $0xa8] sm:$0xf]
  %v71 = vld [vmem:[%s0 + $0xac] sm:$0xf]
  %v72 = vld [vmem:[%s0 + $0xb0] sm:$0xf]
  %v73 = vld [vmem:[%s0 + $0xb4] sm:$0xf]
  %v74 = vld [vmem:[%s0 + $0xb8] sm:$0xf]
  %v75 = vld [vmem:[%s0 + $0xbc] sm:$0xf]
  %v76 = vld [vmem:[%s0 + $0xc0] sm:$0xf]
  %v77 = vld [vmem:[%s0 + $0xc4] sm:$0xf]
  %v78 = vld [vmem:[%s0 + $0xc8] sm:$0xf]
  %v79 = vld [vmem:[%s0 + $0xcc] sm:$0xf]
  %v80 = vld [vmem:[%s0 + $0xd0] sm:$0xf]
  %v81 = vld [vmem:[%s0 + $0xd4] sm:$0xf]
  %v82 = vld [vmem:[%s0 + $0xd8] sm:$0xf]
  %v83 = vld [vmem:[%s0 + $0xdc] sm:$0xf]
  %v84 = vld [vmem:[%s0 + $0xe0] sm:$0xf]
  %v85 = vld [vmem:[%s0 + $0xe4] sm:$0xf]
  %v86 = vld [vmem:[%s0 + $0xe8] sm:$0xf]
  %v87 = vld [vmem:[%s0 + $0xec] sm:$0xf]
  %v88 = vld [vmem:[%s0 + $0xf0] sm:$0xf]
  %v89 = vld [vmem:[%s0 + $0xf4] sm:$0xf]
  %v90 = vld [vmem:[%s0 + $0xf8] sm:$0xf]
  %v91 = vld [vmem:[%s0 + $0xfc] sm:$0xf]
  %v92 = vld [vmem:[%s0 + $0x100] sm:$0xf]
  %v93 = vld [vmem:[%s0 + $0x104] sm:$0xf]
  %v94 = vld [vmem:[%s0 + $0x108] sm:$0xf]
  %v95 = vld [vmem:[%s0 + $0x10c] sm:$0xf]
  %v96 = vld [vmem:[%s0 + $0x110] sm:$0xf]
  %v97 = vld [vmem:[%s0 + $0x114] sm:$0xf]
  %v98 = vld [vmem:[%s0 + $0x118] sm:$0xf]
  %v99 = vld [vmem:[%s0 + $0x11c] sm:$0xf]
  %v100 = vld [vmem:[%s0 + $0x120] sm:$0xf]
  %v101 = vld [vmem:[%s0 + $0x124] sm:$0xf]
  %v102 = vld [vmem:[%s0 + $0x128] sm:$0xf]
  %v103 = vld [vmem:[%s0 + $0x12c] sm:$0xf]
  %v104 = vld [vmem:[%s0 + $0x130] sm:$0xf]
  %v105 = vld [vmem:[%s0 + $0x134] sm:$0xf]
  %v106 = vld [vmem:[%s0 + $0x138] sm:$0xf]
  %v107 = vld [vmem:[%s0 + $0x13c] sm:$0xf]
  %v108 = vld [vmem:[%s0 + $0x140] sm:$0xf]
  %v109 = vld [vmem:[%s0 + $0x144] sm:$0xf]
  %v110 = vld [vmem:[%s0 + $0x148] sm:$0xf]
  %v111 = vld [vmem:[%s0 + $0x14c] sm:$0xf]
  %v112 = vld [vmem:[%s0 + $0x150] sm:$0xf]
  %v113 = vld [vmem:[%s0 + $0x154] sm:$0xf]
  %v114 = vld [vmem:[%s0 + $0x158] sm:$0xf]
  %v115 = vld [vmem:[%s0 + $0x15c] sm:$0xf]
  %v116 = vld [vmem:[%s0 + $0x160] sm:$0xf]
  %v117 = vld [vmem:[%s0 + $0x164] sm:$0xf]
  %v118 = vld [vmem:[%s0 + $0x168] sm:$0xf]
  %v119 = vld [vmem:[%s0 + $0x16c] sm:$0xf]
  %v120 = vld [vmem:[%s0 + $0x170] sm:$0xf]
  %v121 = vld [vmem:[%s0 + $0x174] sm:$0xf]
  %v122 = vld [vmem:[%s0 + $0x178] sm:$0xf]
  %v123 = vld [vmem:[%s0 + $0x17c] sm:$0xf]
  %v124 = vld [vmem:[%s0 + $0x180] sm:$0xf]
  %v125 = vld [vmem:[%s0 + $0x184] sm:$0xf]
  %v126 = vld [vmem:[%s0 + $0x188] sm:$0xf]
  %v127 = vld [vmem:[%s0 + $0x18c] sm:$0xf]
  %v128 = vld [vmem:[%s0 + $0x190] sm:$0xf]
  %v129 = vld [vmem:[%s0 + $0x194] sm:$0xf]
  %v130 = vld [vmem:[%s0 + $0x198] sm:$0xf]
  %v131 = vld [vmem:[%s0 + $0x19c] sm:$0xf]
  %v132 = vld [vmem:[%s0 + $0x1a0] sm:$0xf]
  %v133 = vld [vmem:[%s0 + $0x1a4] sm:$0xf]
  %v134 = vld [vmem:[%s0 + $0x1a8] sm:$0xf]
  %v135 = vld [vmem:[%s0 + $0x1ac] sm:$0xf]
  %v136 = vld [vmem:[%s0 + $0x1b0] sm:$0xf]
  %v137 = vld [vmem:[%s0 + $0x1b4] sm:$0xf]
  %v138 = vld [vmem:[%s0 + $0x1b8] sm:$0xf]
  %v139 = vld [vmem:[%s0 + $0x1bc] sm:$0xf]
  %v140 = vld [vmem:[%s0 + $0x1c0] sm:$0xf]
  %v141 = vld [vmem:[%s0 + $0x1c4] sm:$0xf]
  %v142 = vld [vmem:[%s0 + $0x1c8] sm:$0xf]
  %v143 = vld [vmem:[%s0 + $0x1cc] sm:$0xf]
  %v144 = vld [vmem:[%s0 + $0x1d0] sm:$0xf]
  %v145 = vld [vmem:[%s0 + $0x1d4] sm:$0xf]
  %v146 = vld [vmem:[%s0 + $0x1d8] sm:$0xf]
  %v147 = vld [vmem:[%s0 + $0x1dc] sm:$0xf]
  %v148 = vld [vmem:[%s0 + $0x1e0] sm:$0xf]
  %v149 = vld [vmem:[%s0 + $0x1e4] sm:$0xf]
  %v150 = vld [vmem:[%s0 + $0x1e8] sm:$0xf]
  %v151 = vld [vmem:[%s0 + $0x1ec] sm:$0xf]
  %v152 = vld [vmem:[%s0 + $0x1f0] sm:$0xf]
  %v153 = vld [vmem:[%s0 + $0x1f4] sm:$0xf]
  %v154 = vld [vmem:[%s0 + $0x1f8] sm:$0xf]
  %v155 = vld [vmem:[%s0 + $0x1fc] sm:$0xf]
  %v156 = vld [vmem:[%s1] sm:$0xf]
  %v157 = vld [vmem:[%s1 + $0x4] sm:$0xf]
  %v158 = vld [vmem:[%s1 + $0x8] sm:$0xf]
  %v159 = vld [vmem:[%s1 + $0xc] sm:$0x3]
  %v160 = vlaneseq
  %v161 = vshrl.u32 %v160, 7
  %v162 = vsub.s32 0, %v161
  %v163 = vrot.slane %v27, %v162
  %v292 = vunpack.c.l.b16 %v28
  %v293 = vunpack.c.l.b16 %v29
  %v294 = vunpack.c.l.b16 %v30
  %v295 = vunpack.c.l.b16 %v31
  %v296 = vunpack.c.l.b16 %v32
  %v297 = vunpack.c.l.b16 %v33
  %v298 = vunpack.c.l.b16 %v34
  %v299 = vunpack.c.l.b16 %v35
  %v300 = vunpack.c.l.b16 %v36
  %v301 = vunpack.c.l.b16 %v37
  %v302 = vunpack.c.l.b16 %v38
  %v303 = vunpack.c.l.b16 %v39
  %v304 = vunpack.c.l.b16 %v40
  %v305 = vunpack.c.l.b16 %v41
  %v306 = vunpack.c.l.b16 %v42
  %v307 = vunpack.c.l.b16 %v43
  %v308 = vunpack.c.l.b16 %v44
  %v309 = vunpack.c.l.b16 %v45
  %v310 = vunpack.c.l.b16 %v46
  %v311 = vunpack.c.l.b16 %v47
  %v312 = vunpack.c.l.b16 %v48
  %v313 = vunpack.c.l.b16 %v49
  %v314 = vunpack.c.l.b16 %v50
  %v315 = vunpack.c.l.b16 %v51
  %v316 = vunpack.c.l.b16 %v52
  %v317 = vunpack.c.l.b16 %v53
  %v318 = vunpack.c.l.b16 %v54
  %v319 = vunpack.c.l.b16 %v55
  %v320 = vunpack.c.l.b16 %v56
  %v321 = vunpack.c.l.b16 %v57
  %v322 = vunpack.c.l.b16 %v58
  %v323 = vunpack.c.l.b16 %v59
  %v324 = vunpack.c.l.b16 %v60
  %v325 = vunpack.c.l.b16 %v61
  %v326 = vunpack.c.l.b16 %v62
  %v327 = vunpack.c.l.b16 %v63
  %v328 = vunpack.c.l.b16 %v64
  %v329 = vunpack.c.l.b16 %v65
  %v330 = vunpack.c.l.b16 %v66
  %v331 = vunpack.c.l.b16 %v67
  %v332 = vunpack.c.l.b16 %v68
  %v333 = vunpack.c.l.b16 %v69
  %v334 = vunpack.c.l.b16 %v70
  %v335 = vunpack.c.l.b16 %v71
  %v336 = vunpack.c.l.b16 %v72
  %v337 = vunpack.c.l.b16 %v73
  %v338 = vunpack.c.l.b16 %v74
  %v339 = vunpack.c.l.b16 %v75
  %v340 = vunpack.c.l.b16 %v76
  %v341 = vunpack.c.l.b16 %v77
  %v342 = vunpack.c.l.b16 %v78
  %v343 = vunpack.c.l.b16 %v79
  %v344 = vunpack.c.l.b16 %v80
  %v345 = vunpack.c.l.b16 %v81
  %v346 = vunpack.c.l.b16 %v82
  %v347 = vunpack.c.l.b16 %v83
  %v348 = vunpack.c.l.b16 %v84
  %v349 = vunpack.c.l.b16 %v85
  %v350 = vunpack.c.l.b16 %v86
  %v351 = vunpack.c.l.b16 %v87
  %v352 = vunpack.c.l.b16 %v88
  %v353 = vunpack.c.l.b16 %v89
  %v354 = vunpack.c.l.b16 %v90
  %v355 = vunpack.c.l.b16 %v91
  %v356 = vunpack.c.l.b16 %v92
  %v357 = vunpack.c.l.b16 %v93
  %v358 = vunpack.c.l.b16 %v94
  %v359 = vunpack.c.l.b16 %v95
  %v360 = vunpack.c.l.b16 %v96
  %v361 = vunpack.c.l.b16 %v97
  %v362 = vunpack.c.l.b16 %v98
  %v363 = vunpack.c.l.b16 %v99
  %v364 = vunpack.c.l.b16 %v100
  %v365 = vunpack.c.l.b16 %v101
  %v366 = vunpack.c.l.b16 %v102
  %v367 = vunpack.c.l.b16 %v103
  %v368 = vunpack.c.l.b16 %v104
  %v369 = vunpack.c.l.b16 %v105
  %v370 = vunpack.c.l.b16 %v106
  %v371 = vunpack.c.l.b16 %v107
  %v372 = vunpack.c.l.b16 %v108
  %v373 = vunpack.c.l.b16 %v109
  %v374 = vunpack.c.l.b16 %v110
  %v375 = vunpack.c.l.b16 %v111
  %v376 = vunpack.c.l.b16 %v112
  %v377 = vunpack.c.l.b16 %v113
  %v378 = vunpack.c.l.b16 %v114
  %v379 = vunpack.c.l.b16 %v115
  %v380 = vunpack.c.l.b16 %v116
  %v381 = vunpack.c.l.b16 %v117
  %v382 = vunpack.c.l.b16 %v118
  %v383 = vunpack.c.l.b16 %v119
  %v384 = vunpack.c.l.b16 %v120
  %v385 = vunpack.c.l.b16 %v121
  %v386 = vunpack.c.l.b16 %v122
  %v387 = vunpack.c.l.b16 %v123
  %v388 = vunpack.c.l.b16 %v124
  %v389 = vunpack.c.l.b16 %v125
  %v390 = vunpack.c.l.b16 %v126
  %v391 = vunpack.c.l.b16 %v127
  %v392 = vunpack.c.l.b16 %v128
  %v393 = vunpack.c.l.b16 %v129
  %v394 = vunpack.c.l.b16 %v130
  %v395 = vunpack.c.l.b16 %v131
  %v396 = vunpack.c.l.b16 %v132
  %v397 = vunpack.c.l.b16 %v133
  %v398 = vunpack.c.l.b16 %v134
  %v399 = vunpack.c.l.b16 %v135
  %v400 = vunpack.c.l.b16 %v136
  %v401 = vunpack.c.l.b16 %v137
  %v402 = vunpack.c.l.b16 %v138
  %v403 = vunpack.c.l.b16 %v139
  %v404 = vunpack.c.l.b16 %v140
  %v405 = vunpack.c.l.b16 %v141
  %v406 = vunpack.c.l.b16 %v142
  %v407 = vunpack.c.l.b16 %v143
  %v408 = vunpack.c.l.b16 %v144
  %v409 = vunpack.c.l.b16 %v145
  %v410 = vunpack.c.l.b16 %v146
  %v411 = vunpack.c.l.b16 %v147
  %v412 = vunpack.c.l.b16 %v148
  %v413 = vunpack.c.l.b16 %v149
  %v414 = vunpack.c.l.b16 %v150
  %v415 = vunpack.c.l.b16 %v151
  %v416 = vunpack.c.l.b16 %v152
  %v417 = vunpack.c.l.b16 %v153
  %v418 = vunpack.c.l.b16 %v154
  %v419 = vunpack.c.l.b16 %v155
  %v420 = vpack.c.b16 %v293, %v292
  %v421 = vpack.c.b16 %v295, %v294
  %v422 = vpack.c.b16 %v297, %v296
  %v423 = vpack.c.b16 %v299, %v298
  %v424 = vpack.c.b16 %v301, %v300
  %v425 = vpack.c.b16 %v303, %v302
  %v426 = vpack.c.b16 %v305, %v304
  %v427 = vpack.c.b16 %v307, %v306
  %v428 = vpack.c.b16 %v309, %v308
  %v429 = vpack.c.b16 %v311, %v310
  %v430 = vpack.c.b16 %v313, %v312
  %v431 = vpack.c.b16 %v315, %v314
  %v432 = vpack.c.b16 %v317, %v316
  %v433 = vpack.c.b16 %v319, %v318
  %v434 = vpack.c.b16 %v321, %v320
  %v435 = vpack.c.b16 %v323, %v322
  %v436 = vpack.c.b16 %v325, %v324
  %v437 = vpack.c.b16 %v327, %v326
  %v438 = vpack.c.b16 %v329, %v328
  %v439 = vpack.c.b16 %v331, %v330
  %v440 = vpack.c.b16 %v333, %v332
  %v441 = vpack.c.b16 %v335, %v334
  %v442 = vpack.c.b16 %v337, %v336
  %v443 = vpack.c.b16 %v339, %v338
  %v444 = vpack.c.b16 %v341, %v340
  %v445 = vpack.c.b16 %v343, %v342
  %v446 = vpack.c.b16 %v345, %v344
  %v447 = vpack.c.b16 %v347, %v346
  %v448 = vpack.c.b16 %v349, %v348
  %v449 = vpack.c.b16 %v351, %v350
  %v450 = vpack.c.b16 %v353, %v352
  %v451 = vpack.c.b16 %v355, %v354
  %v452 = vpack.c.b16 %v357, %v356
  %v453 = vpack.c.b16 %v359, %v358
  %v454 = vpack.c.b16 %v361, %v360
  %v455 = vpack.c.b16 %v363, %v362
  %v456 = vpack.c.b16 %v365, %v364
  %v457 = vpack.c.b16 %v367, %v366
  %v458 = vpack.c.b16 %v369, %v368
  %v459 = vpack.c.b16 %v371, %v370
  %v460 = vpack.c.b16 %v373, %v372
  %v461 = vpack.c.b16 %v375, %v374
  %v462 = vpack.c.b16 %v377, %v376
  %v463 = vpack.c.b16 %v379, %v378
  %v464 = vpack.c.b16 %v381, %v380
  %v465 = vpack.c.b16 %v383, %v382
  %v466 = vpack.c.b16 %v385, %v384
  %v467 = vpack.c.b16 %v387, %v386
  %v468 = vpack.c.b16 %v389, %v388
  %v469 = vpack.c.b16 %v391, %v390
  %v470 = vpack.c.b16 %v393, %v392
  %v471 = vpack.c.b16 %v395, %v394
  %v472 = vpack.c.b16 %v397, %v396
  %v473 = vpack.c.b16 %v399, %v398
  %v474 = vpack.c.b16 %v401, %v400
  %v475 = vpack.c.b16 %v403, %v402
  %v476 = vpack.c.b16 %v405, %v404
  %v477 = vpack.c.b16 %v407, %v406
  %v478 = vpack.c.b16 %v409, %v408
  %v479 = vpack.c.b16 %v411, %v410
  %v480 = vpack.c.b16 %v413, %v412
  %v481 = vpack.c.b16 %v415, %v414
  %v482 = vpack.c.b16 %v417, %v416
  %v483 = vpack.c.b16 %v419, %v418
  %v488 = vunpack.c.l.b16 %v156
  %v489 = vunpack.c.l.b16 %v157
  %v490 = vunpack.c.l.b16 %v158
  %v491 = vunpack.c.l.b16 %v159
  %v492 = vpack.c.b16 %v489, %v488
  %v493 = vpack.c.b16 %v491, %v490
  %vm495 = vcmask 220160
  %v497 = vsel %vm495, %v420, 0
  %v500 = vsel %vm495, %v421, 0
  %v503 = vsel %vm495, %v422, 0
  %v506 = vsel %vm495, %v423, 0
  %v509 = vsel %vm495, %v424, 0
  %v512 = vsel %vm495, %v425, 0
  %v515 = vsel %vm495, %v426, 0
  %v518 = vsel %vm495, %v427, 0
  %v521 = vsel %vm495, %v428, 0
  %v524 = vsel %vm495, %v429, 0
  %v527 = vsel %vm495, %v430, 0
  %v530 = vsel %vm495, %v431, 0
  %v533 = vsel %vm495, %v432, 0
  %v536 = vsel %vm495, %v433, 0
  %v539 = vsel %vm495, %v434, 0
  %v542 = vsel %vm495, %v435, 0
  %v545 = vsel %vm495, %v436, 0
  %v548 = vsel %vm495, %v437, 0
  %v551 = vsel %vm495, %v438, 0
  %v554 = vsel %vm495, %v439, 0
  %v557 = vsel %vm495, %v440, 0
  %v560 = vsel %vm495, %v441, 0
  %v563 = vsel %vm495, %v442, 0
  %v566 = vsel %vm495, %v443, 0
  %v569 = vsel %vm495, %v444, 0
  %v572 = vsel %vm495, %v445, 0
  %v575 = vsel %vm495, %v446, 0
  %v578 = vsel %vm495, %v447, 0
  %v581 = vsel %vm495, %v448, 0
  %v584 = vsel %vm495, %v449, 0
  %v587 = vsel %vm495, %v450, 0
  %v590 = vsel %vm495, %v451, 0
  %v593 = vsel %vm495, %v452, 0
  %v596 = vsel %vm495, %v453, 0
  %v599 = vsel %vm495, %v454, 0
  %v602 = vsel %vm495, %v455, 0
  %v605 = vsel %vm495, %v456, 0
  %v608 = vsel %vm495, %v457, 0
  %v611 = vsel %vm495, %v458, 0
  %v614 = vsel %vm495, %v459, 0
  %v617 = vsel %vm495, %v460, 0
  %v620 = vsel %vm495, %v461, 0
  %v623 = vsel %vm495, %v462, 0
  %v626 = vsel %vm495, %v463, 0
  %v629 = vsel %vm495, %v464, 0
  %v632 = vsel %vm495, %v465, 0
  %v635 = vsel %vm495, %v466, 0
  %v638 = vsel %vm495, %v467, 0
  %v641 = vsel %vm495, %v468, 0
  %v644 = vsel %vm495, %v469, 0
  %v647 = vsel %vm495, %v470, 0
  %v650 = vsel %vm495, %v471, 0
  %v653 = vsel %vm495, %v472, 0
  %v656 = vsel %vm495, %v473, 0
  %v659 = vsel %vm495, %v474, 0
  %v662 = vsel %vm495, %v475, 0
  %v665 = vsel %vm495, %v476, 0
  %v668 = vsel %vm495, %v477, 0
  %v671 = vsel %vm495, %v478, 0
  %v674 = vsel %vm495, %v479, 0
  %v677 = vsel %vm495, %v480, 0
  %v680 = vsel %vm495, %v481, 0
  %v683 = vsel %vm495, %v482, 0
  %v686 = vsel %vm495, %v483, 0
  %vm688 = vcmask 1044480
  %vm689 = vcmask 1045504
  %v690 = vsel %vm688, 4294967295, 65535
  %v691 = vsel %vm689, %v690, 0
  %v693 = vand.u32 %v493, %v691
  %695 = vmatprep.subr.bf16.mxu0 0
  %696 = vmatpush1.bf16.msra.mxu0 %v492
  %697 = vmatprep.subr.bf16.mxu0 0
  %698 = vmatpush1.bf16.msra.mxu0 %v693
  %699 = vmatprep.subr.bf16.mxu0 0
  %700 = vmatpush1.bf16.msra.mxu0 0
  %701 = vmatprep.subr.bf16.mxu0 0
  %702 = vmatpush1.bf16.msra.mxu0 0
  %703 = vmatprep.subr.bf16.mxu0 0
  %704 = vmatpush1.bf16.msra.mxu0 0
  %705 = vmatprep.subr.bf16.mxu0 0
  %706 = vmatpush1.bf16.msra.mxu0 0
  %707 = vmatprep.subr.bf16.mxu0 0
  %708 = vmatpush1.bf16.msra.mxu0 0
  %709 = vmatprep.subr.bf16.mxu0 0
  %710 = vmatpush1.bf16.msra.mxu0 0
  %711 = vmatprep.subr.bf16.mxu0 0
  %712 = vmatpush1.bf16.msra.mxu0 0
  %713 = vmatprep.subr.bf16.mxu0 0
  %714 = vmatpush1.bf16.msra.mxu0 0
  %715 = vmatprep.subr.bf16.mxu0 0
  %716 = vmatpush1.bf16.msra.mxu0 0
  %717 = vmatprep.subr.bf16.mxu0 0
  %718 = vmatpush1.bf16.msra.mxu0 0
  %719 = vmatprep.subr.bf16.mxu0 0
  %720 = vmatpush1.bf16.msra.mxu0 0
  %721 = vmatprep.subr.bf16.mxu0 0
  %722 = vmatpush1.bf16.msra.mxu0 0
  %723 = vmatprep.subr.bf16.mxu0 0
  %724 = vmatpush1.bf16.msra.mxu0 0
  %725 = vmatprep.subr.bf16.mxu0 0
  %726 = vmatpush1.bf16.msra.mxu0 0
  %727 = vmatprep.mubr.bf16.mxu0 0
  %728 = vmatmul.mubr.bf16.gmra.mrb[0].mxu0 %v497
  %v729 = vpop.f32.mrb[0].mxu0
  %v730 = vadd.f32 %v163, %v729
  %v731 = vpop.f32.mrb[0].mxu0
  %v732 = vpop.f32.mrb[0].mxu0
  %v733 = vadd.f32 %v163, %v732
  %v734 = vpop.f32.mrb[0].mxu0
  %735 = vmatprep.mubr.bf16.mxu0 0
  %736 = vmatmul.mubr.bf16.gmra.mrb[0].mxu0 %v500
  %v737 = vpop.f32.mrb[0].mxu0
  %v738 = vadd.f32 %v163, %v737
  %v739 = vpop.f32.mrb[0].mxu0
  %v740 = vpop.f32.mrb[0].mxu0
  %v741 = vadd.f32 %v163, %v740
  %v742 = vpop.f32.mrb[0].mxu0
  %743 = vmatprep.mubr.bf16.mxu0 0
  %744 = vmatmul.mubr.bf16.gmra.mrb[0].mxu0 %v503
  %v745 = vpop.f32.mrb[0].mxu0
  %v746 = vadd.f32 %v163, %v745
  %v747 = vpop.f32.mrb[0].mxu0
  %v748 = vpop.f32.mrb[0].mxu0
  %v749 = vadd.f32 %v163, %v748
  %v750 = vpop.f32.mrb[0].mxu0
  %751 = vmatprep.mubr.bf16.mxu0 0
  %752 = vmatmul.mubr.bf16.gmra.mrb[0].mxu0 %v506
  %v753 = vpop.f32.mrb[0].mxu0
  %v754 = vadd.f32 %v163, %v753
  %v755 = vpop.f32.mrb[0].mxu0
  %v756 = vpop.f32.mrb[0].mxu0
  %v757 = vadd.f32 %v163, %v756
  %v758 = vpop.f32.mrb[0].mxu0
  %759 = vmatprep.mubr.bf16.mxu0 0
  %760 = vmatmul.mubr.bf16.gmra.mrb[0].mxu0 %v509
  %v761 = vpop.f32.mrb[0].mxu0
  %v762 = vadd.f32 %v163, %v761
  %v763 = vpop.f32.mrb[0].mxu0
  %v764 = vpop.f32.mrb[0].mxu0
  %v765 = vadd.f32 %v163, %v764
  %v766 = vpop.f32.mrb[0].mxu0
  %767 = vmatprep.mubr.bf16.mxu0 0
  %768 = vmatmul.mubr.bf16.gmra.mrb[0].mxu0 %v512
  %v769 = vpop.f32.mrb[0].mxu0
  %v770 = vadd.f32 %v163, %v769
  %v771 = vpop.f32.mrb[0].mxu0
  %v772 = vpop.f32.mrb[0].mxu0
  %v773 = vadd.f32 %v163, %v772
  %v774 = vpop.f32.mrb[0].mxu0
  %775 = vmatprep.mubr.bf16.mxu0 0
  %776 = vmatmul.mubr.bf16.gmra.mrb[0].mxu0 %v515
  %v777 = vpop.f32.mrb[0].mxu0
  %v778 = vadd.f32 %v163, %v777
  %v779 = vpop.f32.mrb[0].mxu0
  %v780 = vpop.f32.mrb[0].mxu0
  %v781 = vadd.f32 %v163, %v780
  %v782 = vpop.f32.mrb[0].mxu0
  %783 = vmatprep.mubr.bf16.mxu0 0
  %784 = vmatmul.mubr.bf16.gmra.mrb[0].mxu0 %v518
  %v785 = vpop.f32.mrb[0].mxu0
  %v786 = vadd.f32 %v163, %v785
  %v787 = vpop.f32.mrb[0].mxu0
  %v788 = vpop.f32.mrb[0].mxu0
  %v789 = vadd.f32 %v163, %v788
  %v790 = vpop.f32.mrb[0].mxu0
  %791 = vmatprep.mubr.bf16.mxu0 0
  %792 = vmatmul.mubr.bf16.gmra.mrb[0].mxu0 %v521
  %v793 = vpop.f32.mrb[0].mxu0
  %v794 = vadd.f32 %v163, %v793
  %v795 = vpop.f32.mrb[0].mxu0
  %v796 = vpop.f32.mrb[0].mxu0
  %v797 = vadd.f32 %v163, %v796
  %v798 = vpop.f32.mrb[0].mxu0
  %799 = vmatprep.mubr.bf16.mxu0 0
  %800 = vmatmul.mubr.bf16.gmra.mrb[0].mxu0 %v524
  %v801 = vpop.f32.mrb[0].mxu0
  %v802 = vadd.f32 %v163, %v801
  %v803 = vpop.f32.mrb[0].mxu0
  %v804 = vpop.f32.mrb[0].mxu0
  %v805 = vadd.f32 %v163, %v804
  %v806 = vpop.f32.mrb[0].mxu0
  %807 = vmatprep.mubr.bf16.mxu0 0
  %808 = vmatmul.mubr.bf16.gmra.mrb[0].mxu0 %v527
  %v809 = vpop.f32.mrb[0].mxu0
  %v810 = vadd.f32 %v163, %v809
  %v811 = vpop.f32.mrb[0].mxu0
  %v812 = vpop.f32.mrb[0].mxu0
  %v813 = vadd.f32 %v163, %v812
  %v814 = vpop.f32.mrb[0].mxu0
  %815 = vmatprep.mubr.bf16.mxu0 0
  %816 = vmatmul.mubr.bf16.gmra.mrb[0].mxu0 %v530
  %v817 = vpop.f32.mrb[0].mxu0
  %v818 = vadd.f32 %v163, %v817
  %v819 = vpop.f32.mrb[0].mxu0
  %v820 = vpop.f32.mrb[0].mxu0
  %v821 = vadd.f32 %v163, %v820
  %v822 = vpop.f32.mrb[0].mxu0
  %823 = vmatprep.mubr.bf16.mxu0 0
  %824 = vmatmul.mubr.bf16.gmra.mrb[0].mxu0 %v533
  %v825 = vpop.f32.mrb[0].mxu0
  %v826 = vadd.f32 %v163, %v825
  %v827 = vpop.f32.mrb[0].mxu0
  %v828 = vpop.f32.mrb[0].mxu0
  %v829 = vadd.f32 %v163, %v828
  %v830 = vpop.f32.mrb[0].mxu0
  %831 = vmatprep.mubr.bf16.mxu0 0
  %832 = vmatmul.mubr.bf16.gmra.mrb[0].mxu0 %v536
  %v833 = vpop.f32.mrb[0].mxu0
  %v834 = vadd.f32 %v163, %v833
  %v835 = vpop.f32.mrb[0].mxu0
  %v836 = vpop.f32.mrb[0].mxu0
  %v837 = vadd.f32 %v163, %v836
  %v838 = vpop.f32.mrb[0].mxu0
  %839 = vmatprep.mubr.bf16.mxu0 0
  %840 = vmatmul.mubr.bf16.gmra.mrb[0].mxu0 %v539
  %v841 = vpop.f32.mrb[0].mxu0
  %v842 = vadd.f32 %v163, %v841
  %v843 = vpop.f32.mrb[0].mxu0
  %v844 = vpop.f32.mrb[0].mxu0
  %v845 = vadd.f32 %v163, %v844
  %v846 = vpop.f32.mrb[0].mxu0
  %847 = vmatprep.mubr.bf16.mxu0 0
  %848 = vmatmul.mubr.bf16.gmra.mrb[0].mxu0 %v542
  %v849 = vpop.f32.mrb[0].mxu0
  %v850 = vadd.f32 %v163, %v849
  %v851 = vpop.f32.mrb[0].mxu0
  %v852 = vpop.f32.mrb[0].mxu0
  %v853 = vadd.f32 %v163, %v852
  %v854 = vpop.f32.mrb[0].mxu0
  %855 = vmatprep.mubr.bf16.mxu0 0
  %856 = vmatmul.mubr.bf16.gmra.mrb[0].mxu0 %v545
  %v857 = vpop.f32.mrb[0].mxu0
  %v858 = vadd.f32 %v163, %v857
  %v859 = vpop.f32.mrb[0].mxu0
  %v860 = vpop.f32.mrb[0].mxu0
  %v861 = vadd.f32 %v163, %v860
  %v862 = vpop.f32.mrb[0].mxu0
  %863 = vmatprep.mubr.bf16.mxu0 0
  %864 = vmatmul.mubr.bf16.gmra.mrb[0].mxu0 %v548
  %v865 = vpop.f32.mrb[0].mxu0
  %v866 = vadd.f32 %v163, %v865
  %v867 = vpop.f32.mrb[0].mxu0
  %v868 = vpop.f32.mrb[0].mxu0
  %v869 = vadd.f32 %v163, %v868
  %v870 = vpop.f32.mrb[0].mxu0
  %871 = vmatprep.mubr.bf16.mxu0 0
  %872 = vmatmul.mubr.bf16.gmra.mrb[0].mxu0 %v551
  %v873 = vpop.f32.mrb[0].mxu0
  %v874 = vadd.f32 %v163, %v873
  %v875 = vpop.f32.mrb[0].mxu0
  %v876 = vpop.f32.mrb[0].mxu0
  %v877 = vadd.f32 %v163, %v876
  %v878 = vpop.f32.mrb[0].mxu0
  %879 = vmatprep.mubr.bf16.mxu0 0
  %880 = vmatmul.mubr.bf16.gmra.mrb[0].mxu0 %v554
  %v881 = vpop.f32.mrb[0].mxu0
  %v882 = vadd.f32 %v163, %v881
  %v883 = vpop.f32.mrb[0].mxu0
  %v884 = vpop.f32.mrb[0].mxu0
  %v885 = vadd.f32 %v163, %v884
  %v886 = vpop.f32.mrb[0].mxu0
  %887 = vmatprep.mubr.bf16.mxu0 0
  %888 = vmatmul.mubr.bf16.gmra.mrb[0].mxu0 %v557
  %v889 = vpop.f32.mrb[0].mxu0
  %v890 = vadd.f32 %v163, %v889
  %v891 = vpop.f32.mrb[0].mxu0
  %v892 = vpop.f32.mrb[0].mxu0
  %v893 = vadd.f32 %v163, %v892
  %v894 = vpop.f32.mrb[0].mxu0
  %895 = vmatprep.mubr.bf16.mxu0 0
  %896 = vmatmul.mubr.bf16.gmra.mrb[0].mxu0 %v560
  %v897 = vpop.f32.mrb[0].mxu0
  %v898 = vadd.f32 %v163, %v897
  %v899 = vpop.f32.mrb[0].mxu0
  %v900 = vpop.f32.mrb[0].mxu0
  %v901 = vadd.f32 %v163, %v900
  %v902 = vpop.f32.mrb[0].mxu0
  %903 = vmatprep.mubr.bf16.mxu0 0
  %904 = vmatmul.mubr.bf16.gmra.mrb[0].mxu0 %v563
  %v905 = vpop.f32.mrb[0].mxu0
  %v906 = vadd.f32 %v163, %v905
  %v907 = vpop.f32.mrb[0].mxu0
  %v908 = vpop.f32.mrb[0].mxu0
  %v909 = vadd.f32 %v163, %v908
  %v910 = vpop.f32.mrb[0].mxu0
  %911 = vmatprep.mubr.bf16.mxu0 0
  %912 = vmatmul.mubr.bf16.gmra.mrb[0].mxu0 %v566
  %v913 = vpop.f32.mrb[0].mxu0
  %v914 = vadd.f32 %v163, %v913
  %v915 = vpop.f32.mrb[0].mxu0
  %v916 = vpop.f32.mrb[0].mxu0
  %v917 = vadd.f32 %v163, %v916
  %v918 = vpop.f32.mrb[0].mxu0
  %919 = vmatprep.mubr.bf16.mxu0 0
  %920 = vmatmul.mubr.bf16.gmra.mrb[0].mxu0 %v569
  %v921 = vpop.f32.mrb[0].mxu0
  %v922 = vadd.f32 %v163, %v921
  %v923 = vpop.f32.mrb[0].mxu0
  %v924 = vpop.f32.mrb[0].mxu0
  %v925 = vadd.f32 %v163, %v924
  %v926 = vpop.f32.mrb[0].mxu0
  %927 = vmatprep.mubr.bf16.mxu0 0
  %928 = vmatmul.mubr.bf16.gmra.mrb[0].mxu0 %v572
  %v929 = vpop.f32.mrb[0].mxu0
  %v930 = vadd.f32 %v163, %v929
  %v931 = vpop.f32.mrb[0].mxu0
  %v932 = vpop.f32.mrb[0].mxu0
  %v933 = vadd.f32 %v163, %v932
  %v934 = vpop.f32.mrb[0].mxu0
  %935 = vmatprep.mubr.bf16.mxu0 0
  %936 = vmatmul.mubr.bf16.gmra.mrb[0].mxu0 %v575
  %v937 = vpop.f32.mrb[0].mxu0
  %v938 = vadd.f32 %v163, %v937
  %v939 = vpop.f32.mrb[0].mxu0
  %v940 = vpop.f32.mrb[0].mxu0
  %v941 = vadd.f32 %v163, %v940
  %v942 = vpop.f32.mrb[0].mxu0
  %943 = vmatprep.mubr.bf16.mxu0 0
  %944 = vmatmul.mubr.bf16.gmra.mrb[0].mxu0 %v578
  %v945 = vpop.f32.mrb[0].mxu0
  %v946 = vadd.f32 %v163, %v945
  %v947 = vpop.f32.mrb[0].mxu0
  %v948 = vpop.f32.mrb[0].mxu0
  %v949 = vadd.f32 %v163, %v948
  %v950 = vpop.f32.mrb[0].mxu0
  %951 = vmatprep.mubr.bf16.mxu0 0
  %952 = vmatmul.mubr.bf16.gmra.mrb[0].mxu0 %v581
  %v953 = vpop.f32.mrb[0].mxu0
  %v954 = vadd.f32 %v163, %v953
  %v955 = vpop.f32.mrb[0].mxu0
  %v956 = vpop.f32.mrb[0].mxu0
  %v957 = vadd.f32 %v163, %v956
  %v958 = vpop.f32.mrb[0].mxu0
  %959 = vmatprep.mubr.bf16.mxu0 0
  %960 = vmatmul.mubr.bf16.gmra.mrb[0].mxu0 %v584
  %v961 = vpop.f32.mrb[0].mxu0
  %v962 = vadd.f32 %v163, %v961
  %v963 = vpop.f32.mrb[0].mxu0
  %v964 = vpop.f32.mrb[0].mxu0
  %v965 = vadd.f32 %v163, %v964
  %v966 = vpop.f32.mrb[0].mxu0
  %967 = vmatprep.mubr.bf16.mxu0 0
  %968 = vmatmul.mubr.bf16.gmra.mrb[0].mxu0 %v587
  %v969 = vpop.f32.mrb[0].mxu0
  %v970 = vadd.f32 %v163, %v969
  %v971 = vpop.f32.mrb[0].mxu0
  %v972 = vpop.f32.mrb[0].mxu0
  %v973 = vadd.f32 %v163, %v972
  %v974 = vpop.f32.mrb[0].mxu0
  %975 = vmatprep.mubr.bf16.mxu0 0
  %976 = vmatmul.mubr.bf16.gmra.mrb[0].mxu0 %v590
  %v977 = vpop.f32.mrb[0].mxu0
  %v978 = vadd.f32 %v163, %v977
  %v979 = vpop.f32.mrb[0].mxu0
  %v980 = vpop.f32.mrb[0].mxu0
  %v981 = vadd.f32 %v163, %v980
  %v982 = vpop.f32.mrb[0].mxu0
  %983 = vmatprep.mubr.bf16.mxu0 0
  %984 = vmatmul.mubr.bf16.gmra.mrb[0].mxu0 %v593
  %v985 = vpop.f32.mrb[0].mxu0
  %v986 = vadd.f32 %v163, %v985
  %v987 = vpop.f32.mrb[0].mxu0
  %v988 = vpop.f32.mrb[0].mxu0
  %v989 = vadd.f32 %v163, %v988
  %v990 = vpop.f32.mrb[0].mxu0
  %991 = vmatprep.mubr.bf16.mxu0 0
  %992 = vmatmul.mubr.bf16.gmra.mrb[0].mxu0 %v596
  %v993 = vpop.f32.mrb[0].mxu0
  %v994 = vadd.f32 %v163, %v993
  %v995 = vpop.f32.mrb[0].mxu0
  %v996 = vpop.f32.mrb[0].mxu0
  %v997 = vadd.f32 %v163, %v996
  %v998 = vpop.f32.mrb[0].mxu0
  %999 = vmatprep.mubr.bf16.mxu0 0
  %1000 = vmatmul.mubr.bf16.gmra.mrb[0].mxu0 %v599
  %v1001 = vpop.f32.mrb[0].mxu0
  %v1002 = vadd.f32 %v163, %v1001
  %v1003 = vpop.f32.mrb[0].mxu0
  %v1004 = vpop.f32.mrb[0].mxu0
  %v1005 = vadd.f32 %v163, %v1004
  %v1006 = vpop.f32.mrb[0].mxu0
  %1007 = vmatprep.mubr.bf16.mxu0 0
  %1008 = vmatmul.mubr.bf16.gmra.mrb[0].mxu0 %v602
  %v1009 = vpop.f32.mrb[0].mxu0
  %v1010 = vadd.f32 %v163, %v1009
  %v1011 = vpop.f32.mrb[0].mxu0
  %v1012 = vpop.f32.mrb[0].mxu0
  %v1013 = vadd.f32 %v163, %v1012
  %v1014 = vpop.f32.mrb[0].mxu0
  %1015 = vmatprep.mubr.bf16.mxu0 0
  %1016 = vmatmul.mubr.bf16.gmra.mrb[0].mxu0 %v605
  %v1017 = vpop.f32.mrb[0].mxu0
  %v1018 = vadd.f32 %v163, %v1017
  %v1019 = vpop.f32.mrb[0].mxu0
  %v1020 = vpop.f32.mrb[0].mxu0
  %v1021 = vadd.f32 %v163, %v1020
  %v1022 = vpop.f32.mrb[0].mxu0
  %1023 = vmatprep.mubr.bf16.mxu0 0
  %1024 = vmatmul.mubr.bf16.gmra.mrb[0].mxu0 %v608
  %v1025 = vpop.f32.mrb[0].mxu0
  %v1026 = vadd.f32 %v163, %v1025
  %v1027 = vpop.f32.mrb[0].mxu0
  %v1028 = vpop.f32.mrb[0].mxu0
  %v1029 = vadd.f32 %v163, %v1028
  %v1030 = vpop.f32.mrb[0].mxu0
  %1031 = vmatprep.mubr.bf16.mxu0 0
  %1032 = vmatmul.mubr.bf16.gmra.mrb[0].mxu0 %v611
  %v1033 = vpop.f32.mrb[0].mxu0
  %v1034 = vadd.f32 %v163, %v1033
  %v1035 = vpop.f32.mrb[0].mxu0
  %v1036 = vpop.f32.mrb[0].mxu0
  %v1037 = vadd.f32 %v163, %v1036
  %v1038 = vpop.f32.mrb[0].mxu0
  %1039 = vmatprep.mubr.bf16.mxu0 0
  %1040 = vmatmul.mubr.bf16.gmra.mrb[0].mxu0 %v614
  %v1041 = vpop.f32.mrb[0].mxu0
  %v1042 = vadd.f32 %v163, %v1041
  %v1043 = vpop.f32.mrb[0].mxu0
  %v1044 = vpop.f32.mrb[0].mxu0
  %v1045 = vadd.f32 %v163, %v1044
  %v1046 = vpop.f32.mrb[0].mxu0
  %1047 = vmatprep.mubr.bf16.mxu0 0
  %1048 = vmatmul.mubr.bf16.gmra.mrb[0].mxu0 %v617
  %v1049 = vpop.f32.mrb[0].mxu0
  %v1050 = vadd.f32 %v163, %v1049
  %v1051 = vpop.f32.mrb[0].mxu0
  %v1052 = vpop.f32.mrb[0].mxu0
  %v1053 = vadd.f32 %v163, %v1052
  %v1054 = vpop.f32.mrb[0].mxu0
  %1055 = vmatprep.mubr.bf16.mxu0 0
  %1056 = vmatmul.mubr.bf16.gmra.mrb[0].mxu0 %v620
  %v1057 = vpop.f32.mrb[0].mxu0
  %v1058 = vadd.f32 %v163, %v1057
  %v1059 = vpop.f32.mrb[0].mxu0
  %v1060 = vpop.f32.mrb[0].mxu0
  %v1061 = vadd.f32 %v163, %v1060
  %v1062 = vpop.f32.mrb[0].mxu0
  %1063 = vmatprep.mubr.bf16.mxu0 0
  %1064 = vmatmul.mubr.bf16.gmra.mrb[0].mxu0 %v623
  %v1065 = vpop.f32.mrb[0].mxu0
  %v1066 = vadd.f32 %v163, %v1065
  %v1067 = vpop.f32.mrb[0].mxu0
  %v1068 = vpop.f32.mrb[0].mxu0
  %v1069 = vadd.f32 %v163, %v1068
  %v1070 = vpop.f32.mrb[0].mxu0
  %1071 = vmatprep.mubr.bf16.mxu0 0
  %1072 = vmatmul.mubr.bf16.gmra.mrb[0].mxu0 %v626
  %v1073 = vpop.f32.mrb[0].mxu0
  %v1074 = vadd.f32 %v163, %v1073
  %v1075 = vpop.f32.mrb[0].mxu0
  %v1076 = vpop.f32.mrb[0].mxu0
  %v1077 = vadd.f32 %v163, %v1076
  %v1078 = vpop.f32.mrb[0].mxu0
  %1079 = vmatprep.mubr.bf16.mxu0 0
  %1080 = vmatmul.mubr.bf16.gmra.mrb[0].mxu0 %v629
  %v1081 = vpop.f32.mrb[0].mxu0
  %v1082 = vadd.f32 %v163, %v1081
  %v1083 = vpop.f32.mrb[0].mxu0
  %v1084 = vpop.f32.mrb[0].mxu0
  %v1085 = vadd.f32 %v163, %v1084
  %v1086 = vpop.f32.mrb[0].mxu0
  %1087 = vmatprep.mubr.bf16.mxu0 0
  %1088 = vmatmul.mubr.bf16.gmra.mrb[0].mxu0 %v632
  %v1089 = vpop.f32.mrb[0].mxu0
  %v1090 = vadd.f32 %v163, %v1089
  %v1091 = vpop.f32.mrb[0].mxu0
  %v1092 = vpop.f32.mrb[0].mxu0
  %v1093 = vadd.f32 %v163, %v1092
  %v1094 = vpop.f32.mrb[0].mxu0
  %1095 = vmatprep.mubr.bf16.mxu0 0
  %1096 = vmatmul.mubr.bf16.gmra.mrb[0].mxu0 %v635
  %v1097 = vpop.f32.mrb[0].mxu0
  %v1098 = vadd.f32 %v163, %v1097
  %v1099 = vpop.f32.mrb[0].mxu0
  %v1100 = vpop.f32.mrb[0].mxu0
  %v1101 = vadd.f32 %v163, %v1100
  %v1102 = vpop.f32.mrb[0].mxu0
  %1103 = vmatprep.mubr.bf16.mxu0 0
  %1104 = vmatmul.mubr.bf16.gmra.mrb[0].mxu0 %v638
  %v1105 = vpop.f32.mrb[0].mxu0
  %v1106 = vadd.f32 %v163, %v1105
  %v1107 = vpop.f32.mrb[0].mxu0
  %v1108 = vpop.f32.mrb[0].mxu0
  %v1109 = vadd.f32 %v163, %v1108
  %v1110 = vpop.f32.mrb[0].mxu0
  %1111 = vmatprep.mubr.bf16.mxu0 0
  %1112 = vmatmul.mubr.bf16.gmra.mrb[0].mxu0 %v641
  %v1113 = vpop.f32.mrb[0].mxu0
  %v1114 = vadd.f32 %v163, %v1113
  %v1115 = vpop.f32.mrb[0].mxu0
  %v1116 = vpop.f32.mrb[0].mxu0
  %v1117 = vadd.f32 %v163, %v1116
  %v1118 = vpop.f32.mrb[0].mxu0
  %1119 = vmatprep.mubr.bf16.mxu0 0
  %1120 = vmatmul.mubr.bf16.gmra.mrb[0].mxu0 %v644
  %v1121 = vpop.f32.mrb[0].mxu0
  %v1122 = vadd.f32 %v163, %v1121
  %v1123 = vpop.f32.mrb[0].mxu0
  %v1124 = vpop.f32.mrb[0].mxu0
  %v1125 = vadd.f32 %v163, %v1124
  %v1126 = vpop.f32.mrb[0].mxu0
  %1127 = vmatprep.mubr.bf16.mxu0 0
  %1128 = vmatmul.mubr.bf16.gmra.mrb[0].mxu0 %v647
  %v1129 = vpop.f32.mrb[0].mxu0
  %v1130 = vadd.f32 %v163, %v1129
  %v1131 = vpop.f32.mrb[0].mxu0
  %v1132 = vpop.f32.mrb[0].mxu0
  %v1133 = vadd.f32 %v163, %v1132
  %v1134 = vpop.f32.mrb[0].mxu0
  %1135 = vmatprep.mubr.bf16.mxu0 0
  %1136 = vmatmul.mubr.bf16.gmra.mrb[0].mxu0 %v650
  %v1137 = vpop.f32.mrb[0].mxu0
  %v1138 = vadd.f32 %v163, %v1137
  %v1139 = vpop.f32.mrb[0].mxu0
  %v1140 = vpop.f32.mrb[0].mxu0
  %v1141 = vadd.f32 %v163, %v1140
  %v1142 = vpop.f32.mrb[0].mxu0
  %1143 = vmatprep.mubr.bf16.mxu0 0
  %1144 = vmatmul.mubr.bf16.gmra.mrb[0].mxu0 %v653
  %v1145 = vpop.f32.mrb[0].mxu0
  %v1146 = vadd.f32 %v163, %v1145
  %v1147 = vpop.f32.mrb[0].mxu0
  %v1148 = vpop.f32.mrb[0].mxu0
  %v1149 = vadd.f32 %v163, %v1148
  %v1150 = vpop.f32.mrb[0].mxu0
  %1151 = vmatprep.mubr.bf16.mxu0 0
  %1152 = vmatmul.mubr.bf16.gmra.mrb[0].mxu0 %v656
  %v1153 = vpop.f32.mrb[0].mxu0
  %v1154 = vadd.f32 %v163, %v1153
  %v1155 = vpop.f32.mrb[0].mxu0
  %v1156 = vpop.f32.mrb[0].mxu0
  %v1157 = vadd.f32 %v163, %v1156
  %v1158 = vpop.f32.mrb[0].mxu0
  %1159 = vmatprep.mubr.bf16.mxu0 0
  %1160 = vmatmul.mubr.bf16.gmra.mrb[0].mxu0 %v659
  %v1161 = vpop.f32.mrb[0].mxu0
  %v1162 = vadd.f32 %v163, %v1161
  %v1163 = vpop.f32.mrb[0].mxu0
  %v1164 = vpop.f32.mrb[0].mxu0
  %v1165 = vadd.f32 %v163, %v1164
  %v1166 = vpop.f32.mrb[0].mxu0
  %1167 = vmatprep.mubr.bf16.mxu0 0
  %1168 = vmatmul.mubr.bf16.gmra.mrb[0].mxu0 %v662
  %v1169 = vpop.f32.mrb[0].mxu0
  %v1170 = vadd.f32 %v163, %v1169
  %v1171 = vpop.f32.mrb[0].mxu0
  %v1172 = vpop.f32.mrb[0].mxu0
  %v1173 = vadd.f32 %v163, %v1172
  %v1174 = vpop.f32.mrb[0].mxu0
  %1175 = vmatprep.mubr.bf16.mxu0 0
  %1176 = vmatmul.mubr.bf16.gmra.mrb[0].mxu0 %v665
  %v1177 = vpop.f32.mrb[0].mxu0
  %v1178 = vadd.f32 %v163, %v1177
  %v1179 = vpop.f32.mrb[0].mxu0
  %v1180 = vpop.f32.mrb[0].mxu0
  %v1181 = vadd.f32 %v163, %v1180
  %v1182 = vpop.f32.mrb[0].mxu0
  %1183 = vmatprep.mubr.bf16.mxu0 0
  %1184 = vmatmul.mubr.bf16.gmra.mrb[0].mxu0 %v668
  %v1185 = vpop.f32.mrb[0].mxu0
  %v1186 = vadd.f32 %v163, %v1185
  %v1187 = vpop.f32.mrb[0].mxu0
  %v1188 = vpop.f32.mrb[0].mxu0
  %v1189 = vadd.f32 %v163, %v1188
  %v1190 = vpop.f32.mrb[0].mxu0
  %1191 = vmatprep.mubr.bf16.mxu0 0
  %1192 = vmatmul.mubr.bf16.gmra.mrb[0].mxu0 %v671
  %v1193 = vpop.f32.mrb[0].mxu0
  %v1194 = vadd.f32 %v163, %v1193
  %v1195 = vpop.f32.mrb[0].mxu0
  %v1196 = vpop.f32.mrb[0].mxu0
  %v1197 = vadd.f32 %v163, %v1196
  %v1198 = vpop.f32.mrb[0].mxu0
  %1199 = vmatprep.mubr.bf16.mxu0 0
  %1200 = vmatmul.mubr.bf16.gmra.mrb[0].mxu0 %v674
  %v1201 = vpop.f32.mrb[0].mxu0
  %v1202 = vadd.f32 %v163, %v1201
  %v1203 = vpop.f32.mrb[0].mxu0
  %v1204 = vpop.f32.mrb[0].mxu0
  %v1205 = vadd.f32 %v163, %v1204
  %v1206 = vpop.f32.mrb[0].mxu0
  %1207 = vmatprep.mubr.bf16.mxu0 0
  %1208 = vmatmul.mubr.bf16.gmra.mrb[0].mxu0 %v677
  %v1209 = vpop.f32.mrb[0].mxu0
  %v1210 = vadd.f32 %v163, %v1209
  %v1211 = vpop.f32.mrb[0].mxu0
  %v1212 = vpop.f32.mrb[0].mxu0
  %v1213 = vadd.f32 %v163, %v1212
  %v1214 = vpop.f32.mrb[0].mxu0
  %1215 = vmatprep.mubr.bf16.mxu0 0
  %1216 = vmatmul.mubr.bf16.gmra.mrb[0].mxu0 %v680
  %v1217 = vpop.f32.mrb[0].mxu0
  %v1218 = vadd.f32 %v163, %v1217
  %v1219 = vpop.f32.mrb[0].mxu0
  %v1220 = vpop.f32.mrb[0].mxu0
  %v1221 = vadd.f32 %v163, %v1220
  %v1222 = vpop.f32.mrb[0].mxu0
  %1223 = vmatprep.mubr.bf16.mxu0 0
  %1224 = vmatmul.mubr.bf16.gmra.mrb[0].mxu0 %v683
  %v1225 = vpop.f32.mrb[0].mxu0
  %v1226 = vadd.f32 %v163, %v1225
  %v1227 = vpop.f32.mrb[0].mxu0
  %v1228 = vpop.f32.mrb[0].mxu0
  %v1229 = vadd.f32 %v163, %v1228
  %v1230 = vpop.f32.mrb[0].mxu0
  %1231 = vmatprep.mubr.bf16.mxu0 0
  %1232 = vmatmul.mubr.bf16.gmra.mrb[0].mxu0 %v686
  %v1233 = vpop.f32.mrb[0].mxu0
  %v1234 = vadd.f32 %v163, %v1233
  %v1235 = vpop.f32.mrb[0].mxu0
  %v1236 = vpop.f32.mrb[0].mxu0
  %v1237 = vadd.f32 %v163, %v1236
  %v1238 = vpop.f32.mrb[0].mxu0
  %1239 = vdwg.mxu0
  %v1240 = vxor.u32 %v730, 2147483648
  %v1241 = vxor.u32 %v733, 2147483648
  %v1242 = vxor.u32 %v738, 2147483648
  %v1243 = vxor.u32 %v741, 2147483648
  %v1244 = vxor.u32 %v746, 2147483648
  %v1245 = vxor.u32 %v749, 2147483648
  %v1246 = vxor.u32 %v754, 2147483648
  %v1247 = vxor.u32 %v757, 2147483648
  %v1248 = vxor.u32 %v762, 2147483648
  %v1249 = vxor.u32 %v765, 2147483648
  %v1250 = vxor.u32 %v770, 2147483648
  %v1251 = vxor.u32 %v773, 2147483648
  %v1252 = vxor.u32 %v778, 2147483648
  %v1253 = vxor.u32 %v781, 2147483648
  %v1254 = vxor.u32 %v786, 2147483648
  %v1255 = vxor.u32 %v789, 2147483648
  %v1256 = vxor.u32 %v794, 2147483648
  %v1257 = vxor.u32 %v797, 2147483648
  %v1258 = vxor.u32 %v802, 2147483648
  %v1259 = vxor.u32 %v805, 2147483648
  %v1260 = vxor.u32 %v810, 2147483648
  %v1261 = vxor.u32 %v813, 2147483648
  %v1262 = vxor.u32 %v818, 2147483648
  %v1263 = vxor.u32 %v821, 2147483648
  %v1264 = vxor.u32 %v826, 2147483648
  %v1265 = vxor.u32 %v829, 2147483648
  %v1266 = vxor.u32 %v834, 2147483648
  %v1267 = vxor.u32 %v837, 2147483648
  %v1268 = vxor.u32 %v842, 2147483648
  %v1269 = vxor.u32 %v845, 2147483648
  %v1270 = vxor.u32 %v850, 2147483648
  %v1271 = vxor.u32 %v853, 2147483648
  %v1272 = vxor.u32 %v858, 2147483648
  %v1273 = vxor.u32 %v861, 2147483648
  %v1274 = vxor.u32 %v866, 2147483648
  %v1275 = vxor.u32 %v869, 2147483648
  %v1276 = vxor.u32 %v874, 2147483648
  %v1277 = vxor.u32 %v877, 2147483648
  %v1278 = vxor.u32 %v882, 2147483648
  %v1279 = vxor.u32 %v885, 2147483648
  %v1280 = vxor.u32 %v890, 2147483648
  %v1281 = vxor.u32 %v893, 2147483648
  %v1282 = vxor.u32 %v898, 2147483648
  %v1283 = vxor.u32 %v901, 2147483648
  %v1284 = vxor.u32 %v906, 2147483648
  %v1285 = vxor.u32 %v909, 2147483648
  %v1286 = vxor.u32 %v914, 2147483648
  %v1287 = vxor.u32 %v917, 2147483648
  %v1288 = vxor.u32 %v922, 2147483648
  %v1289 = vxor.u32 %v925, 2147483648
  %v1290 = vxor.u32 %v930, 2147483648
  %v1291 = vxor.u32 %v933, 2147483648
  %v1292 = vxor.u32 %v938, 2147483648
  %v1293 = vxor.u32 %v941, 2147483648
  %v1294 = vxor.u32 %v946, 2147483648
  %v1295 = vxor.u32 %v949, 2147483648
  %v1296 = vxor.u32 %v954, 2147483648
  %v1297 = vxor.u32 %v957, 2147483648
  %v1298 = vxor.u32 %v962, 2147483648
  %v1299 = vxor.u32 %v965, 2147483648
  %v1300 = vxor.u32 %v970, 2147483648
  %v1301 = vxor.u32 %v973, 2147483648
  %v1302 = vxor.u32 %v978, 2147483648
  %v1303 = vxor.u32 %v981, 2147483648
  %v1304 = vxor.u32 %v986, 2147483648
  %v1305 = vxor.u32 %v989, 2147483648
  %v1306 = vxor.u32 %v994, 2147483648
  %v1307 = vxor.u32 %v997, 2147483648
  %v1308 = vxor.u32 %v1002, 2147483648
  %v1309 = vxor.u32 %v1005, 2147483648
  %v1310 = vxor.u32 %v1010, 2147483648
  %v1311 = vxor.u32 %v1013, 2147483648
  %v1312 = vxor.u32 %v1018, 2147483648
  %v1313 = vxor.u32 %v1021, 2147483648
  %v1314 = vxor.u32 %v1026, 2147483648
  %v1315 = vxor.u32 %v1029, 2147483648
  %v1316 = vxor.u32 %v1034, 2147483648
  %v1317 = vxor.u32 %v1037, 2147483648
  %v1318 = vxor.u32 %v1042, 2147483648
  %v1319 = vxor.u32 %v1045, 2147483648
  %v1320 = vxor.u32 %v1050, 2147483648
  %v1321 = vxor.u32 %v1053, 2147483648
  %v1322 = vxor.u32 %v1058, 2147483648
  %v1323 = vxor.u32 %v1061, 2147483648
  %v1324 = vxor.u32 %v1066, 2147483648
  %v1325 = vxor.u32 %v1069, 2147483648
  %v1326 = vxor.u32 %v1074, 2147483648
  %v1327 = vxor.u32 %v1077, 2147483648
  %v1328 = vxor.u32 %v1082, 2147483648
  %v1329 = vxor.u32 %v1085, 2147483648
  %v1330 = vxor.u32 %v1090, 2147483648
  %v1331 = vxor.u32 %v1093, 2147483648
  %v1332 = vxor.u32 %v1098, 2147483648
  %v1333 = vxor.u32 %v1101, 2147483648
  %v1334 = vxor.u32 %v1106, 2147483648
  %v1335 = vxor.u32 %v1109, 2147483648
  %v1336 = vxor.u32 %v1114, 2147483648
  %v1337 = vxor.u32 %v1117, 2147483648
  %v1338 = vxor.u32 %v1122, 2147483648
  %v1339 = vxor.u32 %v1125, 2147483648
  %v1340 = vxor.u32 %v1130, 2147483648
  %v1341 = vxor.u32 %v1133, 2147483648
  %v1342 = vxor.u32 %v1138, 2147483648
  %v1343 = vxor.u32 %v1141, 2147483648
  %v1344 = vxor.u32 %v1146, 2147483648
  %v1345 = vxor.u32 %v1149, 2147483648
  %v1346 = vxor.u32 %v1154, 2147483648
  %v1347 = vxor.u32 %v1157, 2147483648
  %v1348 = vxor.u32 %v1162, 2147483648
  %v1349 = vxor.u32 %v1165, 2147483648
  %v1350 = vxor.u32 %v1170, 2147483648
  %v1351 = vxor.u32 %v1173, 2147483648
  %v1352 = vxor.u32 %v1178, 2147483648
  %v1353 = vxor.u32 %v1181, 2147483648
  %v1354 = vxor.u32 %v1186, 2147483648
  %v1355 = vxor.u32 %v1189, 2147483648
  %v1356 = vxor.u32 %v1194, 2147483648
  %v1357 = vxor.u32 %v1197, 2147483648
  %v1358 = vxor.u32 %v1202, 2147483648
  %v1359 = vxor.u32 %v1205, 2147483648
  %v1360 = vxor.u32 %v1210, 2147483648
  %v1361 = vxor.u32 %v1213, 2147483648
  %v1362 = vxor.u32 %v1218, 2147483648
  %v1363 = vxor.u32 %v1221, 2147483648
  %v1364 = vxor.u32 %v1226, 2147483648
  %v1365 = vxor.u32 %v1229, 2147483648
  %v1366 = vxor.u32 %v1234, 2147483648
  %v1367 = vxor.u32 %v1237, 2147483648
  %v1368 = vmul.f32 %v1240, 1.442695
  %v1369 = vpow.pop %v1368
  %v1370 = vmul.f32 %v1241, 1.442695
  %v1371 = vpow.pop %v1370
  %v1372 = vmul.f32 %v1242, 1.442695
  %v1373 = vpow.pop %v1372
  %v1374 = vmul.f32 %v1243, 1.442695
  %v1375 = vpow.pop %v1374
  %v1376 = vmul.f32 %v1244, 1.442695
  %v1377 = vpow.pop %v1376
  %v1378 = vmul.f32 %v1245, 1.442695
  %v1379 = vpow.pop %v1378
  %v1380 = vmul.f32 %v1246, 1.442695
  %v1381 = vpow.pop %v1380
  %v1382 = vmul.f32 %v1247, 1.442695
  %v1383 = vpow.pop %v1382
  %v1384 = vmul.f32 %v1248, 1.442695
  %v1385 = vpow.pop %v1384
  %v1386 = vmul.f32 %v1249, 1.442695
  %v1387 = vpow.pop %v1386
  %v1388 = vmul.f32 %v1250, 1.442695
  %v1389 = vpow.pop %v1388
  %v1390 = vmul.f32 %v1251, 1.442695
  %v1391 = vpow.pop %v1390
  %v1392 = vmul.f32 %v1252, 1.442695
  %v1393 = vpow.pop %v1392
  %v1394 = vmul.f32 %v1253, 1.442695
  %v1395 = vpow.pop %v1394
  %v1396 = vmul.f32 %v1254, 1.442695
  %v1397 = vpow.pop %v1396
  %v1398 = vmul.f32 %v1255, 1.442695
  %v1399 = vpow.pop %v1398
  %v1400 = vmul.f32 %v1256, 1.442695
  %v1401 = vpow.pop %v1400
  %v1402 = vmul.f32 %v1257, 1.442695
  %v1403 = vpow.pop %v1402
  %v1404 = vmul.f32 %v1258, 1.442695
  %v1405 = vpow.pop %v1404
  %v1406 = vmul.f32 %v1259, 1.442695
  %v1407 = vpow.pop %v1406
  %v1408 = vmul.f32 %v1260, 1.442695
  %v1409 = vpow.pop %v1408
  %v1410 = vmul.f32 %v1261, 1.442695
  %v1411 = vpow.pop %v1410
  %v1412 = vmul.f32 %v1262, 1.442695
  %v1413 = vpow.pop %v1412
  %v1414 = vmul.f32 %v1263, 1.442695
  %v1415 = vpow.pop %v1414
  %v1416 = vmul.f32 %v1264, 1.442695
  %v1417 = vpow.pop %v1416
  %v1418 = vmul.f32 %v1265, 1.442695
  %v1419 = vpow.pop %v1418
  %v1420 = vmul.f32 %v1266, 1.442695
  %v1421 = vpow.pop %v1420
  %v1422 = vmul.f32 %v1267, 1.442695
  %v1423 = vpow.pop %v1422
  %v1424 = vmul.f32 %v1268, 1.442695
  %v1425 = vpow.pop %v1424
  %v1426 = vmul.f32 %v1269, 1.442695
  %v1427 = vpow.pop %v1426
  %v1428 = vmul.f32 %v1270, 1.442695
  %v1429 = vpow.pop %v1428
  %v1430 = vmul.f32 %v1271, 1.442695
  %v1431 = vpow.pop %v1430
  %v1432 = vmul.f32 %v1272, 1.442695
  %v1433 = vpow.pop %v1432
  %v1434 = vmul.f32 %v1273, 1.442695
  %v1435 = vpow.pop %v1434
  %v1436 = vmul.f32 %v1274, 1.442695
  %v1437 = vpow.pop %v1436
  %v1438 = vmul.f32 %v1275, 1.442695
  %v1439 = vpow.pop %v1438
  %v1440 = vmul.f32 %v1276, 1.442695
  %v1441 = vpow.pop %v1440
  %v1442 = vmul.f32 %v1277, 1.442695
  %v1443 = vpow.pop %v1442
  %v1444 = vmul.f32 %v1278, 1.442695
  %v1445 = vpow.pop %v1444
  %v1446 = vmul.f32 %v1279, 1.442695
  %v1447 = vpow.pop %v1446
  %v1448 = vmul.f32 %v1280, 1.442695
  %v1449 = vpow.pop %v1448
  %v1450 = vmul.f32 %v1281, 1.442695
  %v1451 = vpow.pop %v1450
  %v1452 = vmul.f32 %v1282, 1.442695
  %v1453 = vpow.pop %v1452
  %v1454 = vmul.f32 %v1283, 1.442695
  %v1455 = vpow.pop %v1454
  %v1456 = vmul.f32 %v1284, 1.442695
  %v1457 = vpow.pop %v1456
  %v1458 = vmul.f32 %v1285, 1.442695
  %v1459 = vpow.pop %v1458
  %v1460 = vmul.f32 %v1286, 1.442695
  %v1461 = vpow.pop %v1460
  %v1462 = vmul.f32 %v1287, 1.442695
  %v1463 = vpow.pop %v1462
  %v1464 = vmul.f32 %v1288, 1.442695
  %v1465 = vpow.pop %v1464
  %v1466 = vmul.f32 %v1289, 1.442695
  %v1467 = vpow.pop %v1466
  %v1468 = vmul.f32 %v1290, 1.442695
  %v1469 = vpow.pop %v1468
  %v1470 = vmul.f32 %v1291, 1.442695
  %v1471 = vpow.pop %v1470
  %v1472 = vmul.f32 %v1292, 1.442695
  %v1473 = vpow.pop %v1472
  %v1474 = vmul.f32 %v1293, 1.442695
  %v1475 = vpow.pop %v1474
  %v1476 = vmul.f32 %v1294, 1.442695
  %v1477 = vpow.pop %v1476
  %v1478 = vmul.f32 %v1295, 1.442695
  %v1479 = vpow.pop %v1478
  %v1480 = vmul.f32 %v1296, 1.442695
  %v1481 = vpow.pop %v1480
  %v1482 = vmul.f32 %v1297, 1.442695
  %v1483 = vpow.pop %v1482
  %v1484 = vmul.f32 %v1298, 1.442695
  %v1485 = vpow.pop %v1484
  %v1486 = vmul.f32 %v1299, 1.442695
  %v1487 = vpow.pop %v1486
  %v1488 = vmul.f32 %v1300, 1.442695
  %v1489 = vpow.pop %v1488
  %v1490 = vmul.f32 %v1301, 1.442695
  %v1491 = vpow.pop %v1490
  %v1492 = vmul.f32 %v1302, 1.442695
  %v1493 = vpow.pop %v1492
  %v1494 = vmul.f32 %v1303, 1.442695
  %v1495 = vpow.pop %v1494
  %v1496 = vmul.f32 %v1304, 1.442695
  %v1497 = vpow.pop %v1496
  %v1498 = vmul.f32 %v1305, 1.442695
  %v1499 = vpow.pop %v1498
  %v1500 = vmul.f32 %v1306, 1.442695
  %v1501 = vpow.pop %v1500
  %v1502 = vmul.f32 %v1307, 1.442695
  %v1503 = vpow.pop %v1502
  %v1504 = vmul.f32 %v1308, 1.442695
  %v1505 = vpow.pop %v1504
  %v1506 = vmul.f32 %v1309, 1.442695
  %v1507 = vpow.pop %v1506
  %v1508 = vmul.f32 %v1310, 1.442695
  %v1509 = vpow.pop %v1508
  %v1510 = vmul.f32 %v1311, 1.442695
  %v1511 = vpow.pop %v1510
  %v1512 = vmul.f32 %v1312, 1.442695
  %v1513 = vpow.pop %v1512
  %v1514 = vmul.f32 %v1313, 1.442695
  %v1515 = vpow.pop %v1514
  %v1516 = vmul.f32 %v1314, 1.442695
  %v1517 = vpow.pop %v1516
  %v1518 = vmul.f32 %v1315, 1.442695
  %v1519 = vpow.pop %v1518
  %v1520 = vmul.f32 %v1316, 1.442695
  %v1521 = vpow.pop %v1520
  %v1522 = vmul.f32 %v1317, 1.442695
  %v1523 = vpow.pop %v1522
  %v1524 = vmul.f32 %v1318, 1.442695
  %v1525 = vpow.pop %v1524
  %v1526 = vmul.f32 %v1319, 1.442695
  %v1527 = vpow.pop %v1526
  %v1528 = vmul.f32 %v1320, 1.442695
  %v1529 = vpow.pop %v1528
  %v1530 = vmul.f32 %v1321, 1.442695
  %v1531 = vpow.pop %v1530
  %v1532 = vmul.f32 %v1322, 1.442695
  %v1533 = vpow.pop %v1532
  %v1534 = vmul.f32 %v1323, 1.442695
  %v1535 = vpow.pop %v1534
  %v1536 = vmul.f32 %v1324, 1.442695
  %v1537 = vpow.pop %v1536
  %v1538 = vmul.f32 %v1325, 1.442695
  %v1539 = vpow.pop %v1538
  %v1540 = vmul.f32 %v1326, 1.442695
  %v1541 = vpow.pop %v1540
  %v1542 = vmul.f32 %v1327, 1.442695
  %v1543 = vpow.pop %v1542
  %v1544 = vmul.f32 %v1328, 1.442695
  %v1545 = vpow.pop %v1544
  %v1546 = vmul.f32 %v1329, 1.442695
  %v1547 = vpow.pop %v1546
  %v1548 = vmul.f32 %v1330, 1.442695
  %v1549 = vpow.pop %v1548
  %v1550 = vmul.f32 %v1331, 1.442695
  %v1551 = vpow.pop %v1550
  %v1552 = vmul.f32 %v1332, 1.442695
  %v1553 = vpow.pop %v1552
  %v1554 = vmul.f32 %v1333, 1.442695
  %v1555 = vpow.pop %v1554
  %v1556 = vmul.f32 %v1334, 1.442695
  %v1557 = vpow.pop %v1556
  %v1558 = vmul.f32 %v1335, 1.442695
  %v1559 = vpow.pop %v1558
  %v1560 = vmul.f32 %v1336, 1.442695
  %v1561 = vpow.pop %v1560
  %v1562 = vmul.f32 %v1337, 1.442695
  %v1563 = vpow.pop %v1562
  %v1564 = vmul.f32 %v1338, 1.442695
  %v1565 = vpow.pop %v1564
  %v1566 = vmul.f32 %v1339, 1.442695
  %v1567 = vpow.pop %v1566
  %v1568 = vmul.f32 %v1340, 1.442695
  %v1569 = vpow.pop %v1568
  %v1570 = vmul.f32 %v1341, 1.442695
  %v1571 = vpow.pop %v1570
  %v1572 = vmul.f32 %v1342, 1.442695
  %v1573 = vpow.pop %v1572
  %v1574 = vmul.f32 %v1343, 1.442695
  %v1575 = vpow.pop %v1574
  %v1576 = vmul.f32 %v1344, 1.442695
  %v1577 = vpow.pop %v1576
  %v1578 = vmul.f32 %v1345, 1.442695
  %v1579 = vpow.pop %v1578
  %v1580 = vmul.f32 %v1346, 1.442695
  %v1581 = vpow.pop %v1580
  %v1582 = vmul.f32 %v1347, 1.442695
  %v1583 = vpow.pop %v1582
  %v1584 = vmul.f32 %v1348, 1.442695
  %v1585 = vpow.pop %v1584
  %v1586 = vmul.f32 %v1349, 1.442695
  %v1587 = vpow.pop %v1586
  %v1588 = vmul.f32 %v1350, 1.442695
  %v1589 = vpow.pop %v1588
  %v1590 = vmul.f32 %v1351, 1.442695
  %v1591 = vpow.pop %v1590
  %v1592 = vmul.f32 %v1352, 1.442695
  %v1593 = vpow.pop %v1592
  %v1594 = vmul.f32 %v1353, 1.442695
  %v1595 = vpow.pop %v1594
  %v1596 = vmul.f32 %v1354, 1.442695
  %v1597 = vpow.pop %v1596
  %v1598 = vmul.f32 %v1355, 1.442695
  %v1599 = vpow.pop %v1598
  %v1600 = vmul.f32 %v1356, 1.442695
  %v1601 = vpow.pop %v1600
  %v1602 = vmul.f32 %v1357, 1.442695
  %v1603 = vpow.pop %v1602
  %v1604 = vmul.f32 %v1358, 1.442695
  %v1605 = vpow.pop %v1604
  %v1606 = vmul.f32 %v1359, 1.442695
  %v1607 = vpow.pop %v1606
  %v1608 = vmul.f32 %v1360, 1.442695
  %v1609 = vpow.pop %v1608
  %v1610 = vmul.f32 %v1361, 1.442695
  %v1611 = vpow.pop %v1610
  %v1612 = vmul.f32 %v1362, 1.442695
  %v1613 = vpow.pop %v1612
  %v1614 = vmul.f32 %v1363, 1.442695
  %v1615 = vpow.pop %v1614
  %v1616 = vmul.f32 %v1364, 1.442695
  %v1617 = vpow.pop %v1616
  %v1618 = vmul.f32 %v1365, 1.442695
  %v1619 = vpow.pop %v1618
  %v1620 = vmul.f32 %v1366, 1.442695
  %v1621 = vpow.pop %v1620
  %v1622 = vmul.f32 %v1367, 1.442695
  %v1623 = vpow.pop %v1622
  %v1624 = vadd.f32 %v1369, 1.0
  %v1625 = vadd.f32 %v1371, 1.0
  %v1626 = vadd.f32 %v1373, 1.0
  %v1627 = vadd.f32 %v1375, 1.0
  %v1628 = vadd.f32 %v1377, 1.0
  %v1629 = vadd.f32 %v1379, 1.0
  %v1630 = vadd.f32 %v1381, 1.0
  %v1631 = vadd.f32 %v1383, 1.0
  %v1632 = vadd.f32 %v1385, 1.0
  %v1633 = vadd.f32 %v1387, 1.0
  %v1634 = vadd.f32 %v1389, 1.0
  %v1635 = vadd.f32 %v1391, 1.0
  %v1636 = vadd.f32 %v1393, 1.0
  %v1637 = vadd.f32 %v1395, 1.0
  %v1638 = vadd.f32 %v1397, 1.0
  %v1639 = vadd.f32 %v1399, 1.0
  %v1640 = vadd.f32 %v1401, 1.0
  %v1641 = vadd.f32 %v1403, 1.0
  %v1642 = vadd.f32 %v1405, 1.0
  %v1643 = vadd.f32 %v1407, 1.0
  %v1644 = vadd.f32 %v1409, 1.0
  %v1645 = vadd.f32 %v1411, 1.0
  %v1646 = vadd.f32 %v1413, 1.0
  %v1647 = vadd.f32 %v1415, 1.0
  %v1648 = vadd.f32 %v1417, 1.0
  %v1649 = vadd.f32 %v1419, 1.0
  %v1650 = vadd.f32 %v1421, 1.0
  %v1651 = vadd.f32 %v1423, 1.0
  %v1652 = vadd.f32 %v1425, 1.0
  %v1653 = vadd.f32 %v1427, 1.0
  %v1654 = vadd.f32 %v1429, 1.0
  %v1655 = vadd.f32 %v1431, 1.0
  %v1656 = vadd.f32 %v1433, 1.0
  %v1657 = vadd.f32 %v1435, 1.0
  %v1658 = vadd.f32 %v1437, 1.0
  %v1659 = vadd.f32 %v1439, 1.0
  %v1660 = vadd.f32 %v1441, 1.0
  %v1661 = vadd.f32 %v1443, 1.0
  %v1662 = vadd.f32 %v1445, 1.0
  %v1663 = vadd.f32 %v1447, 1.0
  %v1664 = vadd.f32 %v1449, 1.0
  %v1665 = vadd.f32 %v1451, 1.0
  %v1666 = vadd.f32 %v1453, 1.0
  %v1667 = vadd.f32 %v1455, 1.0
  %v1668 = vadd.f32 %v1457, 1.0
  %v1669 = vadd.f32 %v1459, 1.0
  %v1670 = vadd.f32 %v1461, 1.0
  %v1671 = vadd.f32 %v1463, 1.0
  %v1672 = vadd.f32 %v1465, 1.0
  %v1673 = vadd.f32 %v1467, 1.0
  %v1674 = vadd.f32 %v1469, 1.0
  %v1675 = vadd.f32 %v1471, 1.0
  %v1676 = vadd.f32 %v1473, 1.0
  %v1677 = vadd.f32 %v1475, 1.0
  %v1678 = vadd.f32 %v1477, 1.0
  %v1679 = vadd.f32 %v1479, 1.0
  %v1680 = vadd.f32 %v1481, 1.0
  %v1681 = vadd.f32 %v1483, 1.0
  %v1682 = vadd.f32 %v1485, 1.0
  %v1683 = vadd.f32 %v1487, 1.0
  %v1684 = vadd.f32 %v1489, 1.0
  %v1685 = vadd.f32 %v1491, 1.0
  %v1686 = vadd.f32 %v1493, 1.0
  %v1687 = vadd.f32 %v1495, 1.0
  %v1688 = vadd.f32 %v1497, 1.0
  %v1689 = vadd.f32 %v1499, 1.0
  %v1690 = vadd.f32 %v1501, 1.0
  %v1691 = vadd.f32 %v1503, 1.0
  %v1692 = vadd.f32 %v1505, 1.0
  %v1693 = vadd.f32 %v1507, 1.0
  %v1694 = vadd.f32 %v1509, 1.0
  %v1695 = vadd.f32 %v1511, 1.0
  %v1696 = vadd.f32 %v1513, 1.0
  %v1697 = vadd.f32 %v1515, 1.0
  %v1698 = vadd.f32 %v1517, 1.0
  %v1699 = vadd.f32 %v1519, 1.0
  %v1700 = vadd.f32 %v1521, 1.0
  %v1701 = vadd.f32 %v1523, 1.0
  %v1702 = vadd.f32 %v1525, 1.0
  %v1703 = vadd.f32 %v1527, 1.0
  %v1704 = vadd.f32 %v1529, 1.0
  %v1705 = vadd.f32 %v1531, 1.0
  %v1706 = vadd.f32 %v1533, 1.0
  %v1707 = vadd.f32 %v1535, 1.0
  %v1708 = vadd.f32 %v1537, 1.0
  %v1709 = vadd.f32 %v1539, 1.0
  %v1710 = vadd.f32 %v1541, 1.0
  %v1711 = vadd.f32 %v1543, 1.0
  %v1712 = vadd.f32 %v1545, 1.0
  %v1713 = vadd.f32 %v1547, 1.0
  %v1714 = vadd.f32 %v1549, 1.0
  %v1715 = vadd.f32 %v1551, 1.0
  %v1716 = vadd.f32 %v1553, 1.0
  %v1717 = vadd.f32 %v1555, 1.0
  %v1718 = vadd.f32 %v1557, 1.0
  %v1719 = vadd.f32 %v1559, 1.0
  %v1720 = vadd.f32 %v1561, 1.0
  %v1721 = vadd.f32 %v1563, 1.0
  %v1722 = vadd.f32 %v1565, 1.0
  %v1723 = vadd.f32 %v1567, 1.0
  %v1724 = vadd.f32 %v1569, 1.0
  %v1725 = vadd.f32 %v1571, 1.0
  %v1726 = vadd.f32 %v1573, 1.0
  %v1727 = vadd.f32 %v1575, 1.0
  %v1728 = vadd.f32 %v1577, 1.0
  %v1729 = vadd.f32 %v1579, 1.0
  %v1730 = vadd.f32 %v1581, 1.0
  %v1731 = vadd.f32 %v1583, 1.0
  %v1732 = vadd.f32 %v1585, 1.0
  %v1733 = vadd.f32 %v1587, 1.0
  %v1734 = vadd.f32 %v1589, 1.0
  %v1735 = vadd.f32 %v1591, 1.0
  %v1736 = vadd.f32 %v1593, 1.0
  %v1737 = vadd.f32 %v1595, 1.0
  %v1738 = vadd.f32 %v1597, 1.0
  %v1739 = vadd.f32 %v1599, 1.0
  %v1740 = vadd.f32 %v1601, 1.0
  %v1741 = vadd.f32 %v1603, 1.0
  %v1742 = vadd.f32 %v1605, 1.0
  %v1743 = vadd.f32 %v1607, 1.0
  %v1744 = vadd.f32 %v1609, 1.0
  %v1745 = vadd.f32 %v1611, 1.0
  %v1746 = vadd.f32 %v1613, 1.0
  %v1747 = vadd.f32 %v1615, 1.0
  %v1748 = vadd.f32 %v1617, 1.0
  %v1749 = vadd.f32 %v1619, 1.0
  %v1750 = vadd.f32 %v1621, 1.0
  %v1751 = vadd.f32 %v1623, 1.0
  %v1752 = vrcp.pop %v1624
  %v1753 = vmul.f32 1.0, %v1752
  %v1754 = vrcp.pop %v1625
  %v1755 = vmul.f32 1.0, %v1754
  %v1756 = vrcp.pop %v1626
  %v1757 = vmul.f32 1.0, %v1756
  %v1758 = vrcp.pop %v1627
  %v1759 = vmul.f32 1.0, %v1758
  %v1760 = vrcp.pop %v1628
  %v1761 = vmul.f32 1.0, %v1760
  %v1762 = vrcp.pop %v1629
  %v1763 = vmul.f32 1.0, %v1762
  %v1764 = vrcp.pop %v1630
  %v1765 = vmul.f32 1.0, %v1764
  %v1766 = vrcp.pop %v1631
  %v1767 = vmul.f32 1.0, %v1766
  %v1768 = vrcp.pop %v1632
  %v1769 = vmul.f32 1.0, %v1768
  %v1770 = vrcp.pop %v1633
  %v1771 = vmul.f32 1.0, %v1770
  %v1772 = vrcp.pop %v1634
  %v1773 = vmul.f32 1.0, %v1772
  %v1774 = vrcp.pop %v1635
  %v1775 = vmul.f32 1.0, %v1774
  %v1776 = vrcp.pop %v1636
  %v1777 = vmul.f32 1.0, %v1776
  %v1778 = vrcp.pop %v1637
  %v1779 = vmul.f32 1.0, %v1778
  %v1780 = vrcp.pop %v1638
  %v1781 = vmul.f32 1.0, %v1780
  %v1782 = vrcp.pop %v1639
  %v1783 = vmul.f32 1.0, %v1782
  %v1784 = vrcp.pop %v1640
  %v1785 = vmul.f32 1.0, %v1784
  %v1786 = vrcp.pop %v1641
  %v1787 = vmul.f32 1.0, %v1786
  %v1788 = vrcp.pop %v1642
  %v1789 = vmul.f32 1.0, %v1788
  %v1790 = vrcp.pop %v1643
  %v1791 = vmul.f32 1.0, %v1790
  %v1792 = vrcp.pop %v1644
  %v1793 = vmul.f32 1.0, %v1792
  %v1794 = vrcp.pop %v1645
  %v1795 = vmul.f32 1.0, %v1794
  %v1796 = vrcp.pop %v1646
  %v1797 = vmul.f32 1.0, %v1796
  %v1798 = vrcp.pop %v1647
  %v1799 = vmul.f32 1.0, %v1798
  %v1800 = vrcp.pop %v1648
  %v1801 = vmul.f32 1.0, %v1800
  %v1802 = vrcp.pop %v1649
  %v1803 = vmul.f32 1.0, %v1802
  %v1804 = vrcp.pop %v1650
  %v1805 = vmul.f32 1.0, %v1804
  %v1806 = vrcp.pop %v1651
  %v1807 = vmul.f32 1.0, %v1806
  %v1808 = vrcp.pop %v1652
  %v1809 = vmul.f32 1.0, %v1808
  %v1810 = vrcp.pop %v1653
  %v1811 = vmul.f32 1.0, %v1810
  %v1812 = vrcp.pop %v1654
  %v1813 = vmul.f32 1.0, %v1812
  %v1814 = vrcp.pop %v1655
  %v1815 = vmul.f32 1.0, %v1814
  %v1816 = vrcp.pop %v1656
  %v1817 = vmul.f32 1.0, %v1816
  %v1818 = vrcp.pop %v1657
  %v1819 = vmul.f32 1.0, %v1818
  %v1820 = vrcp.pop %v1658
  %v1821 = vmul.f32 1.0, %v1820
  %v1822 = vrcp.pop %v1659
  %v1823 = vmul.f32 1.0, %v1822
  %v1824 = vrcp.pop %v1660
  %v1825 = vmul.f32 1.0, %v1824
  %v1826 = vrcp.pop %v1661
  %v1827 = vmul.f32 1.0, %v1826
  %v1828 = vrcp.pop %v1662
  %v1829 = vmul.f32 1.0, %v1828
  %v1830 = vrcp.pop %v1663
  %v1831 = vmul.f32 1.0, %v1830
  %v1832 = vrcp.pop %v1664
  %v1833 = vmul.f32 1.0, %v1832
  %v1834 = vrcp.pop %v1665
  %v1835 = vmul.f32 1.0, %v1834
  %v1836 = vrcp.pop %v1666
  %v1837 = vmul.f32 1.0, %v1836
  %v1838 = vrcp.pop %v1667
  %v1839 = vmul.f32 1.0, %v1838
  %v1840 = vrcp.pop %v1668
  %v1841 = vmul.f32 1.0, %v1840
  %v1842 = vrcp.pop %v1669
  %v1843 = vmul.f32 1.0, %v1842
  %v1844 = vrcp.pop %v1670
  %v1845 = vmul.f32 1.0, %v1844
  %v1846 = vrcp.pop %v1671
  %v1847 = vmul.f32 1.0, %v1846
  %v1848 = vrcp.pop %v1672
  %v1849 = vmul.f32 1.0, %v1848
  %v1850 = vrcp.pop %v1673
  %v1851 = vmul.f32 1.0, %v1850
  %v1852 = vrcp.pop %v1674
  %v1853 = vmul.f32 1.0, %v1852
  %v1854 = vrcp.pop %v1675
  %v1855 = vmul.f32 1.0, %v1854
  %v1856 = vrcp.pop %v1676
  %v1857 = vmul.f32 1.0, %v1856
  %v1858 = vrcp.pop %v1677
  %v1859 = vmul.f32 1.0, %v1858
  %v1860 = vrcp.pop %v1678
  %v1861 = vmul.f32 1.0, %v1860
  %v1862 = vrcp.pop %v1679
  %v1863 = vmul.f32 1.0, %v1862
  %v1864 = vrcp.pop %v1680
  %v1865 = vmul.f32 1.0, %v1864
  %v1866 = vrcp.pop %v1681
  %v1867 = vmul.f32 1.0, %v1866
  %v1868 = vrcp.pop %v1682
  %v1869 = vmul.f32 1.0, %v1868
  %v1870 = vrcp.pop %v1683
  %v1871 = vmul.f32 1.0, %v1870
  %v1872 = vrcp.pop %v1684
  %v1873 = vmul.f32 1.0, %v1872
  %v1874 = vrcp.pop %v1685
  %v1875 = vmul.f32 1.0, %v1874
  %v1876 = vrcp.pop %v1686
  %v1877 = vmul.f32 1.0, %v1876
  %v1878 = vrcp.pop %v1687
  %v1879 = vmul.f32 1.0, %v1878
  %v1880 = vrcp.pop %v1688
  %v1881 = vmul.f32 1.0, %v1880
  %v1882 = vrcp.pop %v1689
  %v1883 = vmul.f32 1.0, %v1882
  %v1884 = vrcp.pop %v1690
  %v1885 = vmul.f32 1.0, %v1884
  %v1886 = vrcp.pop %v1691
  %v1887 = vmul.f32 1.0, %v1886
  %v1888 = vrcp.pop %v1692
  %v1889 = vmul.f32 1.0, %v1888
  %v1890 = vrcp.pop %v1693
  %v1891 = vmul.f32 1.0, %v1890
  %v1892 = vrcp.pop %v1694
  %v1893 = vmul.f32 1.0, %v1892
  %v1894 = vrcp.pop %v1695
  %v1895 = vmul.f32 1.0, %v1894
  %v1896 = vrcp.pop %v1696
  %v1897 = vmul.f32 1.0, %v1896
  %v1898 = vrcp.pop %v1697
  %v1899 = vmul.f32 1.0, %v1898
  %v1900 = vrcp.pop %v1698
  %v1901 = vmul.f32 1.0, %v1900
  %v1902 = vrcp.pop %v1699
  %v1903 = vmul.f32 1.0, %v1902
  %v1904 = vrcp.pop %v1700
  %v1905 = vmul.f32 1.0, %v1904
  %v1906 = vrcp.pop %v1701
  %v1907 = vmul.f32 1.0, %v1906
  %v1908 = vrcp.pop %v1702
  %v1909 = vmul.f32 1.0, %v1908
  %v1910 = vrcp.pop %v1703
  %v1911 = vmul.f32 1.0, %v1910
  %v1912 = vrcp.pop %v1704
  %v1913 = vmul.f32 1.0, %v1912
  %v1914 = vrcp.pop %v1705
  %v1915 = vmul.f32 1.0, %v1914
  %v1916 = vrcp.pop %v1706
  %v1917 = vmul.f32 1.0, %v1916
  %v1918 = vrcp.pop %v1707
  %v1919 = vmul.f32 1.0, %v1918
  %v1920 = vrcp.pop %v1708
  %v1921 = vmul.f32 1.0, %v1920
  %v1922 = vrcp.pop %v1709
  %v1923 = vmul.f32 1.0, %v1922
  %v1924 = vrcp.pop %v1710
  %v1925 = vmul.f32 1.0, %v1924
  %v1926 = vrcp.pop %v1711
  %v1927 = vmul.f32 1.0, %v1926
  %v1928 = vrcp.pop %v1712
  %v1929 = vmul.f32 1.0, %v1928
  %v1930 = vrcp.pop %v1713
  %v1931 = vmul.f32 1.0, %v1930
  %v1932 = vrcp.pop %v1714
  %v1933 = vmul.f32 1.0, %v1932
  %v1934 = vrcp.pop %v1715
  %v1935 = vmul.f32 1.0, %v1934
  %v1936 = vrcp.pop %v1716
  %v1937 = vmul.f32 1.0, %v1936
  %v1938 = vrcp.pop %v1717
  %v1939 = vmul.f32 1.0, %v1938
  %v1940 = vrcp.pop %v1718
  %v1941 = vmul.f32 1.0, %v1940
  %v1942 = vrcp.pop %v1719
  %v1943 = vmul.f32 1.0, %v1942
  %v1944 = vrcp.pop %v1720
  %v1945 = vmul.f32 1.0, %v1944
  %v1946 = vrcp.pop %v1721
  %v1947 = vmul.f32 1.0, %v1946
  %v1948 = vrcp.pop %v1722
  %v1949 = vmul.f32 1.0, %v1948
  %v1950 = vrcp.pop %v1723
  %v1951 = vmul.f32 1.0, %v1950
  %v1952 = vrcp.pop %v1724
  %v1953 = vmul.f32 1.0, %v1952
  %v1954 = vrcp.pop %v1725
  %v1955 = vmul.f32 1.0, %v1954
  %v1956 = vrcp.pop %v1726
  %v1957 = vmul.f32 1.0, %v1956
  %v1958 = vrcp.pop %v1727
  %v1959 = vmul.f32 1.0, %v1958
  %v1960 = vrcp.pop %v1728
  %v1961 = vmul.f32 1.0, %v1960
  %v1962 = vrcp.pop %v1729
  %v1963 = vmul.f32 1.0, %v1962
  %v1964 = vrcp.pop %v1730
  %v1965 = vmul.f32 1.0, %v1964
  %v1966 = vrcp.pop %v1731
  %v1967 = vmul.f32 1.0, %v1966
  %v1968 = vrcp.pop %v1732
  %v1969 = vmul.f32 1.0, %v1968
  %v1970 = vrcp.pop %v1733
  %v1971 = vmul.f32 1.0, %v1970
  %v1972 = vrcp.pop %v1734
  %v1973 = vmul.f32 1.0, %v1972
  %v1974 = vrcp.pop %v1735
  %v1975 = vmul.f32 1.0, %v1974
  %v1976 = vrcp.pop %v1736
  %v1977 = vmul.f32 1.0, %v1976
  %v1978 = vrcp.pop %v1737
  %v1979 = vmul.f32 1.0, %v1978
  %v1980 = vrcp.pop %v1738
  %v1981 = vmul.f32 1.0, %v1980
  %v1982 = vrcp.pop %v1739
  %v1983 = vmul.f32 1.0, %v1982
  %v1984 = vrcp.pop %v1740
  %v1985 = vmul.f32 1.0, %v1984
  %v1986 = vrcp.pop %v1741
  %v1987 = vmul.f32 1.0, %v1986
  %v1988 = vrcp.pop %v1742
  %v1989 = vmul.f32 1.0, %v1988
  %v1990 = vrcp.pop %v1743
  %v1991 = vmul.f32 1.0, %v1990
  %v1992 = vrcp.pop %v1744
  %v1993 = vmul.f32 1.0, %v1992
  %v1994 = vrcp.pop %v1745
  %v1995 = vmul.f32 1.0, %v1994
  %v1996 = vrcp.pop %v1746
  %v1997 = vmul.f32 1.0, %v1996
  %v1998 = vrcp.pop %v1747
  %v1999 = vmul.f32 1.0, %v1998
  %v2000 = vrcp.pop %v1748
  %v2001 = vmul.f32 1.0, %v2000
  %v2002 = vrcp.pop %v1749
  %v2003 = vmul.f32 1.0, %v2002
  %v2004 = vrcp.pop %v1750
  %v2005 = vmul.f32 1.0, %v2004
  %v2006 = vrcp.pop %v1751
  %v2007 = vmul.f32 1.0, %v2006
  %v2008 = vmul.f32 %v730, %v1753
  %v2009 = vmul.f32 %v733, %v1755
  %v2010 = vmul.f32 %v738, %v1757
  %v2011 = vmul.f32 %v741, %v1759
  %v2012 = vmul.f32 %v746, %v1761
  %v2013 = vmul.f32 %v749, %v1763
  %v2014 = vmul.f32 %v754, %v1765
  %v2015 = vmul.f32 %v757, %v1767
  %v2016 = vmul.f32 %v762, %v1769
  %v2017 = vmul.f32 %v765, %v1771
  %v2018 = vmul.f32 %v770, %v1773
  %v2019 = vmul.f32 %v773, %v1775
  %v2020 = vmul.f32 %v778, %v1777
  %v2021 = vmul.f32 %v781, %v1779
  %v2022 = vmul.f32 %v786, %v1781
  %v2023 = vmul.f32 %v789, %v1783
  %v2024 = vmul.f32 %v794, %v1785
  %v2025 = vmul.f32 %v797, %v1787
  %v2026 = vmul.f32 %v802, %v1789
  %v2027 = vmul.f32 %v805, %v1791
  %v2028 = vmul.f32 %v810, %v1793
  %v2029 = vmul.f32 %v813, %v1795
  %v2030 = vmul.f32 %v818, %v1797
  %v2031 = vmul.f32 %v821, %v1799
  %v2032 = vmul.f32 %v826, %v1801
  %v2033 = vmul.f32 %v829, %v1803
  %v2034 = vmul.f32 %v834, %v1805
  %v2035 = vmul.f32 %v837, %v1807
  %v2036 = vmul.f32 %v842, %v1809
  %v2037 = vmul.f32 %v845, %v1811
  %v2038 = vmul.f32 %v850, %v1813
  %v2039 = vmul.f32 %v853, %v1815
  %v2040 = vmul.f32 %v858, %v1817
  %v2041 = vmul.f32 %v861, %v1819
  %v2042 = vmul.f32 %v866, %v1821
  %v2043 = vmul.f32 %v869, %v1823
  %v2044 = vmul.f32 %v874, %v1825
  %v2045 = vmul.f32 %v877, %v1827
  %v2046 = vmul.f32 %v882, %v1829
  %v2047 = vmul.f32 %v885, %v1831
  %v2048 = vmul.f32 %v890, %v1833
  %v2049 = vmul.f32 %v893, %v1835
  %v2050 = vmul.f32 %v898, %v1837
  %v2051 = vmul.f32 %v901, %v1839
  %v2052 = vmul.f32 %v906, %v1841
  %v2053 = vmul.f32 %v909, %v1843
  %v2054 = vmul.f32 %v914, %v1845
  %v2055 = vmul.f32 %v917, %v1847
  %v2056 = vmul.f32 %v922, %v1849
  %v2057 = vmul.f32 %v925, %v1851
  %v2058 = vmul.f32 %v930, %v1853
  %v2059 = vmul.f32 %v933, %v1855
  %v2060 = vmul.f32 %v938, %v1857
  %v2061 = vmul.f32 %v941, %v1859
  %v2062 = vmul.f32 %v946, %v1861
  %v2063 = vmul.f32 %v949, %v1863
  %v2064 = vmul.f32 %v954, %v1865
  %v2065 = vmul.f32 %v957, %v1867
  %v2066 = vmul.f32 %v962, %v1869
  %v2067 = vmul.f32 %v965, %v1871
  %v2068 = vmul.f32 %v970, %v1873
  %v2069 = vmul.f32 %v973, %v1875
  %v2070 = vmul.f32 %v978, %v1877
  %v2071 = vmul.f32 %v981, %v1879
  %v2072 = vmul.f32 %v986, %v1881
  %v2073 = vmul.f32 %v989, %v1883
  %v2074 = vmul.f32 %v994, %v1885
  %v2075 = vmul.f32 %v997, %v1887
  %v2076 = vmul.f32 %v1002, %v1889
  %v2077 = vmul.f32 %v1005, %v1891
  %v2078 = vmul.f32 %v1010, %v1893
  %v2079 = vmul.f32 %v1013, %v1895
  %v2080 = vmul.f32 %v1018, %v1897
  %v2081 = vmul.f32 %v1021, %v1899
  %v2082 = vmul.f32 %v1026, %v1901
  %v2083 = vmul.f32 %v1029, %v1903
  %v2084 = vmul.f32 %v1034, %v1905
  %v2085 = vmul.f32 %v1037, %v1907
  %v2086 = vmul.f32 %v1042, %v1909
  %v2087 = vmul.f32 %v1045, %v1911
  %v2088 = vmul.f32 %v1050, %v1913
  %v2089 = vmul.f32 %v1053, %v1915
  %v2090 = vmul.f32 %v1058, %v1917
  %v2091 = vmul.f32 %v1061, %v1919
  %v2092 = vmul.f32 %v1066, %v1921
  %v2093 = vmul.f32 %v1069, %v1923
  %v2094 = vmul.f32 %v1074, %v1925
  %v2095 = vmul.f32 %v1077, %v1927
  %v2096 = vmul.f32 %v1082, %v1929
  %v2097 = vmul.f32 %v1085, %v1931
  %v2098 = vmul.f32 %v1090, %v1933
  %v2099 = vmul.f32 %v1093, %v1935
  %v2100 = vmul.f32 %v1098, %v1937
  %v2101 = vmul.f32 %v1101, %v1939
  %v2102 = vmul.f32 %v1106, %v1941
  %v2103 = vmul.f32 %v1109, %v1943
  %v2104 = vmul.f32 %v1114, %v1945
  %v2105 = vmul.f32 %v1117, %v1947
  %v2106 = vmul.f32 %v1122, %v1949
  %v2107 = vmul.f32 %v1125, %v1951
  %v2108 = vmul.f32 %v1130, %v1953
  %v2109 = vmul.f32 %v1133, %v1955
  %v2110 = vmul.f32 %v1138, %v1957
  %v2111 = vmul.f32 %v1141, %v1959
  %v2112 = vmul.f32 %v1146, %v1961
  %v2113 = vmul.f32 %v1149, %v1963
  %v2114 = vmul.f32 %v1154, %v1965
  %v2115 = vmul.f32 %v1157, %v1967
  %v2116 = vmul.f32 %v1162, %v1969
  %v2117 = vmul.f32 %v1165, %v1971
  %v2118 = vmul.f32 %v1170, %v1973
  %v2119 = vmul.f32 %v1173, %v1975
  %v2120 = vmul.f32 %v1178, %v1977
  %v2121 = vmul.f32 %v1181, %v1979
  %v2122 = vmul.f32 %v1186, %v1981
  %v2123 = vmul.f32 %v1189, %v1983
  %v2124 = vmul.f32 %v1194, %v1985
  %v2125 = vmul.f32 %v1197, %v1987
  %v2126 = vmul.f32 %v1202, %v1989
  %v2127 = vmul.f32 %v1205, %v1991
  %v2128 = vmul.f32 %v1210, %v1993
  %v2129 = vmul.f32 %v1213, %v1995
  %v2130 = vmul.f32 %v1218, %v1997
  %v2131 = vmul.f32 %v1221, %v1999
  %v2132 = vmul.f32 %v1226, %v2001
  %v2133 = vmul.f32 %v1229, %v2003
  %v2134 = vmul.f32 %v1234, %v2005
  %v2135 = vmul.f32 %v1237, %v2007
  %v2136 = vpack.c.bf16 %v2009, %v2008
  %v2137 = vpack.c.bf16 %v2011, %v2010
  %v2138 = vpack.c.bf16 %v2013, %v2012
  %v2139 = vpack.c.bf16 %v2015, %v2014
  %v2140 = vpack.c.bf16 %v2017, %v2016
  %v2141 = vpack.c.bf16 %v2019, %v2018
  %v2142 = vpack.c.bf16 %v2021, %v2020
  %v2143 = vpack.c.bf16 %v2023, %v2022
  %v2144 = vpack.c.bf16 %v2025, %v2024
  %v2145 = vpack.c.bf16 %v2027, %v2026
  %v2146 = vpack.c.bf16 %v2029, %v2028
  %v2147 = vpack.c.bf16 %v2031, %v2030
  %v2148 = vpack.c.bf16 %v2033, %v2032
  %v2149 = vpack.c.bf16 %v2035, %v2034
  %v2150 = vpack.c.bf16 %v2037, %v2036
  %v2151 = vpack.c.bf16 %v2039, %v2038
  %v2152 = vpack.c.bf16 %v2041, %v2040
  %v2153 = vpack.c.bf16 %v2043, %v2042
  %v2154 = vpack.c.bf16 %v2045, %v2044
  %v2155 = vpack.c.bf16 %v2047, %v2046
  %v2156 = vpack.c.bf16 %v2049, %v2048
  %v2157 = vpack.c.bf16 %v2051, %v2050
  %v2158 = vpack.c.bf16 %v2053, %v2052
  %v2159 = vpack.c.bf16 %v2055, %v2054
  %v2160 = vpack.c.bf16 %v2057, %v2056
  %v2161 = vpack.c.bf16 %v2059, %v2058
  %v2162 = vpack.c.bf16 %v2061, %v2060
  %v2163 = vpack.c.bf16 %v2063, %v2062
  %v2164 = vpack.c.bf16 %v2065, %v2064
  %v2165 = vpack.c.bf16 %v2067, %v2066
  %v2166 = vpack.c.bf16 %v2069, %v2068
  %v2167 = vpack.c.bf16 %v2071, %v2070
  %v2168 = vpack.c.bf16 %v2073, %v2072
  %v2169 = vpack.c.bf16 %v2075, %v2074
  %v2170 = vpack.c.bf16 %v2077, %v2076
  %v2171 = vpack.c.bf16 %v2079, %v2078
  %v2172 = vpack.c.bf16 %v2081, %v2080
  %v2173 = vpack.c.bf16 %v2083, %v2082
  %v2174 = vpack.c.bf16 %v2085, %v2084
  %v2175 = vpack.c.bf16 %v2087, %v2086
  %v2176 = vpack.c.bf16 %v2089, %v2088
  %v2177 = vpack.c.bf16 %v2091, %v2090
  %v2178 = vpack.c.bf16 %v2093, %v2092
  %v2179 = vpack.c.bf16 %v2095, %v2094
  %v2180 = vpack.c.bf16 %v2097, %v2096
  %v2181 = vpack.c.bf16 %v2099, %v2098
  %v2182 = vpack.c.bf16 %v2101, %v2100
  %v2183 = vpack.c.bf16 %v2103, %v2102
  %v2184 = vpack.c.bf16 %v2105, %v2104
  %v2185 = vpack.c.bf16 %v2107, %v2106
  %v2186 = vpack.c.bf16 %v2109, %v2108
  %v2187 = vpack.c.bf16 %v2111, %v2110
  %v2188 = vpack.c.bf16 %v2113, %v2112
  %v2189 = vpack.c.bf16 %v2115, %v2114
  %v2190 = vpack.c.bf16 %v2117, %v2116
  %v2191 = vpack.c.bf16 %v2119, %v2118
  %v2192 = vpack.c.bf16 %v2121, %v2120
  %v2193 = vpack.c.bf16 %v2123, %v2122
  %v2194 = vpack.c.bf16 %v2125, %v2124
  %v2195 = vpack.c.bf16 %v2127, %v2126
  %v2196 = vpack.c.bf16 %v2129, %v2128
  %v2197 = vpack.c.bf16 %v2131, %v2130
  %v2198 = vpack.c.bf16 %v2133, %v2132
  %v2199 = vpack.c.bf16 %v2135, %v2134
  %v2200 = vld [vmem:[%s2] sm:$0xf]
  %v2201 = vld [vmem:[%s2 + $0x4] sm:$0xf]
  %v2202 = vlaneseq
  %v2203 = vshrl.u32 %v2202, 7
  %v2204 = vsub.s32 1, %v2203
  %v2205 = vrot.slane %v27, %v2204
  %v2208 = vunpack.c.l.b16 %v2200
  %v2209 = vunpack.c.l.b16 %v2201
  %v2210 = vpack.c.b16 %v2209, %v2208
  %vm2212 = vcmask 130048
  %v2214 = vsel %vm2212, %v2136, 0
  %v2217 = vsel %vm2212, %v2137, 0
  %v2220 = vsel %vm2212, %v2138, 0
  %v2223 = vsel %vm2212, %v2139, 0
  %v2226 = vsel %vm2212, %v2140, 0
  %v2229 = vsel %vm2212, %v2141, 0
  %v2232 = vsel %vm2212, %v2142, 0
  %v2235 = vsel %vm2212, %v2143, 0
  %v2238 = vsel %vm2212, %v2144, 0
  %v2241 = vsel %vm2212, %v2145, 0
  %v2244 = vsel %vm2212, %v2146, 0
  %v2247 = vsel %vm2212, %v2147, 0
  %v2250 = vsel %vm2212, %v2148, 0
  %v2253 = vsel %vm2212, %v2149, 0
  %v2256 = vsel %vm2212, %v2150, 0
  %v2259 = vsel %vm2212, %v2151, 0
  %v2262 = vsel %vm2212, %v2152, 0
  %v2265 = vsel %vm2212, %v2153, 0
  %v2268 = vsel %vm2212, %v2154, 0
  %v2271 = vsel %vm2212, %v2155, 0
  %v2274 = vsel %vm2212, %v2156, 0
  %v2277 = vsel %vm2212, %v2157, 0
  %v2280 = vsel %vm2212, %v2158, 0
  %v2283 = vsel %vm2212, %v2159, 0
  %v2286 = vsel %vm2212, %v2160, 0
  %v2289 = vsel %vm2212, %v2161, 0
  %v2292 = vsel %vm2212, %v2162, 0
  %v2295 = vsel %vm2212, %v2163, 0
  %v2298 = vsel %vm2212, %v2164, 0
  %v2301 = vsel %vm2212, %v2165, 0
  %v2304 = vsel %vm2212, %v2166, 0
  %v2307 = vsel %vm2212, %v2167, 0
  %v2310 = vsel %vm2212, %v2168, 0
  %v2313 = vsel %vm2212, %v2169, 0
  %v2316 = vsel %vm2212, %v2170, 0
  %v2319 = vsel %vm2212, %v2171, 0
  %v2322 = vsel %vm2212, %v2172, 0
  %v2325 = vsel %vm2212, %v2173, 0
  %v2328 = vsel %vm2212, %v2174, 0
  %v2331 = vsel %vm2212, %v2175, 0
  %v2334 = vsel %vm2212, %v2176, 0
  %v2337 = vsel %vm2212, %v2177, 0
  %v2340 = vsel %vm2212, %v2178, 0
  %v2343 = vsel %vm2212, %v2179, 0
  %v2346 = vsel %vm2212, %v2180, 0
  %v2349 = vsel %vm2212, %v2181, 0
  %v2352 = vsel %vm2212, %v2182, 0
  %v2355 = vsel %vm2212, %v2183, 0
  %v2358 = vsel %vm2212, %v2184, 0
  %v2361 = vsel %vm2212, %v2185, 0
  %v2364 = vsel %vm2212, %v2186, 0
  %v2367 = vsel %vm2212, %v2187, 0
  %v2370 = vsel %vm2212, %v2188, 0
  %v2373 = vsel %vm2212, %v2189, 0
  %v2376 = vsel %vm2212, %v2190, 0
  %v2379 = vsel %vm2212, %v2191, 0
  %v2382 = vsel %vm2212, %v2192, 0
  %v2385 = vsel %vm2212, %v2193, 0
  %v2388 = vsel %vm2212, %v2194, 0
  %v2391 = vsel %vm2212, %v2195, 0
  %v2394 = vsel %vm2212, %v2196, 0
  %v2397 = vsel %vm2212, %v2197, 0
  %v2400 = vsel %vm2212, %v2198, 0
  %v2403 = vsel %vm2212, %v2199, 0
  %2405 = vmatprep.subr.bf16.mxu0 0
  %2406 = vmatpush1.bf16.msra.mxu0 %v2210
  %2407 = vmatprep.subr.bf16.mxu0 0
  %2408 = vmatpush1.bf16.msra.mxu0 0
  %2409 = vmatprep.subr.bf16.mxu0 0
  %2410 = vmatpush1.bf16.msra.mxu0 0
  %2411 = vmatprep.subr.bf16.mxu0 0
  %2412 = vmatpush1.bf16.msra.mxu0 0
  %2413 = vmatprep.subr.bf16.mxu0 0
  %2414 = vmatpush1.bf16.msra.mxu0 0
  %2415 = vmatprep.subr.bf16.mxu0 0
  %2416 = vmatpush1.bf16.msra.mxu0 0
  %2417 = vmatprep.subr.bf16.mxu0 0
  %2418 = vmatpush1.bf16.msra.mxu0 0
  %2419 = vmatprep.subr.bf16.mxu0 0
  %2420 = vmatpush1.bf16.msra.mxu0 0
  %2421 = vmatprep.subr.bf16.mxu0 0
  %2422 = vmatpush1.bf16.msra.mxu0 0
  %2423 = vmatprep.subr.bf16.mxu0 0
  %2424 = vmatpush1.bf16.msra.mxu0 0
  %2425 = vmatprep.subr.bf16.mxu0 0
  %2426 = vmatpush1.bf16.msra.mxu0 0
  %2427 = vmatprep.subr.bf16.mxu0 0
  %2428 = vmatpush1.bf16.msra.mxu0 0
  %2429 = vmatprep.subr.bf16.mxu0 0
  %2430 = vmatpush1.bf16.msra.mxu0 0
  %2431 = vmatprep.subr.bf16.mxu0 0
  %2432 = vmatpush1.bf16.msra.mxu0 0
  %2433 = vmatprep.subr.bf16.mxu0 0
  %2434 = vmatpush1.bf16.msra.mxu0 0
  %2435 = vmatprep.subr.bf16.mxu0 0
  %2436 = vmatpush1.bf16.msra.mxu0 0
  %2437 = vmatprep.mubr.bf16.mxu0 0
  %2438 = vmatmul.mubr.bf16.gmra.mrb[0].mxu0 %v2214
  %v2439 = vpop.f32.mrb[0].mxu0
  %v2440 = vadd.f32 %v2205, %v2439
  %v2441 = vpop.f32.mrb[0].mxu0
  %v2442 = vpop.f32.mrb[0].mxu0
  %v2443 = vadd.f32 %v2205, %v2442
  %v2444 = vpop.f32.mrb[0].mxu0
  %2445 = vmatprep.mubr.bf16.mxu0 0
  %2446 = vmatmul.mubr.bf16.gmra.mrb[0].mxu0 %v2217
  %v2447 = vpop.f32.mrb[0].mxu0
  %v2448 = vadd.f32 %v2205, %v2447
  %v2449 = vpop.f32.mrb[0].mxu0
  %v2450 = vpop.f32.mrb[0].mxu0
  %v2451 = vadd.f32 %v2205, %v2450
  %v2452 = vpop.f32.mrb[0].mxu0
  %2453 = vmatprep.mubr.bf16.mxu0 0
  %2454 = vmatmul.mubr.bf16.gmra.mrb[0].mxu0 %v2220
  %v2455 = vpop.f32.mrb[0].mxu0
  %v2456 = vadd.f32 %v2205, %v2455
  %v2457 = vpop.f32.mrb[0].mxu0
  %v2458 = vpop.f32.mrb[0].mxu0
  %v2459 = vadd.f32 %v2205, %v2458
  %v2460 = vpop.f32.mrb[0].mxu0
  %2461 = vmatprep.mubr.bf16.mxu0 0
  %2462 = vmatmul.mubr.bf16.gmra.mrb[0].mxu0 %v2223
  %v2463 = vpop.f32.mrb[0].mxu0
  %v2464 = vadd.f32 %v2205, %v2463
  %v2465 = vpop.f32.mrb[0].mxu0
  %v2466 = vpop.f32.mrb[0].mxu0
  %v2467 = vadd.f32 %v2205, %v2466
  %v2468 = vpop.f32.mrb[0].mxu0
  %2469 = vmatprep.mubr.bf16.mxu0 0
  %2470 = vmatmul.mubr.bf16.gmra.mrb[0].mxu0 %v2226
  %v2471 = vpop.f32.mrb[0].mxu0
  %v2472 = vadd.f32 %v2205, %v2471
  %v2473 = vpop.f32.mrb[0].mxu0
  %v2474 = vpop.f32.mrb[0].mxu0
  %v2475 = vadd.f32 %v2205, %v2474
  %v2476 = vpop.f32.mrb[0].mxu0
  %2477 = vmatprep.mubr.bf16.mxu0 0
  %2478 = vmatmul.mubr.bf16.gmra.mrb[0].mxu0 %v2229
  %v2479 = vpop.f32.mrb[0].mxu0
  %v2480 = vadd.f32 %v2205, %v2479
  %v2481 = vpop.f32.mrb[0].mxu0
  %v2482 = vpop.f32.mrb[0].mxu0
  %v2483 = vadd.f32 %v2205, %v2482
  %v2484 = vpop.f32.mrb[0].mxu0
  %2485 = vmatprep.mubr.bf16.mxu0 0
  %2486 = vmatmul.mubr.bf16.gmra.mrb[0].mxu0 %v2232
  %v2487 = vpop.f32.mrb[0].mxu0
  %v2488 = vadd.f32 %v2205, %v2487
  %v2489 = vpop.f32.mrb[0].mxu0
  %v2490 = vpop.f32.mrb[0].mxu0
  %v2491 = vadd.f32 %v2205, %v2490
  %v2492 = vpop.f32.mrb[0].mxu0
  %2493 = vmatprep.mubr.bf16.mxu0 0
  %2494 = vmatmul.mubr.bf16.gmra.mrb[0].mxu0 %v2235
  %v2495 = vpop.f32.mrb[0].mxu0
  %v2496 = vadd.f32 %v2205, %v2495
  %v2497 = vpop.f32.mrb[0].mxu0
  %v2498 = vpop.f32.mrb[0].mxu0
  %v2499 = vadd.f32 %v2205, %v2498
  %v2500 = vpop.f32.mrb[0].mxu0
  %2501 = vmatprep.mubr.bf16.mxu0 0
  %2502 = vmatmul.mubr.bf16.gmra.mrb[0].mxu0 %v2238
  %v2503 = vpop.f32.mrb[0].mxu0
  %v2504 = vadd.f32 %v2205, %v2503
  %v2505 = vpop.f32.mrb[0].mxu0
  %v2506 = vpop.f32.mrb[0].mxu0
  %v2507 = vadd.f32 %v2205, %v2506
  %v2508 = vpop.f32.mrb[0].mxu0
  %2509 = vmatprep.mubr.bf16.mxu0 0
  %2510 = vmatmul.mubr.bf16.gmra.mrb[0].mxu0 %v2241
  %v2511 = vpop.f32.mrb[0].mxu0
  %v2512 = vadd.f32 %v2205, %v2511
  %v2513 = vpop.f32.mrb[0].mxu0
  %v2514 = vpop.f32.mrb[0].mxu0
  %v2515 = vadd.f32 %v2205, %v2514
  %v2516 = vpop.f32.mrb[0].mxu0
  %2517 = vmatprep.mubr.bf16.mxu0 0
  %2518 = vmatmul.mubr.bf16.gmra.mrb[0].mxu0 %v2244
  %v2519 = vpop.f32.mrb[0].mxu0
  %v2520 = vadd.f32 %v2205, %v2519
  %v2521 = vpop.f32.mrb[0].mxu0
  %v2522 = vpop.f32.mrb[0].mxu0
  %v2523 = vadd.f32 %v2205, %v2522
  %v2524 = vpop.f32.mrb[0].mxu0
  %2525 = vmatprep.mubr.bf16.mxu0 0
  %2526 = vmatmul.mubr.bf16.gmra.mrb[0].mxu0 %v2247
  %v2527 = vpop.f32.mrb[0].mxu0
  %v2528 = vadd.f32 %v2205, %v2527
  %v2529 = vpop.f32.mrb[0].mxu0
  %v2530 = vpop.f32.mrb[0].mxu0
  %v2531 = vadd.f32 %v2205, %v2530
  %v2532 = vpop.f32.mrb[0].mxu0
  %2533 = vmatprep.mubr.bf16.mxu0 0
  %2534 = vmatmul.mubr.bf16.gmra.mrb[0].mxu0 %v2250
  %v2535 = vpop.f32.mrb[0].mxu0
  %v2536 = vadd.f32 %v2205, %v2535
  %v2537 = vpop.f32.mrb[0].mxu0
  %v2538 = vpop.f32.mrb[0].mxu0
  %v2539 = vadd.f32 %v2205, %v2538
  %v2540 = vpop.f32.mrb[0].mxu0
  %2541 = vmatprep.mubr.bf16.mxu0 0
  %2542 = vmatmul.mubr.bf16.gmra.mrb[0].mxu0 %v2253
  %v2543 = vpop.f32.mrb[0].mxu0
  %v2544 = vadd.f32 %v2205, %v2543
  %v2545 = vpop.f32.mrb[0].mxu0
  %v2546 = vpop.f32.mrb[0].mxu0
  %v2547 = vadd.f32 %v2205, %v2546
  %v2548 = vpop.f32.mrb[0].mxu0
  %2549 = vmatprep.mubr.bf16.mxu0 0
  %2550 = vmatmul.mubr.bf16.gmra.mrb[0].mxu0 %v2256
  %v2551 = vpop.f32.mrb[0].mxu0
  %v2552 = vadd.f32 %v2205, %v2551
  %v2553 = vpop.f32.mrb[0].mxu0
  %v2554 = vpop.f32.mrb[0].mxu0
  %v2555 = vadd.f32 %v2205, %v2554
  %v2556 = vpop.f32.mrb[0].mxu0
  %2557 = vmatprep.mubr.bf16.mxu0 0
  %2558 = vmatmul.mubr.bf16.gmra.mrb[0].mxu0 %v2259
  %v2559 = vpop.f32.mrb[0].mxu0
  %v2560 = vadd.f32 %v2205, %v2559
  %v2561 = vpop.f32.mrb[0].mxu0
  %v2562 = vpop.f32.mrb[0].mxu0
  %v2563 = vadd.f32 %v2205, %v2562
  %v2564 = vpop.f32.mrb[0].mxu0
  %2565 = vmatprep.mubr.bf16.mxu0 0
  %2566 = vmatmul.mubr.bf16.gmra.mrb[0].mxu0 %v2262
  %v2567 = vpop.f32.mrb[0].mxu0
  %v2568 = vadd.f32 %v2205, %v2567
  %v2569 = vpop.f32.mrb[0].mxu0
  %v2570 = vpop.f32.mrb[0].mxu0
  %v2571 = vadd.f32 %v2205, %v2570
  %v2572 = vpop.f32.mrb[0].mxu0
  %2573 = vmatprep.mubr.bf16.mxu0 0
  %2574 = vmatmul.mubr.bf16.gmra.mrb[0].mxu0 %v2265
  %v2575 = vpop.f32.mrb[0].mxu0
  %v2576 = vadd.f32 %v2205, %v2575
  %v2577 = vpop.f32.mrb[0].mxu0
  %v2578 = vpop.f32.mrb[0].mxu0
  %v2579 = vadd.f32 %v2205, %v2578
  %v2580 = vpop.f32.mrb[0].mxu0
  %2581 = vmatprep.mubr.bf16.mxu0 0
  %2582 = vmatmul.mubr.bf16.gmra.mrb[0].mxu0 %v2268
  %v2583 = vpop.f32.mrb[0].mxu0
  %v2584 = vadd.f32 %v2205, %v2583
  %v2585 = vpop.f32.mrb[0].mxu0
  %v2586 = vpop.f32.mrb[0].mxu0
  %v2587 = vadd.f32 %v2205, %v2586
  %v2588 = vpop.f32.mrb[0].mxu0
  %2589 = vmatprep.mubr.bf16.mxu0 0
  %2590 = vmatmul.mubr.bf16.gmra.mrb[0].mxu0 %v2271
  %v2591 = vpop.f32.mrb[0].mxu0
  %v2592 = vadd.f32 %v2205, %v2591
  %v2593 = vpop.f32.mrb[0].mxu0
  %v2594 = vpop.f32.mrb[0].mxu0
  %v2595 = vadd.f32 %v2205, %v2594
  %v2596 = vpop.f32.mrb[0].mxu0
  %2597 = vmatprep.mubr.bf16.mxu0 0
  %2598 = vmatmul.mubr.bf16.gmra.mrb[0].mxu0 %v2274
  %v2599 = vpop.f32.mrb[0].mxu0
  %v2600 = vadd.f32 %v2205, %v2599
  %v2601 = vpop.f32.mrb[0].mxu0
  %v2602 = vpop.f32.mrb[0].mxu0
  %v2603 = vadd.f32 %v2205, %v2602
  %v2604 = vpop.f32.mrb[0].mxu0
  %2605 = vmatprep.mubr.bf16.mxu0 0
  %2606 = vmatmul.mubr.bf16.gmra.mrb[0].mxu0 %v2277
  %v2607 = vpop.f32.mrb[0].mxu0
  %v2608 = vadd.f32 %v2205, %v2607
  %v2609 = vpop.f32.mrb[0].mxu0
  %v2610 = vpop.f32.mrb[0].mxu0
  %v2611 = vadd.f32 %v2205, %v2610
  %v2612 = vpop.f32.mrb[0].mxu0
  %2613 = vmatprep.mubr.bf16.mxu0 0
  %2614 = vmatmul.mubr.bf16.gmra.mrb[0].mxu0 %v2280
  %v2615 = vpop.f32.mrb[0].mxu0
  %v2616 = vadd.f32 %v2205, %v2615
  %v2617 = vpop.f32.mrb[0].mxu0
  %v2618 = vpop.f32.mrb[0].mxu0
  %v2619 = vadd.f32 %v2205, %v2618
  %v2620 = vpop.f32.mrb[0].mxu0
  %2621 = vmatprep.mubr.bf16.mxu0 0
  %2622 = vmatmul.mubr.bf16.gmra.mrb[0].mxu0 %v2283
  %v2623 = vpop.f32.mrb[0].mxu0
  %v2624 = vadd.f32 %v2205, %v2623
  %v2625 = vpop.f32.mrb[0].mxu0
  %v2626 = vpop.f32.mrb[0].mxu0
  %v2627 = vadd.f32 %v2205, %v2626
  %v2628 = vpop.f32.mrb[0].mxu0
  %2629 = vmatprep.mubr.bf16.mxu0 0
  %2630 = vmatmul.mubr.bf16.gmra.mrb[0].mxu0 %v2286
  %v2631 = vpop.f32.mrb[0].mxu0
  %v2632 = vadd.f32 %v2205, %v2631
  %v2633 = vpop.f32.mrb[0].mxu0
  %v2634 = vpop.f32.mrb[0].mxu0
  %v2635 = vadd.f32 %v2205, %v2634
  %v2636 = vpop.f32.mrb[0].mxu0
  %2637 = vmatprep.mubr.bf16.mxu0 0
  %2638 = vmatmul.mubr.bf16.gmra.mrb[0].mxu0 %v2289
  %v2639 = vpop.f32.mrb[0].mxu0
  %v2640 = vadd.f32 %v2205, %v2639
  %v2641 = vpop.f32.mrb[0].mxu0
  %v2642 = vpop.f32.mrb[0].mxu0
  %v2643 = vadd.f32 %v2205, %v2642
  %v2644 = vpop.f32.mrb[0].mxu0
  %2645 = vmatprep.mubr.bf16.mxu0 0
  %2646 = vmatmul.mubr.bf16.gmra.mrb[0].mxu0 %v2292
  %v2647 = vpop.f32.mrb[0].mxu0
  %v2648 = vadd.f32 %v2205, %v2647
  %v2649 = vpop.f32.mrb[0].mxu0
  %v2650 = vpop.f32.mrb[0].mxu0
  %v2651 = vadd.f32 %v2205, %v2650
  %v2652 = vpop.f32.mrb[0].mxu0
  %2653 = vmatprep.mubr.bf16.mxu0 0
  %2654 = vmatmul.mubr.bf16.gmra.mrb[0].mxu0 %v2295
  %v2655 = vpop.f32.mrb[0].mxu0
  %v2656 = vadd.f32 %v2205, %v2655
  %v2657 = vpop.f32.mrb[0].mxu0
  %v2658 = vpop.f32.mrb[0].mxu0
  %v2659 = vadd.f32 %v2205, %v2658
  %v2660 = vpop.f32.mrb[0].mxu0
  %2661 = vmatprep.mubr.bf16.mxu0 0
  %2662 = vmatmul.mubr.bf16.gmra.mrb[0].mxu0 %v2298
  %v2663 = vpop.f32.mrb[0].mxu0
  %v2664 = vadd.f32 %v2205, %v2663
  %v2665 = vpop.f32.mrb[0].mxu0
  %v2666 = vpop.f32.mrb[0].mxu0
  %v2667 = vadd.f32 %v2205, %v2666
  %v2668 = vpop.f32.mrb[0].mxu0
  %2669 = vmatprep.mubr.bf16.mxu0 0
  %2670 = vmatmul.mubr.bf16.gmra.mrb[0].mxu0 %v2301
  %v2671 = vpop.f32.mrb[0].mxu0
  %v2672 = vadd.f32 %v2205, %v2671
  %v2673 = vpop.f32.mrb[0].mxu0
  %v2674 = vpop.f32.mrb[0].mxu0
  %v2675 = vadd.f32 %v2205, %v2674
  %v2676 = vpop.f32.mrb[0].mxu0
  %2677 = vmatprep.mubr.bf16.mxu0 0
  %2678 = vmatmul.mubr.bf16.gmra.mrb[0].mxu0 %v2304
  %v2679 = vpop.f32.mrb[0].mxu0
  %v2680 = vadd.f32 %v2205, %v2679
  %v2681 = vpop.f32.mrb[0].mxu0
  %v2682 = vpop.f32.mrb[0].mxu0
  %v2683 = vadd.f32 %v2205, %v2682
  %v2684 = vpop.f32.mrb[0].mxu0
  %2685 = vmatprep.mubr.bf16.mxu0 0
  %2686 = vmatmul.mubr.bf16.gmra.mrb[0].mxu0 %v2307
  %v2687 = vpop.f32.mrb[0].mxu0
  %v2688 = vadd.f32 %v2205, %v2687
  %v2689 = vpop.f32.mrb[0].mxu0
  %v2690 = vpop.f32.mrb[0].mxu0
  %v2691 = vadd.f32 %v2205, %v2690
  %v2692 = vpop.f32.mrb[0].mxu0
  %2693 = vmatprep.mubr.bf16.mxu0 0
  %2694 = vmatmul.mubr.bf16.gmra.mrb[0].mxu0 %v2310
  %v2695 = vpop.f32.mrb[0].mxu0
  %v2696 = vadd.f32 %v2205, %v2695
  %v2697 = vpop.f32.mrb[0].mxu0
  %v2698 = vpop.f32.mrb[0].mxu0
  %v2699 = vadd.f32 %v2205, %v2698
  %v2700 = vpop.f32.mrb[0].mxu0
  %2701 = vmatprep.mubr.bf16.mxu0 0
  %2702 = vmatmul.mubr.bf16.gmra.mrb[0].mxu0 %v2313
  %v2703 = vpop.f32.mrb[0].mxu0
  %v2704 = vadd.f32 %v2205, %v2703
  %v2705 = vpop.f32.mrb[0].mxu0
  %v2706 = vpop.f32.mrb[0].mxu0
  %v2707 = vadd.f32 %v2205, %v2706
  %v2708 = vpop.f32.mrb[0].mxu0
  %2709 = vmatprep.mubr.bf16.mxu0 0
  %2710 = vmatmul.mubr.bf16.gmra.mrb[0].mxu0 %v2316
  %v2711 = vpop.f32.mrb[0].mxu0
  %v2712 = vadd.f32 %v2205, %v2711
  %v2713 = vpop.f32.mrb[0].mxu0
  %v2714 = vpop.f32.mrb[0].mxu0
  %v2715 = vadd.f32 %v2205, %v2714
  %v2716 = vpop.f32.mrb[0].mxu0
  %2717 = vmatprep.mubr.bf16.mxu0 0
  %2718 = vmatmul.mubr.bf16.gmra.mrb[0].mxu0 %v2319
  %v2719 = vpop.f32.mrb[0].mxu0
  %v2720 = vadd.f32 %v2205, %v2719
  %v2721 = vpop.f32.mrb[0].mxu0
  %v2722 = vpop.f32.mrb[0].mxu0
  %v2723 = vadd.f32 %v2205, %v2722
  %v2724 = vpop.f32.mrb[0].mxu0
  %2725 = vmatprep.mubr.bf16.mxu0 0
  %2726 = vmatmul.mubr.bf16.gmra.mrb[0].mxu0 %v2322
  %v2727 = vpop.f32.mrb[0].mxu0
  %v2728 = vadd.f32 %v2205, %v2727
  %v2729 = vpop.f32.mrb[0].mxu0
  %v2730 = vpop.f32.mrb[0].mxu0
  %v2731 = vadd.f32 %v2205, %v2730
  %v2732 = vpop.f32.mrb[0].mxu0
  %2733 = vmatprep.mubr.bf16.mxu0 0
  %2734 = vmatmul.mubr.bf16.gmra.mrb[0].mxu0 %v2325
  %v2735 = vpop.f32.mrb[0].mxu0
  %v2736 = vadd.f32 %v2205, %v2735
  %v2737 = vpop.f32.mrb[0].mxu0
  %v2738 = vpop.f32.mrb[0].mxu0
  %v2739 = vadd.f32 %v2205, %v2738
  %v2740 = vpop.f32.mrb[0].mxu0
  %2741 = vmatprep.mubr.bf16.mxu0 0
  %2742 = vmatmul.mubr.bf16.gmra.mrb[0].mxu0 %v2328
  %v2743 = vpop.f32.mrb[0].mxu0
  %v2744 = vadd.f32 %v2205, %v2743
  %v2745 = vpop.f32.mrb[0].mxu0
  %v2746 = vpop.f32.mrb[0].mxu0
  %v2747 = vadd.f32 %v2205, %v2746
  %v2748 = vpop.f32.mrb[0].mxu0
  %2749 = vmatprep.mubr.bf16.mxu0 0
  %2750 = vmatmul.mubr.bf16.gmra.mrb[0].mxu0 %v2331
  %v2751 = vpop.f32.mrb[0].mxu0
  %v2752 = vadd.f32 %v2205, %v2751
  %v2753 = vpop.f32.mrb[0].mxu0
  %v2754 = vpop.f32.mrb[0].mxu0
  %v2755 = vadd.f32 %v2205, %v2754
  %v2756 = vpop.f32.mrb[0].mxu0
  %2757 = vmatprep.mubr.bf16.mxu0 0
  %2758 = vmatmul.mubr.bf16.gmra.mrb[0].mxu0 %v2334
  %v2759 = vpop.f32.mrb[0].mxu0
  %v2760 = vadd.f32 %v2205, %v2759
  %v2761 = vpop.f32.mrb[0].mxu0
  %v2762 = vpop.f32.mrb[0].mxu0
  %v2763 = vadd.f32 %v2205, %v2762
  %v2764 = vpop.f32.mrb[0].mxu0
  %2765 = vmatprep.mubr.bf16.mxu0 0
  %2766 = vmatmul.mubr.bf16.gmra.mrb[0].mxu0 %v2337
  %v2767 = vpop.f32.mrb[0].mxu0
  %v2768 = vadd.f32 %v2205, %v2767
  %v2769 = vpop.f32.mrb[0].mxu0
  %v2770 = vpop.f32.mrb[0].mxu0
  %v2771 = vadd.f32 %v2205, %v2770
  %v2772 = vpop.f32.mrb[0].mxu0
  %2773 = vmatprep.mubr.bf16.mxu0 0
  %2774 = vmatmul.mubr.bf16.gmra.mrb[0].mxu0 %v2340
  %v2775 = vpop.f32.mrb[0].mxu0
  %v2776 = vadd.f32 %v2205, %v2775
  %v2777 = vpop.f32.mrb[0].mxu0
  %v2778 = vpop.f32.mrb[0].mxu0
  %v2779 = vadd.f32 %v2205, %v2778
  %v2780 = vpop.f32.mrb[0].mxu0
  %2781 = vmatprep.mubr.bf16.mxu0 0
  %2782 = vmatmul.mubr.bf16.gmra.mrb[0].mxu0 %v2343
  %v2783 = vpop.f32.mrb[0].mxu0
  %v2784 = vadd.f32 %v2205, %v2783
  %v2785 = vpop.f32.mrb[0].mxu0
  %v2786 = vpop.f32.mrb[0].mxu0
  %v2787 = vadd.f32 %v2205, %v2786
  %v2788 = vpop.f32.mrb[0].mxu0
  %2789 = vmatprep.mubr.bf16.mxu0 0
  %2790 = vmatmul.mubr.bf16.gmra.mrb[0].mxu0 %v2346
  %v2791 = vpop.f32.mrb[0].mxu0
  %v2792 = vadd.f32 %v2205, %v2791
  %v2793 = vpop.f32.mrb[0].mxu0
  %v2794 = vpop.f32.mrb[0].mxu0
  %v2795 = vadd.f32 %v2205, %v2794
  %v2796 = vpop.f32.mrb[0].mxu0
  %2797 = vmatprep.mubr.bf16.mxu0 0
  %2798 = vmatmul.mubr.bf16.gmra.mrb[0].mxu0 %v2349
  %v2799 = vpop.f32.mrb[0].mxu0
  %v2800 = vadd.f32 %v2205, %v2799
  %v2801 = vpop.f32.mrb[0].mxu0
  %v2802 = vpop.f32.mrb[0].mxu0
  %v2803 = vadd.f32 %v2205, %v2802
  %v2804 = vpop.f32.mrb[0].mxu0
  %2805 = vmatprep.mubr.bf16.mxu0 0
  %2806 = vmatmul.mubr.bf16.gmra.mrb[0].mxu0 %v2352
  %v2807 = vpop.f32.mrb[0].mxu0
  %v2808 = vadd.f32 %v2205, %v2807
  %v2809 = vpop.f32.mrb[0].mxu0
  %v2810 = vpop.f32.mrb[0].mxu0
  %v2811 = vadd.f32 %v2205, %v2810
  %v2812 = vpop.f32.mrb[0].mxu0
  %2813 = vmatprep.mubr.bf16.mxu0 0
  %2814 = vmatmul.mubr.bf16.gmra.mrb[0].mxu0 %v2355
  %v2815 = vpop.f32.mrb[0].mxu0
  %v2816 = vadd.f32 %v2205, %v2815
  %v2817 = vpop.f32.mrb[0].mxu0
  %v2818 = vpop.f32.mrb[0].mxu0
  %v2819 = vadd.f32 %v2205, %v2818
  %v2820 = vpop.f32.mrb[0].mxu0
  %2821 = vmatprep.mubr.bf16.mxu0 0
  %2822 = vmatmul.mubr.bf16.gmra.mrb[0].mxu0 %v2358
  %v2823 = vpop.f32.mrb[0].mxu0
  %v2824 = vadd.f32 %v2205, %v2823
  %v2825 = vpop.f32.mrb[0].mxu0
  %v2826 = vpop.f32.mrb[0].mxu0
  %v2827 = vadd.f32 %v2205, %v2826
  %v2828 = vpop.f32.mrb[0].mxu0
  %2829 = vmatprep.mubr.bf16.mxu0 0
  %2830 = vmatmul.mubr.bf16.gmra.mrb[0].mxu0 %v2361
  %v2831 = vpop.f32.mrb[0].mxu0
  %v2832 = vadd.f32 %v2205, %v2831
  %v2833 = vpop.f32.mrb[0].mxu0
  %v2834 = vpop.f32.mrb[0].mxu0
  %v2835 = vadd.f32 %v2205, %v2834
  %v2836 = vpop.f32.mrb[0].mxu0
  %2837 = vmatprep.mubr.bf16.mxu0 0
  %2838 = vmatmul.mubr.bf16.gmra.mrb[0].mxu0 %v2364
  %v2839 = vpop.f32.mrb[0].mxu0
  %v2840 = vadd.f32 %v2205, %v2839
  %v2841 = vpop.f32.mrb[0].mxu0
  %v2842 = vpop.f32.mrb[0].mxu0
  %v2843 = vadd.f32 %v2205, %v2842
  %v2844 = vpop.f32.mrb[0].mxu0
  %2845 = vmatprep.mubr.bf16.mxu0 0
  %2846 = vmatmul.mubr.bf16.gmra.mrb[0].mxu0 %v2367
  %v2847 = vpop.f32.mrb[0].mxu0
  %v2848 = vadd.f32 %v2205, %v2847
  %v2849 = vpop.f32.mrb[0].mxu0
  %v2850 = vpop.f32.mrb[0].mxu0
  %v2851 = vadd.f32 %v2205, %v2850
  %v2852 = vpop.f32.mrb[0].mxu0
  %2853 = vmatprep.mubr.bf16.mxu0 0
  %2854 = vmatmul.mubr.bf16.gmra.mrb[0].mxu0 %v2370
  %v2855 = vpop.f32.mrb[0].mxu0
  %v2856 = vadd.f32 %v2205, %v2855
  %v2857 = vpop.f32.mrb[0].mxu0
  %v2858 = vpop.f32.mrb[0].mxu0
  %v2859 = vadd.f32 %v2205, %v2858
  %v2860 = vpop.f32.mrb[0].mxu0
  %2861 = vmatprep.mubr.bf16.mxu0 0
  %2862 = vmatmul.mubr.bf16.gmra.mrb[0].mxu0 %v2373
  %v2863 = vpop.f32.mrb[0].mxu0
  %v2864 = vadd.f32 %v2205, %v2863
  %v2865 = vpop.f32.mrb[0].mxu0
  %v2866 = vpop.f32.mrb[0].mxu0
  %v2867 = vadd.f32 %v2205, %v2866
  %v2868 = vpop.f32.mrb[0].mxu0
  %2869 = vmatprep.mubr.bf16.mxu0 0
  %2870 = vmatmul.mubr.bf16.gmra.mrb[0].mxu0 %v2376
  %v2871 = vpop.f32.mrb[0].mxu0
  %v2872 = vadd.f32 %v2205, %v2871
  %v2873 = vpop.f32.mrb[0].mxu0
  %v2874 = vpop.f32.mrb[0].mxu0
  %v2875 = vadd.f32 %v2205, %v2874
  %v2876 = vpop.f32.mrb[0].mxu0
  %2877 = vmatprep.mubr.bf16.mxu0 0
  %2878 = vmatmul.mubr.bf16.gmra.mrb[0].mxu0 %v2379
  %v2879 = vpop.f32.mrb[0].mxu0
  %v2880 = vadd.f32 %v2205, %v2879
  %v2881 = vpop.f32.mrb[0].mxu0
  %v2882 = vpop.f32.mrb[0].mxu0
  %v2883 = vadd.f32 %v2205, %v2882
  %v2884 = vpop.f32.mrb[0].mxu0
  %2885 = vmatprep.mubr.bf16.mxu0 0
  %2886 = vmatmul.mubr.bf16.gmra.mrb[0].mxu0 %v2382
  %v2887 = vpop.f32.mrb[0].mxu0
  %v2888 = vadd.f32 %v2205, %v2887
  %v2889 = vpop.f32.mrb[0].mxu0
  %v2890 = vpop.f32.mrb[0].mxu0
  %v2891 = vadd.f32 %v2205, %v2890
  %v2892 = vpop.f32.mrb[0].mxu0
  %2893 = vmatprep.mubr.bf16.mxu0 0
  %2894 = vmatmul.mubr.bf16.gmra.mrb[0].mxu0 %v2385
  %v2895 = vpop.f32.mrb[0].mxu0
  %v2896 = vadd.f32 %v2205, %v2895
  %v2897 = vpop.f32.mrb[0].mxu0
  %v2898 = vpop.f32.mrb[0].mxu0
  %v2899 = vadd.f32 %v2205, %v2898
  %v2900 = vpop.f32.mrb[0].mxu0
  %2901 = vmatprep.mubr.bf16.mxu0 0
  %2902 = vmatmul.mubr.bf16.gmra.mrb[0].mxu0 %v2388
  %v2903 = vpop.f32.mrb[0].mxu0
  %v2904 = vadd.f32 %v2205, %v2903
  %v2905 = vpop.f32.mrb[0].mxu0
  %v2906 = vpop.f32.mrb[0].mxu0
  %v2907 = vadd.f32 %v2205, %v2906
  %v2908 = vpop.f32.mrb[0].mxu0
  %2909 = vmatprep.mubr.bf16.mxu0 0
  %2910 = vmatmul.mubr.bf16.gmra.mrb[0].mxu0 %v2391
  %v2911 = vpop.f32.mrb[0].mxu0
  %v2912 = vadd.f32 %v2205, %v2911
  %v2913 = vpop.f32.mrb[0].mxu0
  %v2914 = vpop.f32.mrb[0].mxu0
  %v2915 = vadd.f32 %v2205, %v2914
  %v2916 = vpop.f32.mrb[0].mxu0
  %2917 = vmatprep.mubr.bf16.mxu0 0
  %2918 = vmatmul.mubr.bf16.gmra.mrb[0].mxu0 %v2394
  %v2919 = vpop.f32.mrb[0].mxu0
  %v2920 = vadd.f32 %v2205, %v2919
  %v2921 = vpop.f32.mrb[0].mxu0
  %v2922 = vpop.f32.mrb[0].mxu0
  %v2923 = vadd.f32 %v2205, %v2922
  %v2924 = vpop.f32.mrb[0].mxu0
  %2925 = vmatprep.mubr.bf16.mxu0 0
  %2926 = vmatmul.mubr.bf16.gmra.mrb[0].mxu0 %v2397
  %v2927 = vpop.f32.mrb[0].mxu0
  %v2928 = vadd.f32 %v2205, %v2927
  %v2929 = vpop.f32.mrb[0].mxu0
  %v2930 = vpop.f32.mrb[0].mxu0
  %v2931 = vadd.f32 %v2205, %v2930
  %v2932 = vpop.f32.mrb[0].mxu0
  %2933 = vmatprep.mubr.bf16.mxu0 0
  %2934 = vmatmul.mubr.bf16.gmra.mrb[0].mxu0 %v2400
  %v2935 = vpop.f32.mrb[0].mxu0
  %v2936 = vadd.f32 %v2205, %v2935
  %v2937 = vpop.f32.mrb[0].mxu0
  %v2938 = vpop.f32.mrb[0].mxu0
  %v2939 = vadd.f32 %v2205, %v2938
  %v2940 = vpop.f32.mrb[0].mxu0
  %2941 = vmatprep.mubr.bf16.mxu0 0
  %2942 = vmatmul.mubr.bf16.gmra.mrb[0].mxu0 %v2403
  %v2943 = vpop.f32.mrb[0].mxu0
  %v2944 = vadd.f32 %v2205, %v2943
  %v2945 = vpop.f32.mrb[0].mxu0
  %v2946 = vpop.f32.mrb[0].mxu0
  %v2947 = vadd.f32 %v2205, %v2946
  %v2948 = vpop.f32.mrb[0].mxu0
  %2949 = vdwg.mxu0
  %v2950 = vxor.u32 %v2440, 2147483648
  %v2951 = vxor.u32 %v2443, 2147483648
  %v2952 = vxor.u32 %v2448, 2147483648
  %v2953 = vxor.u32 %v2451, 2147483648
  %v2954 = vxor.u32 %v2456, 2147483648
  %v2955 = vxor.u32 %v2459, 2147483648
  %v2956 = vxor.u32 %v2464, 2147483648
  %v2957 = vxor.u32 %v2467, 2147483648
  %v2958 = vxor.u32 %v2472, 2147483648
  %v2959 = vxor.u32 %v2475, 2147483648
  %v2960 = vxor.u32 %v2480, 2147483648
  %v2961 = vxor.u32 %v2483, 2147483648
  %v2962 = vxor.u32 %v2488, 2147483648
  %v2963 = vxor.u32 %v2491, 2147483648
  %v2964 = vxor.u32 %v2496, 2147483648
  %v2965 = vxor.u32 %v2499, 2147483648
  %v2966 = vxor.u32 %v2504, 2147483648
  %v2967 = vxor.u32 %v2507, 2147483648
  %v2968 = vxor.u32 %v2512, 2147483648
  %v2969 = vxor.u32 %v2515, 2147483648
  %v2970 = vxor.u32 %v2520, 2147483648
  %v2971 = vxor.u32 %v2523, 2147483648
  %v2972 = vxor.u32 %v2528, 2147483648
  %v2973 = vxor.u32 %v2531, 2147483648
  %v2974 = vxor.u32 %v2536, 2147483648
  %v2975 = vxor.u32 %v2539, 2147483648
  %v2976 = vxor.u32 %v2544, 2147483648
  %v2977 = vxor.u32 %v2547, 2147483648
  %v2978 = vxor.u32 %v2552, 2147483648
  %v2979 = vxor.u32 %v2555, 2147483648
  %v2980 = vxor.u32 %v2560, 2147483648
  %v2981 = vxor.u32 %v2563, 2147483648
  %v2982 = vxor.u32 %v2568, 2147483648
  %v2983 = vxor.u32 %v2571, 2147483648
  %v2984 = vxor.u32 %v2576, 2147483648
  %v2985 = vxor.u32 %v2579, 2147483648
  %v2986 = vxor.u32 %v2584, 2147483648
  %v2987 = vxor.u32 %v2587, 2147483648
  %v2988 = vxor.u32 %v2592, 2147483648
  %v2989 = vxor.u32 %v2595, 2147483648
  %v2990 = vxor.u32 %v2600, 2147483648
  %v2991 = vxor.u32 %v2603, 2147483648
  %v2992 = vxor.u32 %v2608, 2147483648
  %v2993 = vxor.u32 %v2611, 2147483648
  %v2994 = vxor.u32 %v2616, 2147483648
  %v2995 = vxor.u32 %v2619, 2147483648
  %v2996 = vxor.u32 %v2624, 2147483648
  %v2997 = vxor.u32 %v2627, 2147483648
  %v2998 = vxor.u32 %v2632, 2147483648
  %v2999 = vxor.u32 %v2635, 2147483648
  %v3000 = vxor.u32 %v2640, 2147483648
  %v3001 = vxor.u32 %v2643, 2147483648
  %v3002 = vxor.u32 %v2648, 2147483648
  %v3003 = vxor.u32 %v2651, 2147483648
  %v3004 = vxor.u32 %v2656, 2147483648
  %v3005 = vxor.u32 %v2659, 2147483648
  %v3006 = vxor.u32 %v2664, 2147483648
  %v3007 = vxor.u32 %v2667, 2147483648
  %v3008 = vxor.u32 %v2672, 2147483648
  %v3009 = vxor.u32 %v2675, 2147483648
  %v3010 = vxor.u32 %v2680, 2147483648
  %v3011 = vxor.u32 %v2683, 2147483648
  %v3012 = vxor.u32 %v2688, 2147483648
  %v3013 = vxor.u32 %v2691, 2147483648
  %v3014 = vxor.u32 %v2696, 2147483648
  %v3015 = vxor.u32 %v2699, 2147483648
  %v3016 = vxor.u32 %v2704, 2147483648
  %v3017 = vxor.u32 %v2707, 2147483648
  %v3018 = vxor.u32 %v2712, 2147483648
  %v3019 = vxor.u32 %v2715, 2147483648
  %v3020 = vxor.u32 %v2720, 2147483648
  %v3021 = vxor.u32 %v2723, 2147483648
  %v3022 = vxor.u32 %v2728, 2147483648
  %v3023 = vxor.u32 %v2731, 2147483648
  %v3024 = vxor.u32 %v2736, 2147483648
  %v3025 = vxor.u32 %v2739, 2147483648
  %v3026 = vxor.u32 %v2744, 2147483648
  %v3027 = vxor.u32 %v2747, 2147483648
  %v3028 = vxor.u32 %v2752, 2147483648
  %v3029 = vxor.u32 %v2755, 2147483648
  %v3030 = vxor.u32 %v2760, 2147483648
  %v3031 = vxor.u32 %v2763, 2147483648
  %v3032 = vxor.u32 %v2768, 2147483648
  %v3033 = vxor.u32 %v2771, 2147483648
  %v3034 = vxor.u32 %v2776, 2147483648
  %v3035 = vxor.u32 %v2779, 2147483648
  %v3036 = vxor.u32 %v2784, 2147483648
  %v3037 = vxor.u32 %v2787, 2147483648
  %v3038 = vxor.u32 %v2792, 2147483648
  %v3039 = vxor.u32 %v2795, 2147483648
  %v3040 = vxor.u32 %v2800, 2147483648
  %v3041 = vxor.u32 %v2803, 2147483648
  %v3042 = vxor.u32 %v2808, 2147483648
  %v3043 = vxor.u32 %v2811, 2147483648
  %v3044 = vxor.u32 %v2816, 2147483648
  %v3045 = vxor.u32 %v2819, 2147483648
  %v3046 = vxor.u32 %v2824, 2147483648
  %v3047 = vxor.u32 %v2827, 2147483648
  %v3048 = vxor.u32 %v2832, 2147483648
  %v3049 = vxor.u32 %v2835, 2147483648
  %v3050 = vxor.u32 %v2840, 2147483648
  %v3051 = vxor.u32 %v2843, 2147483648
  %v3052 = vxor.u32 %v2848, 2147483648
  %v3053 = vxor.u32 %v2851, 2147483648
  %v3054 = vxor.u32 %v2856, 2147483648
  %v3055 = vxor.u32 %v2859, 2147483648
  %v3056 = vxor.u32 %v2864, 2147483648
  %v3057 = vxor.u32 %v2867, 2147483648
  %v3058 = vxor.u32 %v2872, 2147483648
  %v3059 = vxor.u32 %v2875, 2147483648
  %v3060 = vxor.u32 %v2880, 2147483648
  %v3061 = vxor.u32 %v2883, 2147483648
  %v3062 = vxor.u32 %v2888, 2147483648
  %v3063 = vxor.u32 %v2891, 2147483648
  %v3064 = vxor.u32 %v2896, 2147483648
  %v3065 = vxor.u32 %v2899, 2147483648
  %v3066 = vxor.u32 %v2904, 2147483648
  %v3067 = vxor.u32 %v2907, 2147483648
  %v3068 = vxor.u32 %v2912, 2147483648
  %v3069 = vxor.u32 %v2915, 2147483648
  %v3070 = vxor.u32 %v2920, 2147483648
  %v3071 = vxor.u32 %v2923, 2147483648
  %v3072 = vxor.u32 %v2928, 2147483648
  %v3073 = vxor.u32 %v2931, 2147483648
  %v3074 = vxor.u32 %v2936, 2147483648
  %v3075 = vxor.u32 %v2939, 2147483648
  %v3076 = vxor.u32 %v2944, 2147483648
  %v3077 = vxor.u32 %v2947, 2147483648
  %v3078 = vmul.f32 %v2950, 1.442695
  %v3079 = vpow.pop %v3078
  %v3080 = vmul.f32 %v2951, 1.442695
  %v3081 = vpow.pop %v3080
  %v3082 = vmul.f32 %v2952, 1.442695
  %v3083 = vpow.pop %v3082
  %v3084 = vmul.f32 %v2953, 1.442695
  %v3085 = vpow.pop %v3084
  %v3086 = vmul.f32 %v2954, 1.442695
  %v3087 = vpow.pop %v3086
  %v3088 = vmul.f32 %v2955, 1.442695
  %v3089 = vpow.pop %v3088
  %v3090 = vmul.f32 %v2956, 1.442695
  %v3091 = vpow.pop %v3090
  %v3092 = vmul.f32 %v2957, 1.442695
  %v3093 = vpow.pop %v3092
  %v3094 = vmul.f32 %v2958, 1.442695
  %v3095 = vpow.pop %v3094
  %v3096 = vmul.f32 %v2959, 1.442695
  %v3097 = vpow.pop %v3096
  %v3098 = vmul.f32 %v2960, 1.442695
  %v3099 = vpow.pop %v3098
  %v3100 = vmul.f32 %v2961, 1.442695
  %v3101 = vpow.pop %v3100
  %v3102 = vmul.f32 %v2962, 1.442695
  %v3103 = vpow.pop %v3102
  %v3104 = vmul.f32 %v2963, 1.442695
  %v3105 = vpow.pop %v3104
  %v3106 = vmul.f32 %v2964, 1.442695
  %v3107 = vpow.pop %v3106
  %v3108 = vmul.f32 %v2965, 1.442695
  %v3109 = vpow.pop %v3108
  %v3110 = vmul.f32 %v2966, 1.442695
  %v3111 = vpow.pop %v3110
  %v3112 = vmul.f32 %v2967, 1.442695
  %v3113 = vpow.pop %v3112
  %v3114 = vmul.f32 %v2968, 1.442695
  %v3115 = vpow.pop %v3114
  %v3116 = vmul.f32 %v2969, 1.442695
  %v3117 = vpow.pop %v3116
  %v3118 = vmul.f32 %v2970, 1.442695
  %v3119 = vpow.pop %v3118
  %v3120 = vmul.f32 %v2971, 1.442695
  %v3121 = vpow.pop %v3120
  %v3122 = vmul.f32 %v2972, 1.442695
  %v3123 = vpow.pop %v3122
  %v3124 = vmul.f32 %v2973, 1.442695
  %v3125 = vpow.pop %v3124
  %v3126 = vmul.f32 %v2974, 1.442695
  %v3127 = vpow.pop %v3126
  %v3128 = vmul.f32 %v2975, 1.442695
  %v3129 = vpow.pop %v3128
  %v3130 = vmul.f32 %v2976, 1.442695
  %v3131 = vpow.pop %v3130
  %v3132 = vmul.f32 %v2977, 1.442695
  %v3133 = vpow.pop %v3132
  %v3134 = vmul.f32 %v2978, 1.442695
  %v3135 = vpow.pop %v3134
  %v3136 = vmul.f32 %v2979, 1.442695
  %v3137 = vpow.pop %v3136
  %v3138 = vmul.f32 %v2980, 1.442695
  %v3139 = vpow.pop %v3138
  %v3140 = vmul.f32 %v2981, 1.442695
  %v3141 = vpow.pop %v3140
  %v3142 = vmul.f32 %v2982, 1.442695
  %v3143 = vpow.pop %v3142
  %v3144 = vmul.f32 %v2983, 1.442695
  %v3145 = vpow.pop %v3144
  %v3146 = vmul.f32 %v2984, 1.442695
  %v3147 = vpow.pop %v3146
  %v3148 = vmul.f32 %v2985, 1.442695
  %v3149 = vpow.pop %v3148
  %v3150 = vmul.f32 %v2986, 1.442695
  %v3151 = vpow.pop %v3150
  %v3152 = vmul.f32 %v2987, 1.442695
  %v3153 = vpow.pop %v3152
  %v3154 = vmul.f32 %v2988, 1.442695
  %v3155 = vpow.pop %v3154
  %v3156 = vmul.f32 %v2989, 1.442695
  %v3157 = vpow.pop %v3156
  %v3158 = vmul.f32 %v2990, 1.442695
  %v3159 = vpow.pop %v3158
  %v3160 = vmul.f32 %v2991, 1.442695
  %v3161 = vpow.pop %v3160
  %v3162 = vmul.f32 %v2992, 1.442695
  %v3163 = vpow.pop %v3162
  %v3164 = vmul.f32 %v2993, 1.442695
  %v3165 = vpow.pop %v3164
  %v3166 = vmul.f32 %v2994, 1.442695
  %v3167 = vpow.pop %v3166
  %v3168 = vmul.f32 %v2995, 1.442695
  %v3169 = vpow.pop %v3168
  %v3170 = vmul.f32 %v2996, 1.442695
  %v3171 = vpow.pop %v3170
  %v3172 = vmul.f32 %v2997, 1.442695
  %v3173 = vpow.pop %v3172
  %v3174 = vmul.f32 %v2998, 1.442695
  %v3175 = vpow.pop %v3174
  %v3176 = vmul.f32 %v2999, 1.442695
  %v3177 = vpow.pop %v3176
  %v3178 = vmul.f32 %v3000, 1.442695
  %v3179 = vpow.pop %v3178
  %v3180 = vmul.f32 %v3001, 1.442695
  %v3181 = vpow.pop %v3180
  %v3182 = vmul.f32 %v3002, 1.442695
  %v3183 = vpow.pop %v3182
  %v3184 = vmul.f32 %v3003, 1.442695
  %v3185 = vpow.pop %v3184
  %v3186 = vmul.f32 %v3004, 1.442695
  %v3187 = vpow.pop %v3186
  %v3188 = vmul.f32 %v3005, 1.442695
  %v3189 = vpow.pop %v3188
  %v3190 = vmul.f32 %v3006, 1.442695
  %v3191 = vpow.pop %v3190
  %v3192 = vmul.f32 %v3007, 1.442695
  %v3193 = vpow.pop %v3192
  %v3194 = vmul.f32 %v3008, 1.442695
  %v3195 = vpow.pop %v3194
  %v3196 = vmul.f32 %v3009, 1.442695
  %v3197 = vpow.pop %v3196
  %v3198 = vmul.f32 %v3010, 1.442695
  %v3199 = vpow.pop %v3198
  %v3200 = vmul.f32 %v3011, 1.442695
  %v3201 = vpow.pop %v3200
  %v3202 = vmul.f32 %v3012, 1.442695
  %v3203 = vpow.pop %v3202
  %v3204 = vmul.f32 %v3013, 1.442695
  %v3205 = vpow.pop %v3204
  %v3206 = vmul.f32 %v3014, 1.442695
  %v3207 = vpow.pop %v3206
  %v3208 = vmul.f32 %v3015, 1.442695
  %v3209 = vpow.pop %v3208
  %v3210 = vmul.f32 %v3016, 1.442695
  %v3211 = vpow.pop %v3210
  %v3212 = vmul.f32 %v3017, 1.442695
  %v3213 = vpow.pop %v3212
  %v3214 = vmul.f32 %v3018, 1.442695
  %v3215 = vpow.pop %v3214
  %v3216 = vmul.f32 %v3019, 1.442695
  %v3217 = vpow.pop %v3216
  %v3218 = vmul.f32 %v3020, 1.442695
  %v3219 = vpow.pop %v3218
  %v3220 = vmul.f32 %v3021, 1.442695
  %v3221 = vpow.pop %v3220
  %v3222 = vmul.f32 %v3022, 1.442695
  %v3223 = vpow.pop %v3222
  %v3224 = vmul.f32 %v3023, 1.442695
  %v3225 = vpow.pop %v3224
  %v3226 = vmul.f32 %v3024, 1.442695
  %v3227 = vpow.pop %v3226
  %v3228 = vmul.f32 %v3025, 1.442695
  %v3229 = vpow.pop %v3228
  %v3230 = vmul.f32 %v3026, 1.442695
  %v3231 = vpow.pop %v3230
  %v3232 = vmul.f32 %v3027, 1.442695
  %v3233 = vpow.pop %v3232
  %v3234 = vmul.f32 %v3028, 1.442695
  %v3235 = vpow.pop %v3234
  %v3236 = vmul.f32 %v3029, 1.442695
  %v3237 = vpow.pop %v3236
  %v3238 = vmul.f32 %v3030, 1.442695
  %v3239 = vpow.pop %v3238
  %v3240 = vmul.f32 %v3031, 1.442695
  %v3241 = vpow.pop %v3240
  %v3242 = vmul.f32 %v3032, 1.442695
  %v3243 = vpow.pop %v3242
  %v3244 = vmul.f32 %v3033, 1.442695
  %v3245 = vpow.pop %v3244
  %v3246 = vmul.f32 %v3034, 1.442695
  %v3247 = vpow.pop %v3246
  %v3248 = vmul.f32 %v3035, 1.442695
  %v3249 = vpow.pop %v3248
  %v3250 = vmul.f32 %v3036, 1.442695
  %v3251 = vpow.pop %v3250
  %v3252 = vmul.f32 %v3037, 1.442695
  %v3253 = vpow.pop %v3252
  %v3254 = vmul.f32 %v3038, 1.442695
  %v3255 = vpow.pop %v3254
  %v3256 = vmul.f32 %v3039, 1.442695
  %v3257 = vpow.pop %v3256
  %v3258 = vmul.f32 %v3040, 1.442695
  %v3259 = vpow.pop %v3258
  %v3260 = vmul.f32 %v3041, 1.442695
  %v3261 = vpow.pop %v3260
  %v3262 = vmul.f32 %v3042, 1.442695
  %v3263 = vpow.pop %v3262
  %v3264 = vmul.f32 %v3043, 1.442695
  %v3265 = vpow.pop %v3264
  %v3266 = vmul.f32 %v3044, 1.442695
  %v3267 = vpow.pop %v3266
  %v3268 = vmul.f32 %v3045, 1.442695
  %v3269 = vpow.pop %v3268
  %v3270 = vmul.f32 %v3046, 1.442695
  %v3271 = vpow.pop %v3270
  %v3272 = vmul.f32 %v3047, 1.442695
  %v3273 = vpow.pop %v3272
  %v3274 = vmul.f32 %v3048, 1.442695
  %v3275 = vpow.pop %v3274
  %v3276 = vmul.f32 %v3049, 1.442695
  %v3277 = vpow.pop %v3276
  %v3278 = vmul.f32 %v3050, 1.442695
  %v3279 = vpow.pop %v3278
  %v3280 = vmul.f32 %v3051, 1.442695
  %v3281 = vpow.pop %v3280
  %v3282 = vmul.f32 %v3052, 1.442695
  %v3283 = vpow.pop %v3282
  %v3284 = vmul.f32 %v3053, 1.442695
  %v3285 = vpow.pop %v3284
  %v3286 = vmul.f32 %v3054, 1.442695
  %v3287 = vpow.pop %v3286
  %v3288 = vmul.f32 %v3055, 1.442695
  %v3289 = vpow.pop %v3288
  %v3290 = vmul.f32 %v3056, 1.442695
  %v3291 = vpow.pop %v3290
  %v3292 = vmul.f32 %v3057, 1.442695
  %v3293 = vpow.pop %v3292
  %v3294 = vmul.f32 %v3058, 1.442695
  %v3295 = vpow.pop %v3294
  %v3296 = vmul.f32 %v3059, 1.442695
  %v3297 = vpow.pop %v3296
  %v3298 = vmul.f32 %v3060, 1.442695
  %v3299 = vpow.pop %v3298
  %v3300 = vmul.f32 %v3061, 1.442695
  %v3301 = vpow.pop %v3300
  %v3302 = vmul.f32 %v3062, 1.442695
  %v3303 = vpow.pop %v3302
  %v3304 = vmul.f32 %v3063, 1.442695
  %v3305 = vpow.pop %v3304
  %v3306 = vmul.f32 %v3064, 1.442695
  %v3307 = vpow.pop %v3306
  %v3308 = vmul.f32 %v3065, 1.442695
  %v3309 = vpow.pop %v3308
  %v3310 = vmul.f32 %v3066, 1.442695
  %v3311 = vpow.pop %v3310
  %v3312 = vmul.f32 %v3067, 1.442695
  %v3313 = vpow.pop %v3312
  %v3314 = vmul.f32 %v3068, 1.442695
  %v3315 = vpow.pop %v3314
  %v3316 = vmul.f32 %v3069, 1.442695
  %v3317 = vpow.pop %v3316
  %v3318 = vmul.f32 %v3070, 1.442695
  %v3319 = vpow.pop %v3318
  %v3320 = vmul.f32 %v3071, 1.442695
  %v3321 = vpow.pop %v3320
  %v3322 = vmul.f32 %v3072, 1.442695
  %v3323 = vpow.pop %v3322
  %v3324 = vmul.f32 %v3073, 1.442695
  %v3325 = vpow.pop %v3324
  %v3326 = vmul.f32 %v3074, 1.442695
  %v3327 = vpow.pop %v3326
  %v3328 = vmul.f32 %v3075, 1.442695
  %v3329 = vpow.pop %v3328
  %v3330 = vmul.f32 %v3076, 1.442695
  %v3331 = vpow.pop %v3330
  %v3332 = vmul.f32 %v3077, 1.442695
  %v3333 = vpow.pop %v3332
  %v3334 = vadd.f32 %v3079, 1.0
  %v3335 = vadd.f32 %v3081, 1.0
  %v3336 = vadd.f32 %v3083, 1.0
  %v3337 = vadd.f32 %v3085, 1.0
  %v3338 = vadd.f32 %v3087, 1.0
  %v3339 = vadd.f32 %v3089, 1.0
  %v3340 = vadd.f32 %v3091, 1.0
  %v3341 = vadd.f32 %v3093, 1.0
  %v3342 = vadd.f32 %v3095, 1.0
  %v3343 = vadd.f32 %v3097, 1.0
  %v3344 = vadd.f32 %v3099, 1.0
  %v3345 = vadd.f32 %v3101, 1.0
  %v3346 = vadd.f32 %v3103, 1.0
  %v3347 = vadd.f32 %v3105, 1.0
  %v3348 = vadd.f32 %v3107, 1.0
  %v3349 = vadd.f32 %v3109, 1.0
  %v3350 = vadd.f32 %v3111, 1.0
  %v3351 = vadd.f32 %v3113, 1.0
  %v3352 = vadd.f32 %v3115, 1.0
  %v3353 = vadd.f32 %v3117, 1.0
  %v3354 = vadd.f32 %v3119, 1.0
  %v3355 = vadd.f32 %v3121, 1.0
  %v3356 = vadd.f32 %v3123, 1.0
  %v3357 = vadd.f32 %v3125, 1.0
  %v3358 = vadd.f32 %v3127, 1.0
  %v3359 = vadd.f32 %v3129, 1.0
  %v3360 = vadd.f32 %v3131, 1.0
  %v3361 = vadd.f32 %v3133, 1.0
  %v3362 = vadd.f32 %v3135, 1.0
  %v3363 = vadd.f32 %v3137, 1.0
  %v3364 = vadd.f32 %v3139, 1.0
  %v3365 = vadd.f32 %v3141, 1.0
  %v3366 = vadd.f32 %v3143, 1.0
  %v3367 = vadd.f32 %v3145, 1.0
  %v3368 = vadd.f32 %v3147, 1.0
  %v3369 = vadd.f32 %v3149, 1.0
  %v3370 = vadd.f32 %v3151, 1.0
  %v3371 = vadd.f32 %v3153, 1.0
  %v3372 = vadd.f32 %v3155, 1.0
  %v3373 = vadd.f32 %v3157, 1.0
  %v3374 = vadd.f32 %v3159, 1.0
  %v3375 = vadd.f32 %v3161, 1.0
  %v3376 = vadd.f32 %v3163, 1.0
  %v3377 = vadd.f32 %v3165, 1.0
  %v3378 = vadd.f32 %v3167, 1.0
  %v3379 = vadd.f32 %v3169, 1.0
  %v3380 = vadd.f32 %v3171, 1.0
  %v3381 = vadd.f32 %v3173, 1.0
  %v3382 = vadd.f32 %v3175, 1.0
  %v3383 = vadd.f32 %v3177, 1.0
  %v3384 = vadd.f32 %v3179, 1.0
  %v3385 = vadd.f32 %v3181, 1.0
  %v3386 = vadd.f32 %v3183, 1.0
  %v3387 = vadd.f32 %v3185, 1.0
  %v3388 = vadd.f32 %v3187, 1.0
  %v3389 = vadd.f32 %v3189, 1.0
  %v3390 = vadd.f32 %v3191, 1.0
  %v3391 = vadd.f32 %v3193, 1.0
  %v3392 = vadd.f32 %v3195, 1.0
  %v3393 = vadd.f32 %v3197, 1.0
  %v3394 = vadd.f32 %v3199, 1.0
  %v3395 = vadd.f32 %v3201, 1.0
  %v3396 = vadd.f32 %v3203, 1.0
  %v3397 = vadd.f32 %v3205, 1.0
  %v3398 = vadd.f32 %v3207, 1.0
  %v3399 = vadd.f32 %v3209, 1.0
  %v3400 = vadd.f32 %v3211, 1.0
  %v3401 = vadd.f32 %v3213, 1.0
  %v3402 = vadd.f32 %v3215, 1.0
  %v3403 = vadd.f32 %v3217, 1.0
  %v3404 = vadd.f32 %v3219, 1.0
  %v3405 = vadd.f32 %v3221, 1.0
  %v3406 = vadd.f32 %v3223, 1.0
  %v3407 = vadd.f32 %v3225, 1.0
  %v3408 = vadd.f32 %v3227, 1.0
  %v3409 = vadd.f32 %v3229, 1.0
  %v3410 = vadd.f32 %v3231, 1.0
  %v3411 = vadd.f32 %v3233, 1.0
  %v3412 = vadd.f32 %v3235, 1.0
  %v3413 = vadd.f32 %v3237, 1.0
  %v3414 = vadd.f32 %v3239, 1.0
  %v3415 = vadd.f32 %v3241, 1.0
  %v3416 = vadd.f32 %v3243, 1.0
  %v3417 = vadd.f32 %v3245, 1.0
  %v3418 = vadd.f32 %v3247, 1.0
  %v3419 = vadd.f32 %v3249, 1.0
  %v3420 = vadd.f32 %v3251, 1.0
  %v3421 = vadd.f32 %v3253, 1.0
  %v3422 = vadd.f32 %v3255, 1.0
  %v3423 = vadd.f32 %v3257, 1.0
  %v3424 = vadd.f32 %v3259, 1.0
  %v3425 = vadd.f32 %v3261, 1.0
  %v3426 = vadd.f32 %v3263, 1.0
  %v3427 = vadd.f32 %v3265, 1.0
  %v3428 = vadd.f32 %v3267, 1.0
  %v3429 = vadd.f32 %v3269, 1.0
  %v3430 = vadd.f32 %v3271, 1.0
  %v3431 = vadd.f32 %v3273, 1.0
  %v3432 = vadd.f32 %v3275, 1.0
  %v3433 = vadd.f32 %v3277, 1.0
  %v3434 = vadd.f32 %v3279, 1.0
  %v3435 = vadd.f32 %v3281, 1.0
  %v3436 = vadd.f32 %v3283, 1.0
  %v3437 = vadd.f32 %v3285, 1.0
  %v3438 = vadd.f32 %v3287, 1.0
  %v3439 = vadd.f32 %v3289, 1.0
  %v3440 = vadd.f32 %v3291, 1.0
  %v3441 = vadd.f32 %v3293, 1.0
  %v3442 = vadd.f32 %v3295, 1.0
  %v3443 = vadd.f32 %v3297, 1.0
  %v3444 = vadd.f32 %v3299, 1.0
  %v3445 = vadd.f32 %v3301, 1.0
  %v3446 = vadd.f32 %v3303, 1.0
  %v3447 = vadd.f32 %v3305, 1.0
  %v3448 = vadd.f32 %v3307, 1.0
  %v3449 = vadd.f32 %v3309, 1.0
  %v3450 = vadd.f32 %v3311, 1.0
  %v3451 = vadd.f32 %v3313, 1.0
  %v3452 = vadd.f32 %v3315, 1.0
  %v3453 = vadd.f32 %v3317, 1.0
  %v3454 = vadd.f32 %v3319, 1.0
  %v3455 = vadd.f32 %v3321, 1.0
  %v3456 = vadd.f32 %v3323, 1.0
  %v3457 = vadd.f32 %v3325, 1.0
  %v3458 = vadd.f32 %v3327, 1.0
  %v3459 = vadd.f32 %v3329, 1.0
  %v3460 = vadd.f32 %v3331, 1.0
  %v3461 = vadd.f32 %v3333, 1.0
  %v3462 = vrcp.pop %v3334
  %v3463 = vmul.f32 1.0, %v3462
  %v3464 = vrcp.pop %v3335
  %v3465 = vmul.f32 1.0, %v3464
  %v3466 = vrcp.pop %v3336
  %v3467 = vmul.f32 1.0, %v3466
  %v3468 = vrcp.pop %v3337
  %v3469 = vmul.f32 1.0, %v3468
  %v3470 = vrcp.pop %v3338
  %v3471 = vmul.f32 1.0, %v3470
  %v3472 = vrcp.pop %v3339
  %v3473 = vmul.f32 1.0, %v3472
  %v3474 = vrcp.pop %v3340
  %v3475 = vmul.f32 1.0, %v3474
  %v3476 = vrcp.pop %v3341
  %v3477 = vmul.f32 1.0, %v3476
  %v3478 = vrcp.pop %v3342
  %v3479 = vmul.f32 1.0, %v3478
  %v3480 = vrcp.pop %v3343
  %v3481 = vmul.f32 1.0, %v3480
  %v3482 = vrcp.pop %v3344
  %v3483 = vmul.f32 1.0, %v3482
  %v3484 = vrcp.pop %v3345
  %v3485 = vmul.f32 1.0, %v3484
  %v3486 = vrcp.pop %v3346
  %v3487 = vmul.f32 1.0, %v3486
  %v3488 = vrcp.pop %v3347
  %v3489 = vmul.f32 1.0, %v3488
  %v3490 = vrcp.pop %v3348
  %v3491 = vmul.f32 1.0, %v3490
  %v3492 = vrcp.pop %v3349
  %v3493 = vmul.f32 1.0, %v3492
  %v3494 = vrcp.pop %v3350
  %v3495 = vmul.f32 1.0, %v3494
  %v3496 = vrcp.pop %v3351
  %v3497 = vmul.f32 1.0, %v3496
  %v3498 = vrcp.pop %v3352
  %v3499 = vmul.f32 1.0, %v3498
  %v3500 = vrcp.pop %v3353
  %v3501 = vmul.f32 1.0, %v3500
  %v3502 = vrcp.pop %v3354
  %v3503 = vmul.f32 1.0, %v3502
  %v3504 = vrcp.pop %v3355
  %v3505 = vmul.f32 1.0, %v3504
  %v3506 = vrcp.pop %v3356
  %v3507 = vmul.f32 1.0, %v3506
  %v3508 = vrcp.pop %v3357
  %v3509 = vmul.f32 1.0, %v3508
  %v3510 = vrcp.pop %v3358
  %v3511 = vmul.f32 1.0, %v3510
  %v3512 = vrcp.pop %v3359
  %v3513 = vmul.f32 1.0, %v3512
  %v3514 = vrcp.pop %v3360
  %v3515 = vmul.f32 1.0, %v3514
  %v3516 = vrcp.pop %v3361
  %v3517 = vmul.f32 1.0, %v3516
  %v3518 = vrcp.pop %v3362
  %v3519 = vmul.f32 1.0, %v3518
  %v3520 = vrcp.pop %v3363
  %v3521 = vmul.f32 1.0, %v3520
  %v3522 = vrcp.pop %v3364
  %v3523 = vmul.f32 1.0, %v3522
  %v3524 = vrcp.pop %v3365
  %v3525 = vmul.f32 1.0, %v3524
  %v3526 = vrcp.pop %v3366
  %v3527 = vmul.f32 1.0, %v3526
  %v3528 = vrcp.pop %v3367
  %v3529 = vmul.f32 1.0, %v3528
  %v3530 = vrcp.pop %v3368
  %v3531 = vmul.f32 1.0, %v3530
  %v3532 = vrcp.pop %v3369
  %v3533 = vmul.f32 1.0, %v3532
  %v3534 = vrcp.pop %v3370
  %v3535 = vmul.f32 1.0, %v3534
  %v3536 = vrcp.pop %v3371
  %v3537 = vmul.f32 1.0, %v3536
  %v3538 = vrcp.pop %v3372
  %v3539 = vmul.f32 1.0, %v3538
  %v3540 = vrcp.pop %v3373
  %v3541 = vmul.f32 1.0, %v3540
  %v3542 = vrcp.pop %v3374
  %v3543 = vmul.f32 1.0, %v3542
  %v3544 = vrcp.pop %v3375
  %v3545 = vmul.f32 1.0, %v3544
  %v3546 = vrcp.pop %v3376
  %v3547 = vmul.f32 1.0, %v3546
  %v3548 = vrcp.pop %v3377
  %v3549 = vmul.f32 1.0, %v3548
  %v3550 = vrcp.pop %v3378
  %v3551 = vmul.f32 1.0, %v3550
  %v3552 = vrcp.pop %v3379
  %v3553 = vmul.f32 1.0, %v3552
  %v3554 = vrcp.pop %v3380
  %v3555 = vmul.f32 1.0, %v3554
  %v3556 = vrcp.pop %v3381
  %v3557 = vmul.f32 1.0, %v3556
  %v3558 = vrcp.pop %v3382
  %v3559 = vmul.f32 1.0, %v3558
  %v3560 = vrcp.pop %v3383
  %v3561 = vmul.f32 1.0, %v3560
  %v3562 = vrcp.pop %v3384
  %v3563 = vmul.f32 1.0, %v3562
  %v3564 = vrcp.pop %v3385
  %v3565 = vmul.f32 1.0, %v3564
  %v3566 = vrcp.pop %v3386
  %v3567 = vmul.f32 1.0, %v3566
  %v3568 = vrcp.pop %v3387
  %v3569 = vmul.f32 1.0, %v3568
  %v3570 = vrcp.pop %v3388
  %v3571 = vmul.f32 1.0, %v3570
  %v3572 = vrcp.pop %v3389
  %v3573 = vmul.f32 1.0, %v3572
  %v3574 = vrcp.pop %v3390
  %v3575 = vmul.f32 1.0, %v3574
  %v3576 = vrcp.pop %v3391
  %v3577 = vmul.f32 1.0, %v3576
  %v3578 = vrcp.pop %v3392
  %v3579 = vmul.f32 1.0, %v3578
  %v3580 = vrcp.pop %v3393
  %v3581 = vmul.f32 1.0, %v3580
  %v3582 = vrcp.pop %v3394
  %v3583 = vmul.f32 1.0, %v3582
  %v3584 = vrcp.pop %v3395
  %v3585 = vmul.f32 1.0, %v3584
  %v3586 = vrcp.pop %v3396
  %v3587 = vmul.f32 1.0, %v3586
  %v3588 = vrcp.pop %v3397
  %v3589 = vmul.f32 1.0, %v3588
  %v3590 = vrcp.pop %v3398
  %v3591 = vmul.f32 1.0, %v3590
  %v3592 = vrcp.pop %v3399
  %v3593 = vmul.f32 1.0, %v3592
  %v3594 = vrcp.pop %v3400
  %v3595 = vmul.f32 1.0, %v3594
  %v3596 = vrcp.pop %v3401
  %v3597 = vmul.f32 1.0, %v3596
  %v3598 = vrcp.pop %v3402
  %v3599 = vmul.f32 1.0, %v3598
  %v3600 = vrcp.pop %v3403
  %v3601 = vmul.f32 1.0, %v3600
  %v3602 = vrcp.pop %v3404
  %v3603 = vmul.f32 1.0, %v3602
  %v3604 = vrcp.pop %v3405
  %v3605 = vmul.f32 1.0, %v3604
  %v3606 = vrcp.pop %v3406
  %v3607 = vmul.f32 1.0, %v3606
  %v3608 = vrcp.pop %v3407
  %v3609 = vmul.f32 1.0, %v3608
  %v3610 = vrcp.pop %v3408
  %v3611 = vmul.f32 1.0, %v3610
  %v3612 = vrcp.pop %v3409
  %v3613 = vmul.f32 1.0, %v3612
  %v3614 = vrcp.pop %v3410
  %v3615 = vmul.f32 1.0, %v3614
  %v3616 = vrcp.pop %v3411
  %v3617 = vmul.f32 1.0, %v3616
  %v3618 = vrcp.pop %v3412
  %v3619 = vmul.f32 1.0, %v3618
  %v3620 = vrcp.pop %v3413
  %v3621 = vmul.f32 1.0, %v3620
  %v3622 = vrcp.pop %v3414
  %v3623 = vmul.f32 1.0, %v3622
  %v3624 = vrcp.pop %v3415
  %v3625 = vmul.f32 1.0, %v3624
  %v3626 = vrcp.pop %v3416
  %v3627 = vmul.f32 1.0, %v3626
  %v3628 = vrcp.pop %v3417
  %v3629 = vmul.f32 1.0, %v3628
  %v3630 = vrcp.pop %v3418
  %v3631 = vmul.f32 1.0, %v3630
  %v3632 = vrcp.pop %v3419
  %v3633 = vmul.f32 1.0, %v3632
  %v3634 = vrcp.pop %v3420
  %v3635 = vmul.f32 1.0, %v3634
  %v3636 = vrcp.pop %v3421
  %v3637 = vmul.f32 1.0, %v3636
  %v3638 = vrcp.pop %v3422
  %v3639 = vmul.f32 1.0, %v3638
  %v3640 = vrcp.pop %v3423
  %v3641 = vmul.f32 1.0, %v3640
  %v3642 = vrcp.pop %v3424
  %v3643 = vmul.f32 1.0, %v3642
  %v3644 = vrcp.pop %v3425
  %v3645 = vmul.f32 1.0, %v3644
  %v3646 = vrcp.pop %v3426
  %v3647 = vmul.f32 1.0, %v3646
  %v3648 = vrcp.pop %v3427
  %v3649 = vmul.f32 1.0, %v3648
  %v3650 = vrcp.pop %v3428
  %v3651 = vmul.f32 1.0, %v3650
  %v3652 = vrcp.pop %v3429
  %v3653 = vmul.f32 1.0, %v3652
  %v3654 = vrcp.pop %v3430
  %v3655 = vmul.f32 1.0, %v3654
  %v3656 = vrcp.pop %v3431
  %v3657 = vmul.f32 1.0, %v3656
  %v3658 = vrcp.pop %v3432
  %v3659 = vmul.f32 1.0, %v3658
  %v3660 = vrcp.pop %v3433
  %v3661 = vmul.f32 1.0, %v3660
  %v3662 = vrcp.pop %v3434
  %v3663 = vmul.f32 1.0, %v3662
  %v3664 = vrcp.pop %v3435
  %v3665 = vmul.f32 1.0, %v3664
  %v3666 = vrcp.pop %v3436
  %v3667 = vmul.f32 1.0, %v3666
  %v3668 = vrcp.pop %v3437
  %v3669 = vmul.f32 1.0, %v3668
  %v3670 = vrcp.pop %v3438
  %v3671 = vmul.f32 1.0, %v3670
  %v3672 = vrcp.pop %v3439
  %v3673 = vmul.f32 1.0, %v3672
  %v3674 = vrcp.pop %v3440
  %v3675 = vmul.f32 1.0, %v3674
  %v3676 = vrcp.pop %v3441
  %v3677 = vmul.f32 1.0, %v3676
  %v3678 = vrcp.pop %v3442
  %v3679 = vmul.f32 1.0, %v3678
  %v3680 = vrcp.pop %v3443
  %v3681 = vmul.f32 1.0, %v3680
  %v3682 = vrcp.pop %v3444
  %v3683 = vmul.f32 1.0, %v3682
  %v3684 = vrcp.pop %v3445
  %v3685 = vmul.f32 1.0, %v3684
  %v3686 = vrcp.pop %v3446
  %v3687 = vmul.f32 1.0, %v3686
  %v3688 = vrcp.pop %v3447
  %v3689 = vmul.f32 1.0, %v3688
  %v3690 = vrcp.pop %v3448
  %v3691 = vmul.f32 1.0, %v3690
  %v3692 = vrcp.pop %v3449
  %v3693 = vmul.f32 1.0, %v3692
  %v3694 = vrcp.pop %v3450
  %v3695 = vmul.f32 1.0, %v3694
  %v3696 = vrcp.pop %v3451
  %v3697 = vmul.f32 1.0, %v3696
  %v3698 = vrcp.pop %v3452
  %v3699 = vmul.f32 1.0, %v3698
  %v3700 = vrcp.pop %v3453
  %v3701 = vmul.f32 1.0, %v3700
  %v3702 = vrcp.pop %v3454
  %v3703 = vmul.f32 1.0, %v3702
  %v3704 = vrcp.pop %v3455
  %v3705 = vmul.f32 1.0, %v3704
  %v3706 = vrcp.pop %v3456
  %v3707 = vmul.f32 1.0, %v3706
  %v3708 = vrcp.pop %v3457
  %v3709 = vmul.f32 1.0, %v3708
  %v3710 = vrcp.pop %v3458
  %v3711 = vmul.f32 1.0, %v3710
  %v3712 = vrcp.pop %v3459
  %v3713 = vmul.f32 1.0, %v3712
  %v3714 = vrcp.pop %v3460
  %v3715 = vmul.f32 1.0, %v3714
  %v3716 = vrcp.pop %v3461
  %v3717 = vmul.f32 1.0, %v3716
  %v3718 = vmul.f32 %v2440, %v3463
  %v3719 = vmul.f32 %v2443, %v3465
  %v3720 = vmul.f32 %v2448, %v3467
  %v3721 = vmul.f32 %v2451, %v3469
  %v3722 = vmul.f32 %v2456, %v3471
  %v3723 = vmul.f32 %v2459, %v3473
  %v3724 = vmul.f32 %v2464, %v3475
  %v3725 = vmul.f32 %v2467, %v3477
  %v3726 = vmul.f32 %v2472, %v3479
  %v3727 = vmul.f32 %v2475, %v3481
  %v3728 = vmul.f32 %v2480, %v3483
  %v3729 = vmul.f32 %v2483, %v3485
  %v3730 = vmul.f32 %v2488, %v3487
  %v3731 = vmul.f32 %v2491, %v3489
  %v3732 = vmul.f32 %v2496, %v3491
  %v3733 = vmul.f32 %v2499, %v3493
  %v3734 = vmul.f32 %v2504, %v3495
  %v3735 = vmul.f32 %v2507, %v3497
  %v3736 = vmul.f32 %v2512, %v3499
  %v3737 = vmul.f32 %v2515, %v3501
  %v3738 = vmul.f32 %v2520, %v3503
  %v3739 = vmul.f32 %v2523, %v3505
  %v3740 = vmul.f32 %v2528, %v3507
  %v3741 = vmul.f32 %v2531, %v3509
  %v3742 = vmul.f32 %v2536, %v3511
  %v3743 = vmul.f32 %v2539, %v3513
  %v3744 = vmul.f32 %v2544, %v3515
  %v3745 = vmul.f32 %v2547, %v3517
  %v3746 = vmul.f32 %v2552, %v3519
  %v3747 = vmul.f32 %v2555, %v3521
  %v3748 = vmul.f32 %v2560, %v3523
  %v3749 = vmul.f32 %v2563, %v3525
  %v3750 = vmul.f32 %v2568, %v3527
  %v3751 = vmul.f32 %v2571, %v3529
  %v3752 = vmul.f32 %v2576, %v3531
  %v3753 = vmul.f32 %v2579, %v3533
  %v3754 = vmul.f32 %v2584, %v3535
  %v3755 = vmul.f32 %v2587, %v3537
  %v3756 = vmul.f32 %v2592, %v3539
  %v3757 = vmul.f32 %v2595, %v3541
  %v3758 = vmul.f32 %v2600, %v3543
  %v3759 = vmul.f32 %v2603, %v3545
  %v3760 = vmul.f32 %v2608, %v3547
  %v3761 = vmul.f32 %v2611, %v3549
  %v3762 = vmul.f32 %v2616, %v3551
  %v3763 = vmul.f32 %v2619, %v3553
  %v3764 = vmul.f32 %v2624, %v3555
  %v3765 = vmul.f32 %v2627, %v3557
  %v3766 = vmul.f32 %v2632, %v3559
  %v3767 = vmul.f32 %v2635, %v3561
  %v3768 = vmul.f32 %v2640, %v3563
  %v3769 = vmul.f32 %v2643, %v3565
  %v3770 = vmul.f32 %v2648, %v3567
  %v3771 = vmul.f32 %v2651, %v3569
  %v3772 = vmul.f32 %v2656, %v3571
  %v3773 = vmul.f32 %v2659, %v3573
  %v3774 = vmul.f32 %v2664, %v3575
  %v3775 = vmul.f32 %v2667, %v3577
  %v3776 = vmul.f32 %v2672, %v3579
  %v3777 = vmul.f32 %v2675, %v3581
  %v3778 = vmul.f32 %v2680, %v3583
  %v3779 = vmul.f32 %v2683, %v3585
  %v3780 = vmul.f32 %v2688, %v3587
  %v3781 = vmul.f32 %v2691, %v3589
  %v3782 = vmul.f32 %v2696, %v3591
  %v3783 = vmul.f32 %v2699, %v3593
  %v3784 = vmul.f32 %v2704, %v3595
  %v3785 = vmul.f32 %v2707, %v3597
  %v3786 = vmul.f32 %v2712, %v3599
  %v3787 = vmul.f32 %v2715, %v3601
  %v3788 = vmul.f32 %v2720, %v3603
  %v3789 = vmul.f32 %v2723, %v3605
  %v3790 = vmul.f32 %v2728, %v3607
  %v3791 = vmul.f32 %v2731, %v3609
  %v3792 = vmul.f32 %v2736, %v3611
  %v3793 = vmul.f32 %v2739, %v3613
  %v3794 = vmul.f32 %v2744, %v3615
  %v3795 = vmul.f32 %v2747, %v3617
  %v3796 = vmul.f32 %v2752, %v3619
  %v3797 = vmul.f32 %v2755, %v3621
  %v3798 = vmul.f32 %v2760, %v3623
  %v3799 = vmul.f32 %v2763, %v3625
  %v3800 = vmul.f32 %v2768, %v3627
  %v3801 = vmul.f32 %v2771, %v3629
  %v3802 = vmul.f32 %v2776, %v3631
  %v3803 = vmul.f32 %v2779, %v3633
  %v3804 = vmul.f32 %v2784, %v3635
  %v3805 = vmul.f32 %v2787, %v3637
  %v3806 = vmul.f32 %v2792, %v3639
  %v3807 = vmul.f32 %v2795, %v3641
  %v3808 = vmul.f32 %v2800, %v3643
  %v3809 = vmul.f32 %v2803, %v3645
  %v3810 = vmul.f32 %v2808, %v3647
  %v3811 = vmul.f32 %v2811, %v3649
  %v3812 = vmul.f32 %v2816, %v3651
  %v3813 = vmul.f32 %v2819, %v3653
  %v3814 = vmul.f32 %v2824, %v3655
  %v3815 = vmul.f32 %v2827, %v3657
  %v3816 = vmul.f32 %v2832, %v3659
  %v3817 = vmul.f32 %v2835, %v3661
  %v3818 = vmul.f32 %v2840, %v3663
  %v3819 = vmul.f32 %v2843, %v3665
  %v3820 = vmul.f32 %v2848, %v3667
  %v3821 = vmul.f32 %v2851, %v3669
  %v3822 = vmul.f32 %v2856, %v3671
  %v3823 = vmul.f32 %v2859, %v3673
  %v3824 = vmul.f32 %v2864, %v3675
  %v3825 = vmul.f32 %v2867, %v3677
  %v3826 = vmul.f32 %v2872, %v3679
  %v3827 = vmul.f32 %v2875, %v3681
  %v3828 = vmul.f32 %v2880, %v3683
  %v3829 = vmul.f32 %v2883, %v3685
  %v3830 = vmul.f32 %v2888, %v3687
  %v3831 = vmul.f32 %v2891, %v3689
  %v3832 = vmul.f32 %v2896, %v3691
  %v3833 = vmul.f32 %v2899, %v3693
  %v3834 = vmul.f32 %v2904, %v3695
  %v3835 = vmul.f32 %v2907, %v3697
  %v3836 = vmul.f32 %v2912, %v3699
  %v3837 = vmul.f32 %v2915, %v3701
  %v3838 = vmul.f32 %v2920, %v3703
  %v3839 = vmul.f32 %v2923, %v3705
  %v3840 = vmul.f32 %v2928, %v3707
  %v3841 = vmul.f32 %v2931, %v3709
  %v3842 = vmul.f32 %v2936, %v3711
  %v3843 = vmul.f32 %v2939, %v3713
  %v3844 = vmul.f32 %v2944, %v3715
  %v3845 = vmul.f32 %v2947, %v3717
  %v3846 = vld [vmem:[%s3] sm:$0xff]
  %v3847 = vld [vmem:[%s3 + $0x8] sm:$0xff]
  %v3848 = vld [vmem:[%s3 + $0x10] sm:$0xff]
  %v3849 = vld [vmem:[%s3 + $0x18] sm:$0xff]
  %v3850 = vld [vmem:[%s3 + $0x20] sm:$0xff]
  %v3851 = vld [vmem:[%s3 + $0x28] sm:$0xff]
  %v3852 = vld [vmem:[%s3 + $0x30] sm:$0xff]
  %v3853 = vld [vmem:[%s3 + $0x38] sm:$0xff]
  %v3854 = vpack.c.bf16 %v3719, %v3718
  %v3855 = vpack.c.bf16 %v3721, %v3720
  %v3856 = vpack.c.bf16 %v3723, %v3722
  %v3857 = vpack.c.bf16 %v3725, %v3724
  %v3858 = vpack.c.bf16 %v3727, %v3726
  %v3859 = vpack.c.bf16 %v3729, %v3728
  %v3860 = vpack.c.bf16 %v3731, %v3730
  %v3861 = vpack.c.bf16 %v3733, %v3732
  %v3862 = vpack.c.bf16 %v3735, %v3734
  %v3863 = vpack.c.bf16 %v3737, %v3736
  %v3864 = vpack.c.bf16 %v3739, %v3738
  %v3865 = vpack.c.bf16 %v3741, %v3740
  %v3866 = vpack.c.bf16 %v3743, %v3742
  %v3867 = vpack.c.bf16 %v3745, %v3744
  %v3868 = vpack.c.bf16 %v3747, %v3746
  %v3869 = vpack.c.bf16 %v3749, %v3748
  %v3870 = vpack.c.bf16 %v3751, %v3750
  %v3871 = vpack.c.bf16 %v3753, %v3752
  %v3872 = vpack.c.bf16 %v3755, %v3754
  %v3873 = vpack.c.bf16 %v3757, %v3756
  %v3874 = vpack.c.bf16 %v3759, %v3758
  %v3875 = vpack.c.bf16 %v3761, %v3760
  %v3876 = vpack.c.bf16 %v3763, %v3762
  %v3877 = vpack.c.bf16 %v3765, %v3764
  %v3878 = vpack.c.bf16 %v3767, %v3766
  %v3879 = vpack.c.bf16 %v3769, %v3768
  %v3880 = vpack.c.bf16 %v3771, %v3770
  %v3881 = vpack.c.bf16 %v3773, %v3772
  %v3882 = vpack.c.bf16 %v3775, %v3774
  %v3883 = vpack.c.bf16 %v3777, %v3776
  %v3884 = vpack.c.bf16 %v3779, %v3778
  %v3885 = vpack.c.bf16 %v3781, %v3780
  %v3886 = vpack.c.bf16 %v3783, %v3782
  %v3887 = vpack.c.bf16 %v3785, %v3784
  %v3888 = vpack.c.bf16 %v3787, %v3786
  %v3889 = vpack.c.bf16 %v3789, %v3788
  %v3890 = vpack.c.bf16 %v3791, %v3790
  %v3891 = vpack.c.bf16 %v3793, %v3792
  %v3892 = vpack.c.bf16 %v3795, %v3794
  %v3893 = vpack.c.bf16 %v3797, %v3796
  %v3894 = vpack.c.bf16 %v3799, %v3798
  %v3895 = vpack.c.bf16 %v3801, %v3800
  %v3896 = vpack.c.bf16 %v3803, %v3802
  %v3897 = vpack.c.bf16 %v3805, %v3804
  %v3898 = vpack.c.bf16 %v3807, %v3806
  %v3899 = vpack.c.bf16 %v3809, %v3808
  %v3900 = vpack.c.bf16 %v3811, %v3810
  %v3901 = vpack.c.bf16 %v3813, %v3812
  %v3902 = vpack.c.bf16 %v3815, %v3814
  %v3903 = vpack.c.bf16 %v3817, %v3816
  %v3904 = vpack.c.bf16 %v3819, %v3818
  %v3905 = vpack.c.bf16 %v3821, %v3820
  %v3906 = vpack.c.bf16 %v3823, %v3822
  %v3907 = vpack.c.bf16 %v3825, %v3824
  %v3908 = vpack.c.bf16 %v3827, %v3826
  %v3909 = vpack.c.bf16 %v3829, %v3828
  %v3910 = vpack.c.bf16 %v3831, %v3830
  %v3911 = vpack.c.bf16 %v3833, %v3832
  %v3912 = vpack.c.bf16 %v3835, %v3834
  %v3913 = vpack.c.bf16 %v3837, %v3836
  %v3914 = vpack.c.bf16 %v3839, %v3838
  %v3915 = vpack.c.bf16 %v3841, %v3840
  %v3916 = vpack.c.bf16 %v3843, %v3842
  %v3917 = vpack.c.bf16 %v3845, %v3844
  %v3926 = vunpack.c.l.b16 %v3846
  %v3927 = vunpack.c.h.b16 %v3846
  %v3928 = vunpack.c.l.b16 %v3847
  %v3929 = vunpack.c.h.b16 %v3847
  %v3930 = vunpack.c.l.b16 %v3848
  %v3931 = vunpack.c.h.b16 %v3848
  %v3932 = vunpack.c.l.b16 %v3849
  %v3933 = vunpack.c.h.b16 %v3849
  %v3934 = vunpack.c.l.b16 %v3850
  %v3935 = vunpack.c.h.b16 %v3850
  %v3936 = vunpack.c.l.b16 %v3851
  %v3937 = vunpack.c.h.b16 %v3851
  %v3938 = vunpack.c.l.b16 %v3852
  %v3939 = vunpack.c.h.b16 %v3852
  %v3940 = vunpack.c.l.b16 %v3853
  %v3941 = vunpack.c.h.b16 %v3853
  %v3942 = vpack.c.b16 %v3934, %v3926
  %v3943 = vpack.c.b16 %v3935, %v3927
  %v3944 = vpack.c.b16 %v3936, %v3928
  %v3945 = vpack.c.b16 %v3937, %v3929
  %v3946 = vpack.c.b16 %v3938, %v3930
  %v3947 = vpack.c.b16 %v3939, %v3931
  %v3948 = vpack.c.b16 %v3940, %v3932
  %v3949 = vpack.c.b16 %v3941, %v3933
  %3958 = vmatprep.subr.bf16.mxu0 0
  %3959 = vmatpush1.bf16.msra.mxu0 %v3854
  %3960 = vmatprep.subr.bf16.mxu0 0
  %3961 = vmatpush1.bf16.msra.mxu0 %v3855
  %3962 = vmatprep.subr.bf16.mxu0 0
  %3963 = vmatpush1.bf16.msra.mxu0 %v3856
  %3964 = vmatprep.subr.bf16.mxu0 0
  %3965 = vmatpush1.bf16.msra.mxu0 %v3857
  %3966 = vmatprep.subr.bf16.mxu0 0
  %3967 = vmatpush1.bf16.msra.mxu0 %v3858
  %3968 = vmatprep.subr.bf16.mxu0 0
  %3969 = vmatpush1.bf16.msra.mxu0 %v3859
  %3970 = vmatprep.subr.bf16.mxu0 0
  %3971 = vmatpush1.bf16.msra.mxu0 %v3860
  %3972 = vmatprep.subr.bf16.mxu0 0
  %3973 = vmatpush1.bf16.msra.mxu0 %v3861
  %3974 = vmatprep.subr.bf16.mxu0 0
  %3975 = vmatpush1.bf16.msra.mxu0 %v3862
  %3976 = vmatprep.subr.bf16.mxu0 0
  %3977 = vmatpush1.bf16.msra.mxu0 %v3863
  %3978 = vmatprep.subr.bf16.mxu0 0
  %3979 = vmatpush1.bf16.msra.mxu0 %v3864
  %3980 = vmatprep.subr.bf16.mxu0 0
  %3981 = vmatpush1.bf16.msra.mxu0 %v3865
  %3982 = vmatprep.subr.bf16.mxu0 0
  %3983 = vmatpush1.bf16.msra.mxu0 %v3866
  %3984 = vmatprep.subr.bf16.mxu0 0
  %3985 = vmatpush1.bf16.msra.mxu0 %v3867
  %3986 = vmatprep.subr.bf16.mxu0 0
  %3987 = vmatpush1.bf16.msra.mxu0 %v3868
  %3988 = vmatprep.subr.bf16.mxu0 0
  %3989 = vmatpush1.bf16.msra.mxu0 %v3869
  %3990 = vmatprep.mubr.bf16.mxu0 %v3943
  %3991 = vmatmul.mubr.bf16.gmra.mrb[0].mxu0 %v3942
  %v3992 = vpop.f32.mrb[0].mxu0
  %v3993 = vadd.f32 0.0, %v3992
  %v3994 = vpop.f32.mrb[0].mxu0
  %v3995 = vpop.f32.mrb[0].mxu0
  %v3996 = vadd.f32 0.0, %v3995
  %v3997 = vpop.f32.mrb[0].mxu0
  %3998 = vdwg.mxu0
  %3999 = vmatprep.subr.bf16.mxu0 0
  %4000 = vmatpush1.bf16.msra.mxu0 %v3870
  %4001 = vmatprep.subr.bf16.mxu0 0
  %4002 = vmatpush1.bf16.msra.mxu0 %v3871
  %4003 = vmatprep.subr.bf16.mxu0 0
  %4004 = vmatpush1.bf16.msra.mxu0 %v3872
  %4005 = vmatprep.subr.bf16.mxu0 0
  %4006 = vmatpush1.bf16.msra.mxu0 %v3873
  %4007 = vmatprep.subr.bf16.mxu0 0
  %4008 = vmatpush1.bf16.msra.mxu0 %v3874
  %4009 = vmatprep.subr.bf16.mxu0 0
  %4010 = vmatpush1.bf16.msra.mxu0 %v3875
  %4011 = vmatprep.subr.bf16.mxu0 0
  %4012 = vmatpush1.bf16.msra.mxu0 %v3876
  %4013 = vmatprep.subr.bf16.mxu0 0
  %4014 = vmatpush1.bf16.msra.mxu0 %v3877
  %4015 = vmatprep.subr.bf16.mxu0 0
  %4016 = vmatpush1.bf16.msra.mxu0 %v3878
  %4017 = vmatprep.subr.bf16.mxu0 0
  %4018 = vmatpush1.bf16.msra.mxu0 %v3879
  %4019 = vmatprep.subr.bf16.mxu0 0
  %4020 = vmatpush1.bf16.msra.mxu0 %v3880
  %4021 = vmatprep.subr.bf16.mxu0 0
  %4022 = vmatpush1.bf16.msra.mxu0 %v3881
  %4023 = vmatprep.subr.bf16.mxu0 0
  %4024 = vmatpush1.bf16.msra.mxu0 %v3882
  %4025 = vmatprep.subr.bf16.mxu0 0
  %4026 = vmatpush1.bf16.msra.mxu0 %v3883
  %4027 = vmatprep.subr.bf16.mxu0 0
  %4028 = vmatpush1.bf16.msra.mxu0 %v3884
  %4029 = vmatprep.subr.bf16.mxu0 0
  %4030 = vmatpush1.bf16.msra.mxu0 %v3885
  %4031 = vmatprep.mubr.bf16.mxu0 %v3945
  %4032 = vmatmul.mubr.bf16.gmra.mrb[0].mxu0 %v3944
  %v4033 = vpop.f32.mrb[0].mxu0
  %v4034 = vadd.f32 %v3993, %v4033
  %v4035 = vpop.f32.mrb[0].mxu0
  %v4036 = vpop.f32.mrb[0].mxu0
  %v4037 = vadd.f32 %v3996, %v4036
  %v4038 = vpop.f32.mrb[0].mxu0
  %4039 = vdwg.mxu0
  %4040 = vmatprep.subr.bf16.mxu0 0
  %4041 = vmatpush1.bf16.msra.mxu0 %v3886
  %4042 = vmatprep.subr.bf16.mxu0 0
  %4043 = vmatpush1.bf16.msra.mxu0 %v3887
  %4044 = vmatprep.subr.bf16.mxu0 0
  %4045 = vmatpush1.bf16.msra.mxu0 %v3888
  %4046 = vmatprep.subr.bf16.mxu0 0
  %4047 = vmatpush1.bf16.msra.mxu0 %v3889
  %4048 = vmatprep.subr.bf16.mxu0 0
  %4049 = vmatpush1.bf16.msra.mxu0 %v3890
  %4050 = vmatprep.subr.bf16.mxu0 0
  %4051 = vmatpush1.bf16.msra.mxu0 %v3891
  %4052 = vmatprep.subr.bf16.mxu0 0
  %4053 = vmatpush1.bf16.msra.mxu0 %v3892
  %4054 = vmatprep.subr.bf16.mxu0 0
  %4055 = vmatpush1.bf16.msra.mxu0 %v3893
  %4056 = vmatprep.subr.bf16.mxu0 0
  %4057 = vmatpush1.bf16.msra.mxu0 %v3894
  %4058 = vmatprep.subr.bf16.mxu0 0
  %4059 = vmatpush1.bf16.msra.mxu0 %v3895
  %4060 = vmatprep.subr.bf16.mxu0 0
  %4061 = vmatpush1.bf16.msra.mxu0 %v3896
  %4062 = vmatprep.subr.bf16.mxu0 0
  %4063 = vmatpush1.bf16.msra.mxu0 %v3897
  %4064 = vmatprep.subr.bf16.mxu0 0
  %4065 = vmatpush1.bf16.msra.mxu0 %v3898
  %4066 = vmatprep.subr.bf16.mxu0 0
  %4067 = vmatpush1.bf16.msra.mxu0 %v3899
  %4068 = vmatprep.subr.bf16.mxu0 0
  %4069 = vmatpush1.bf16.msra.mxu0 %v3900
  %4070 = vmatprep.subr.bf16.mxu0 0
  %4071 = vmatpush1.bf16.msra.mxu0 %v3901
  %4072 = vmatprep.mubr.bf16.mxu0 %v3947
  %4073 = vmatmul.mubr.bf16.gmra.mrb[0].mxu0 %v3946
  %v4074 = vpop.f32.mrb[0].mxu0
  %v4075 = vadd.f32 %v4034, %v4074
  %v4076 = vpop.f32.mrb[0].mxu0
  %v4077 = vpop.f32.mrb[0].mxu0
  %v4078 = vadd.f32 %v4037, %v4077
  %v4079 = vpop.f32.mrb[0].mxu0
  %4080 = vdwg.mxu0
  %4081 = vmatprep.subr.bf16.mxu0 0
  %4082 = vmatpush1.bf16.msra.mxu0 %v3902
  %4083 = vmatprep.subr.bf16.mxu0 0
  %4084 = vmatpush1.bf16.msra.mxu0 %v3903
  %4085 = vmatprep.subr.bf16.mxu0 0
  %4086 = vmatpush1.bf16.msra.mxu0 %v3904
  %4087 = vmatprep.subr.bf16.mxu0 0
  %4088 = vmatpush1.bf16.msra.mxu0 %v3905
  %4089 = vmatprep.subr.bf16.mxu0 0
  %4090 = vmatpush1.bf16.msra.mxu0 %v3906
  %4091 = vmatprep.subr.bf16.mxu0 0
  %4092 = vmatpush1.bf16.msra.mxu0 %v3907
  %4093 = vmatprep.subr.bf16.mxu0 0
  %4094 = vmatpush1.bf16.msra.mxu0 %v3908
  %4095 = vmatprep.subr.bf16.mxu0 0
  %4096 = vmatpush1.bf16.msra.mxu0 %v3909
  %4097 = vmatprep.subr.bf16.mxu0 0
  %4098 = vmatpush1.bf16.msra.mxu0 %v3910
  %4099 = vmatprep.subr.bf16.mxu0 0
  %4100 = vmatpush1.bf16.msra.mxu0 %v3911
  %4101 = vmatprep.subr.bf16.mxu0 0
  %4102 = vmatpush1.bf16.msra.mxu0 %v3912
  %4103 = vmatprep.subr.bf16.mxu0 0
  %4104 = vmatpush1.bf16.msra.mxu0 %v3913
  %4105 = vmatprep.subr.bf16.mxu0 0
  %4106 = vmatpush1.bf16.msra.mxu0 %v3914
  %4107 = vmatprep.subr.bf16.mxu0 0
  %4108 = vmatpush1.bf16.msra.mxu0 %v3915
  %4109 = vmatprep.subr.bf16.mxu0 0
  %4110 = vmatpush1.bf16.msra.mxu0 %v3916
  %4111 = vmatprep.subr.bf16.mxu0 0
  %4112 = vmatpush1.bf16.msra.mxu0 %v3917
  %4113 = vmatprep.mubr.bf16.mxu0 %v3949
  %4114 = vmatmul.mubr.bf16.gmra.mrb[0].mxu0 %v3948
  %v4115 = vpop.f32.mrb[0].mxu0
  %v4116 = vadd.f32 %v4075, %v4115
  %v4117 = vpop.f32.mrb[0].mxu0
  %v4118 = vpop.f32.mrb[0].mxu0
  %v4119 = vadd.f32 %v4078, %v4118
  %v4120 = vpop.f32.mrb[0].mxu0
  %4121 = vdwg.mxu0
  %v4122 = vpack.c.bf16 %v4119, %v4116
  %v4123 = vld [vmem:[%s4] sm:$0xf]
  %v4124 = vld [vmem:[%s4 + $0x4] sm:$0xf]
  %v4125 = vld [vmem:[%s4 + $0x8] sm:$0xf]
  %v4126 = vld [vmem:[%s4 + $0xc] sm:$0xf]
  %v4127 = vld [vmem:[%s4 + $0x10] sm:$0xf]
  %v4128 = vld [vmem:[%s4 + $0x14] sm:$0xf]
  %v4129 = vld [vmem:[%s4 + $0x18] sm:$0xf]
  %v4130 = vld [vmem:[%s4 + $0x1c] sm:$0xf]
  %v4131 = vlaneseq
  %v4132 = vshrl.u32 %v4131, 7
  %v4133 = vsub.s32 2, %v4132
  %v4134 = vrot.slane %v27, %v4133
  %v4143 = vunpack.c.l.b16 %v4123
  %v4144 = vunpack.c.l.b16 %v4124
  %v4145 = vunpack.c.l.b16 %v4125
  %v4146 = vunpack.c.l.b16 %v4126
  %v4147 = vunpack.c.l.b16 %v4127
  %v4148 = vunpack.c.l.b16 %v4128
  %v4149 = vunpack.c.l.b16 %v4129
  %v4150 = vunpack.c.l.b16 %v4130
  %v4151 = vpack.c.b16 %v4144, %v4143
  %v4152 = vpack.c.b16 %v4146, %v4145
  %v4153 = vpack.c.b16 %v4148, %v4147
  %v4154 = vpack.c.b16 %v4150, %v4149
  %vm4159 = vcmask 523264
  %v4161 = vsel %vm4159, %v4122, 0
  %4163 = vmatprep.subr.bf16.mxu0 0
  %4164 = vmatpush1.bf16.msra.mxu0 %v4151
  %4165 = vmatprep.subr.bf16.mxu0 0
  %4166 = vmatpush1.bf16.msra.mxu0 %v4152
  %4167 = vmatprep.subr.bf16.mxu0 0
  %4168 = vmatpush1.bf16.msra.mxu0 %v4153
  %4169 = vmatprep.subr.bf16.mxu0 0
  %4170 = vmatpush1.bf16.msra.mxu0 %v4154
  %4171 = vmatprep.subr.bf16.mxu0 0
  %4172 = vmatpush1.bf16.msra.mxu0 0
  %4173 = vmatprep.subr.bf16.mxu0 0
  %4174 = vmatpush1.bf16.msra.mxu0 0
  %4175 = vmatprep.subr.bf16.mxu0 0
  %4176 = vmatpush1.bf16.msra.mxu0 0
  %4177 = vmatprep.subr.bf16.mxu0 0
  %4178 = vmatpush1.bf16.msra.mxu0 0
  %4179 = vmatprep.subr.bf16.mxu0 0
  %4180 = vmatpush1.bf16.msra.mxu0 0
  %4181 = vmatprep.subr.bf16.mxu0 0
  %4182 = vmatpush1.bf16.msra.mxu0 0
  %4183 = vmatprep.subr.bf16.mxu0 0
  %4184 = vmatpush1.bf16.msra.mxu0 0
  %4185 = vmatprep.subr.bf16.mxu0 0
  %4186 = vmatpush1.bf16.msra.mxu0 0
  %4187 = vmatprep.subr.bf16.mxu0 0
  %4188 = vmatpush1.bf16.msra.mxu0 0
  %4189 = vmatprep.subr.bf16.mxu0 0
  %4190 = vmatpush1.bf16.msra.mxu0 0
  %4191 = vmatprep.subr.bf16.mxu0 0
  %4192 = vmatpush1.bf16.msra.mxu0 0
  %4193 = vmatprep.subr.bf16.mxu0 0
  %4194 = vmatpush1.bf16.msra.mxu0 0
  %4195 = vmatprep.mubr.bf16.mxu0 0
  %4196 = vmatmul.mubr.bf16.gmra.mrb[0].mxu0 %v4161
  %v4197 = vpop.f32.mrb[0].mxu0
  %v4198 = vadd.f32 %v4134, %v4197
  %v4199 = vpop.f32.mrb[0].mxu0
  %v4200 = vpop.f32.mrb[0].mxu0
  %v4201 = vadd.f32 %v4134, %v4200
  %v4202 = vpop.f32.mrb[0].mxu0
  %4203 = vdwg.mxu0
  %v4204 = vmax.f32 %v4198, 0.0
  %v4205 = vmax.f32 %v4201, 0.0
  %v4206 = vpack.c.bf16 %v4205, %v4204
  %v4207 = vld [vmem:[%s5] sm:$0xf]
  %v4208 = vld [vmem:[%s5 + $0x4] sm:$0xf]
  %v4209 = vld [vmem:[%s5 + $0x8] sm:$0xf]
  %v4210 = vld [vmem:[%s5 + $0xc] sm:$0xf]
  %v4211 = vlaneseq
  %v4212 = vshrl.u32 %v4211, 7
  %v4213 = vsub.s32 3, %v4212
  %v4214 = vrot.slane %v27, %v4213
  %v4219 = vunpack.c.l.b16 %v4207
  %v4220 = vunpack.c.l.b16 %v4208
  %v4221 = vunpack.c.l.b16 %v4209
  %v4222 = vunpack.c.l.b16 %v4210
  %v4223 = vpack.c.b16 %v4220, %v4219
  %v4224 = vpack.c.b16 %v4222, %v4221
  %vm4227 = vcmask 261120
  %v4229 = vsel %vm4227, %v4206, 0
  %4231 = vmatprep.subr.bf16.mxu0 0
  %4232 = vmatpush1.bf16.msra.mxu0 %v4223
  %4233 = vmatprep.subr.bf16.mxu0 0
  %4234 = vmatpush1.bf16.msra.mxu0 %v4224
  %4235 = vmatprep.subr.bf16.mxu0 0
  %4236 = vmatpush1.bf16.msra.mxu0 0
  %4237 = vmatprep.subr.bf16.mxu0 0
  %4238 = vmatpush1.bf16.msra.mxu0 0
  %4239 = vmatprep.subr.bf16.mxu0 0
  %4240 = vmatpush1.bf16.msra.mxu0 0
  %4241 = vmatprep.subr.bf16.mxu0 0
  %4242 = vmatpush1.bf16.msra.mxu0 0
  %4243 = vmatprep.subr.bf16.mxu0 0
  %4244 = vmatpush1.bf16.msra.mxu0 0
  %4245 = vmatprep.subr.bf16.mxu0 0
  %4246 = vmatpush1.bf16.msra.mxu0 0
  %4247 = vmatprep.subr.bf16.mxu0 0
  %4248 = vmatpush1.bf16.msra.mxu0 0
  %4249 = vmatprep.subr.bf16.mxu0 0
  %4250 = vmatpush1.bf16.msra.mxu0 0
  %4251 = vmatprep.subr.bf16.mxu0 0
  %4252 = vmatpush1.bf16.msra.mxu0 0
  %4253 = vmatprep.subr.bf16.mxu0 0
  %4254 = vmatpush1.bf16.msra.mxu0 0
  %4255 = vmatprep.subr.bf16.mxu0 0
  %4256 = vmatpush1.bf16.msra.mxu0 0
  %4257 = vmatprep.subr.bf16.mxu0 0
  %4258 = vmatpush1.bf16.msra.mxu0 0
  %4259 = vmatprep.subr.bf16.mxu0 0
  %4260 = vmatpush1.bf16.msra.mxu0 0
  %4261 = vmatprep.subr.bf16.mxu0 0
  %4262 = vmatpush1.bf16.msra.mxu0 0
  %4263 = vmatprep.mubr.bf16.mxu0 0
  %4264 = vmatmul.mubr.bf16.gmra.mrb[0].mxu0 %v4229
  %v4265 = vpop.f32.mrb[0].mxu0
  %v4266 = vadd.f32 %v4214, %v4265
  %v4267 = vpop.f32.mrb[0].mxu0
  %v4268 = vpop.f32.mrb[0].mxu0
  %v4269 = vadd.f32 %v4214, %v4268
  %v4270 = vpop.f32.mrb[0].mxu0
  %4271 = vdwg.mxu0
  %vm4272 = vcmask 15360
  %4273 = vst.msk [vmem:[%s7] sm:$0xff] %vm4272, %v4266
  %4274 = vst.msk [vmem:[%s7 + $0x8] sm:$0xff] %vm4272, %v4269
  // Predicated region
  $region30: #{my_effnet_forward.1} parent=0 // pred_check
    _
  $region31: #{my_effnet_forward.1} parent=0 // pred_check_branch
    %4276 = sbr.rel (0) target = $region33
  $region32: #{my_effnet_forward.1} parent=0 // pred_region
    _
  $region33: #{my_effnet_forward.1} parent=0 // pred_fallthru
    _
  // Predicated region
  $region34: #{my_effnet_forward.1} parent=0 // pred_check
    _
  $region35: #{my_effnet_forward.1} parent=0 // pred_check_branch
    %4278 = sbr.rel (0) target = $region37
  $region36: #{my_effnet_forward.1} parent=0 // pred_region
    _
  $region37: #{my_effnet_forward.1} parent=0 // pred_fallthru
    _

</llo_original>
